<compile_context>
chip_gen: v5e
topology: v5e:2x2
jax: 0.10.0
libtpu: 0.0.40
codegen_flags: <defaults>
</compile_context>

<pallas_src>
import jax
import jax.numpy as jnp
from jax.experimental import pallas as pl
from jax.experimental.pallas import tpu as pltpu


def hebbian_mlp_rollout_kernel(
    xs_ref, w0_ref, w1_ref, lr0_ref, lr1_ref, e0_ref, e1_ref,   # inputs (VMEM)
    ys_ref, w0_out_ref, w1_out_ref, e0_out_ref, e1_out_ref,     # outputs (VMEM)
):
    T = xs_ref.shape[0]

    # [B, K] . [K, N] contracted on K -> [B, N]      (standard matmul)
    dn_fwd = (((1,), (0,)), ((), ()))
    # batch-contraction outer product: [B, P] . [B, Q] -> [P, Q]   (== P.T @ Q)
    dn_outer = (((0,), (0,)), ((), ()))
    f32 = jnp.float32

    # Learning rates are constant over the rollout: load once, keep in vregs.
    lr0 = lr0_ref[...]                        # [D, H]  (== LR0.T)
    lr1 = lr1_ref[...]                        # [H, A]  (== LR1.T)

    def step(t, carry):
        w0, w1, e0, e1 = carry                # [D,H], [H,A], [D,H], [H,A]
        x = xs_ref[t]                         # [B, D]

        # ---- forward pass (pre-update weights, as in PyTorch) ----
        h_pre = jax.lax.dot_general(x, w0, dn_fwd,
                                    preferred_element_type=f32)    # nodes[1], [B, H]
        h = jnp.maximum(h_pre, 0.0)                                 # ReLU
        y_pre = jax.lax.dot_general(h, w1, dn_fwd,
                                    preferred_element_type=f32)    # nodes[2], [B, A]
        ys_ref[t] = jnp.tanh(y_pre)                                 # output activation

        # ---- Hebbian eligibility accumulation + clamp ([in, out] orientation) ----
        e0 = jnp.clip(
            e0 + jax.lax.dot_general(x, h_pre, dn_outer,
                                     preferred_element_type=f32),   # x.T @ h_pre
            -1.0, 1.0)                                               # [D, H]
        e1 = jnp.clip(
            e1 + jax.lax.dot_general(h_pre, y_pre, dn_outer,
                                     preferred_element_type=f32),   # h_pre.T @ y_pre
            -1.0, 1.0)                                               # [H, A]

        # ---- plastic weight update: W'[i,j] += LR'[i,j] * E[i,j] (elementwise) ----
        w0 = w0 + lr0 * e0
        w1 = w1 + lr1 * e1
        return (w0, w1, e0, e1)

    w0, w1, e0, e1 = jax.lax.fori_loop(
        0, T, step,
        (w0_ref[...], w1_ref[...], e0_ref[...], e1_ref[...]),
        unroll=True)                          # short fixed trip count -> LLO visibility

    # Single writeback of the recurrent state.
    w0_out_ref[...] = w0
    w1_out_ref[...] = w1
    e0_out_ref[...] = e0
    e1_out_ref[...] = e1


def hebbian_mlp_rollout(xs, w0, w1, lr0, lr1, e0, e1):
    """Runs T sequential HebbianMLP forward+update steps in one fused kernel.

    Args:
      xs:  [T, B, D_in] inputs, one batch per timestep.
      w0:  [H, D_in]    layer0.weight          (PyTorch [out, in] layout).
      w1:  [A, H]       output_layer.weight.
      lr0: [H, D_in]    lr_layers.layer0.weight.
      lr1: [A, H]       lr_layers.output_layer.weight.
      e0:  [D_in, H]    eligibility_layers[0]  (module convention [in, out]).
      e1:  [H, A]       eligibility_layers[1].
    Returns:
      (ys [T, B, A], new_w0 [H, D_in], new_w1 [A, H], new_e0 [D_in, H], new_e1 [H, A])
    """
    T, B, D = xs.shape
    H = w0.shape[0]
    A = w1.shape[0]

    # One-time re-orientation of weights / learning rates to [in, out] so the
    # in-kernel hot loop is transpose-free.  Done in plain XLA, undone below.
    w0t, lr0t = w0.T, lr0.T                   # [D, H]
    w1t, lr1t = w1.T, lr1.T                   # [H, A]

    vmem = pl.BlockSpec(memory_space=pltpu.MemorySpace.VMEM)

    cost = pl.CostEstimate(
        flops=T * (4 * B * D * H + 4 * B * H * A),
        transcendentals=T * B * A,
        bytes_accessed=4 * (xs.size + T * B * A
                            + 2 * (w0.size + w1.size + e0.size + e1.size)
                            + lr0.size + lr1.size),
    )

    ys, w0t_new, w1t_new, e0_new, e1_new = pl.pallas_call(
        hebbian_mlp_rollout_kernel,
        in_specs=[vmem] * 7,
        out_specs=(vmem,) * 5,
        out_shape=(
            jax.ShapeDtypeStruct((T, B, A), jnp.float32),
            jax.ShapeDtypeStruct((D, H), jnp.float32),
            jax.ShapeDtypeStruct((H, A), jnp.float32),
            jax.ShapeDtypeStruct((D, H), jnp.float32),
            jax.ShapeDtypeStruct((H, A), jnp.float32),
        ),
        # Reuse the wrapper-internal transposed weight buffers for the weight
        # outputs (safe: single invocation, inputs are DMA'd in before the one
        # final writeback; these arrays are not visible to the caller).
        input_output_aliases={1: 1, 2: 2},
        cost_estimate=cost,
    )(xs, w0t, w1t, lr0t, lr1t, e0, e1)

    # Hand weights back in the module's [out, in] convention.
    return ys, w0t_new.T, w1t_new.T, e0_new, e1_new


hebbian_mlp_rollout_jit = jax.jit(hebbian_mlp_rollout)


if __name__ == "__main__":
    # Small shapes consistent with the module (dim_x=8, dim_h=[32], dim_y=4),
    # rolled out over T=16 timesteps with batch=8.
    T, B, D_IN, HID, ACT = 16, 8, 8, 32, 4

    key = jax.random.PRNGKey(0)
    kx, kw0, kw1, kl0, kl1 = jax.random.split(key, 5)
    xs = jax.random.normal(kx, (T, B, D_IN), jnp.float32)
    w0 = 0.1 * jax.random.normal(kw0, (HID, D_IN), jnp.float32)    # layer0.weight
    w1 = 0.1 * jax.random.normal(kw1, (ACT, HID), jnp.float32)     # output_layer.weight
    lr0 = 0.01 * jax.random.normal(kl0, (HID, D_IN), jnp.float32)  # lr_layers.layer0.weight
    lr1 = 0.01 * jax.random.normal(kl1, (ACT, HID), jnp.float32)   # lr_layers.output_layer.weight
    e0 = jnp.zeros((D_IN, HID), jnp.float32)                       # eligibility_layers[0]
    e1 = jnp.zeros((HID, ACT), jnp.float32)                        # eligibility_layers[1]

    ys, w0n, w1n, e0n, e1n = jax.block_until_ready(
        hebbian_mlp_rollout_jit(xs, w0, w1, lr0, lr1, e0, e1))

    # Pure-JAX reference of the same rollout semantics (pre-update forward,
    # pre-activation traces, clip, then plastic update; state carries over).
    w0_r, w1_r, e0_r, e1_r = w0, w1, e0, e1
    ys_r = []
    for t in range(T):
        x = xs[t]
        h_pre = x @ w0_r.T                                 # nodes[1]
        y_pre = jnp.maximum(h_pre, 0.0) @ w1_r.T           # nodes[2]
        ys_r.append(jnp.tanh(y_pre))
        e0_r = jnp.clip(e0_r + x.T @ h_pre, -1.0, 1.0)
        e1_r = jnp.clip(e1_r + h_pre.T @ y_pre, -1.0, 1.0)
        w0_r = w0_r + lr0 * e0_r.T
        w1_r = w1_r + lr1 * e1_r.T
    ys_r = jnp.stack(ys_r)

    assert jnp.allclose(ys, ys_r, atol=1e-4), "output mismatch"
    assert jnp.allclose(w0n, w0_r, atol=1e-4), "W0 update mismatch"
    assert jnp.allclose(w1n, w1_r, atol=1e-4), "W1 update mismatch"
    assert jnp.allclose(e0n, e0_r, atol=1e-4), "E0 update mismatch"
    assert jnp.allclose(e1n, e1_r, atol=1e-4), "E1 update mismatch"

    print("KERNEL_OK")
</pallas_src>

<mosaic_0001>
module attributes {stable_mosaic.version = 11 : i64} {
  func.func @hebbian_mlp_rollout_kernel(%arg0: memref<16x8x8xf32, #tpu.memory_space<vmem>>, %arg1: memref<8x32xf32, #tpu.memory_space<vmem>>, %arg2: memref<32x4xf32, #tpu.memory_space<vmem>>, %arg3: memref<8x32xf32, #tpu.memory_space<vmem>>, %arg4: memref<32x4xf32, #tpu.memory_space<vmem>>, %arg5: memref<8x32xf32, #tpu.memory_space<vmem>>, %arg6: memref<32x4xf32, #tpu.memory_space<vmem>>, %arg7: memref<16x8x4xf32, #tpu.memory_space<vmem>>, %arg8: memref<8x32xf32, #tpu.memory_space<vmem>>, %arg9: memref<32x4xf32, #tpu.memory_space<vmem>>, %arg10: memref<8x32xf32, #tpu.memory_space<vmem>>, %arg11: memref<32x4xf32, #tpu.memory_space<vmem>>) attributes {dimension_semantics = [], scalar_prefetch = 0 : i64, scratch_operands = 0 : i64, tpu.core_type = #tpu.core_type<tc>} {
    %c0 = arith.constant 0 : index
    %c0_0 = arith.constant 0 : index
    %0 = vector.load %arg3[%c0, %c0_0] : memref<8x32xf32, #tpu.memory_space<vmem>>, vector<8x32xf32>
    %c0_1 = arith.constant 0 : index
    %c0_2 = arith.constant 0 : index
    %1 = vector.load %arg4[%c0_1, %c0_2] : memref<32x4xf32, #tpu.memory_space<vmem>>, vector<32x4xf32>
    %c0_3 = arith.constant 0 : index
    %c0_4 = arith.constant 0 : index
    %2 = vector.load %arg1[%c0_3, %c0_4] : memref<8x32xf32, #tpu.memory_space<vmem>>, vector<8x32xf32>
    %c0_5 = arith.constant 0 : index
    %c0_6 = arith.constant 0 : index
    %3 = vector.load %arg2[%c0_5, %c0_6] : memref<32x4xf32, #tpu.memory_space<vmem>>, vector<32x4xf32>
    %c0_7 = arith.constant 0 : index
    %c0_8 = arith.constant 0 : index
    %4 = vector.load %arg5[%c0_7, %c0_8] : memref<8x32xf32, #tpu.memory_space<vmem>>, vector<8x32xf32>
    %c0_9 = arith.constant 0 : index
    %c0_10 = arith.constant 0 : index
    %5 = vector.load %arg6[%c0_9, %c0_10] : memref<32x4xf32, #tpu.memory_space<vmem>>, vector<32x4xf32>
    %c0_i32 = arith.constant 0 : i32
    %6 = arith.index_cast %c0_i32 : i32 to index
    %c0_11 = arith.constant 0 : index
    %c0_12 = arith.constant 0 : index
    %7 = vector.load %arg0[%6, %c0_11, %c0_12] : memref<16x8x8xf32, #tpu.memory_space<vmem>>, vector<1x8x8xf32>
    %8 = vector.shape_cast %7 : vector<1x8x8xf32> to vector<8x8xf32>
    %cst = arith.constant dense<0.000000e+00> : vector<8x32xf32>
    %9 = tpu.matmul %8, %2, %cst {dimension_numbers = #tpu.dot_dimension_numbers<[1], [0], [0], [1], [0, 0, 1, 1], [], []>} : vector<8x8xf32>, vector<8x32xf32>, vector<8x32xf32> -> vector<8x32xf32>
    %cst_13 = arith.constant 0.000000e+00 : f32
    %10 = vector.broadcast %cst_13 : f32 to vector<8x32xf32>
    %11 = arith.maximumf %9, %10 : vector<8x32xf32>
    %cst_14 = arith.constant dense<0.000000e+00> : vector<8x4xf32>
    %12 = tpu.matmul %11, %3, %cst_14 {dimension_numbers = #tpu.dot_dimension_numbers<[1], [0], [0], [1], [0, 0, 1, 1], [], []>} : vector<8x32xf32>, vector<32x4xf32>, vector<8x4xf32> -> vector<8x4xf32>
    %13 = math.tanh %12 : vector<8x4xf32>
    %14 = arith.index_cast %c0_i32 : i32 to index
    %c0_15 = arith.constant 0 : index
    %c0_16 = arith.constant 0 : index
    %15 = vector.load %arg7[%14, %c0_15, %c0_16] : memref<16x8x4xf32, #tpu.memory_space<vmem>>, vector<1x8x4xf32>
    %16 = vector.shape_cast %15 : vector<1x8x4xf32> to vector<8x4xf32>
    %17 = vector.shape_cast %13 : vector<8x4xf32> to vector<1x8x4xf32>
    tpu.vector_store %arg7[%14, %c0_15, %c0_16], %17 {strides = array<i32>} : memref<16x8x4xf32, #tpu.memory_space<vmem>>, vector<1x8x4xf32>,
    %cst_17 = arith.constant dense<0.000000e+00> : vector<8x32xf32>
    %18 = tpu.matmul %8, %9, %cst_17 {dimension_numbers = #tpu.dot_dimension_numbers<[0], [0], [1], [1], [0, 1, 1, 1], [], []>} : vector<8x8xf32>, vector<8x32xf32>, vector<8x32xf32> -> vector<8x32xf32>
    %19 = arith.addf %4, %18 : vector<8x32xf32>
    %cst_18 = arith.constant -1.000000e+00 : f32
    %cst_19 = arith.constant 1.000000e+00 : f32
    %20 = vector.broadcast %cst_18 : f32 to vector<8x32xf32>
    %21 = arith.maximumf %20, %19 : vector<8x32xf32>
    %22 = vector.broadcast %cst_19 : f32 to vector<8x32xf32>
    %23 = arith.minimumf %22, %21 : vector<8x32xf32>
    %cst_20 = arith.constant dense<0.000000e+00> : vector<32x4xf32>
    %24 = tpu.matmul %9, %12, %cst_20 {dimension_numbers = #tpu.dot_dimension_numbers<[0], [0], [1], [1], [0, 1, 1, 1], [], []>} : vector<8x32xf32>, vector<8x4xf32>, vector<32x4xf32> -> vector<32x4xf32>
    %25 = arith.addf %5, %24 : vector<32x4xf32>
    %cst_21 = arith.constant -1.000000e+00 : f32
    %cst_22 = arith.constant 1.000000e+00 : f32
    %26 = vector.broadcast %cst_21 : f32 to vector<32x4xf32>
    %27 = arith.maximumf %26, %25 : vector<32x4xf32>
    %28 = vector.broadcast %cst_22 : f32 to vector<32x4xf32>
    %29 = arith.minimumf %28, %27 : vector<32x4xf32>
    %30 = arith.mulf %0, %23 : vector<8x32xf32>
    %31 = arith.addf %2, %30 : vector<8x32xf32>
    %32 = arith.mulf %1, %29 : vector<32x4xf32>
    %33 = arith.addf %3, %32 : vector<32x4xf32>
    %c1_i32 = arith.constant 1 : i32
    %34 = arith.index_cast %c1_i32 : i32 to index
    %c0_23 = arith.constant 0 : index
    %c0_24 = arith.constant 0 : index
    %35 = vector.load %arg0[%34, %c0_23, %c0_24] : memref<16x8x8xf32, #tpu.memory_space<vmem>>, vector<1x8x8xf32>
    %36 = vector.shape_cast %35 : vector<1x8x8xf32> to vector<8x8xf32>
    %cst_25 = arith.constant dense<0.000000e+00> : vector<8x32xf32>
    %37 = tpu.matmul %36, %31, %cst_25 {dimension_numbers = #tpu.dot_dimension_numbers<[1], [0], [0], [1], [0, 0, 1, 1], [], []>} : vector<8x8xf32>, vector<8x32xf32>, vector<8x32xf32> -> vector<8x32xf32>
    %cst_26 = arith.constant 0.000000e+00 : f32
    %38 = vector.broadcast %cst_26 : f32 to vector<8x32xf32>
    %39 = arith.maximumf %37, %38 : vector<8x32xf32>
    %cst_27 = arith.constant dense<0.000000e+00> : vector<8x4xf32>
    %40 = tpu.matmul %39, %33, %cst_27 {dimension_numbers = #tpu.dot_dimension_numbers<[1], [0], [0], [1], [0, 0, 1, 1], [], []>} : vector<8x32xf32>, vector<32x4xf32>, vector<8x4xf32> -> vector<8x4xf32>
    %41 = math.tanh %40 : vector<8x4xf32>
    %42 = arith.index_cast %c1_i32 : i32 to index
    %c0_28 = arith.constant 0 : index
    %c0_29 = arith.constant 0 : index
    %43 = vector.load %arg7[%42, %c0_28, %c0_29] : memref<16x8x4xf32, #tpu.memory_space<vmem>>, vector<1x8x4xf32>
    %44 = vector.shape_cast %43 : vector<1x8x4xf32> to vector<8x4xf32>
    %45 = vector.shape_cast %41 : vector<8x4xf32> to vector<1x8x4xf32>
    tpu.vector_store %arg7[%42, %c0_28, %c0_29], %45 {strides = array<i32>} : memref<16x8x4xf32, #tpu.memory_space<vmem>>, vector<1x8x4xf32>,
    %cst_30 = arith.constant dense<0.000000e+00> : vector<8x32xf32>
    %46 = tpu.matmul %36, %37, %cst_30 {dimension_numbers = #tpu.dot_dimension_numbers<[0], [0], [1], [1], [0, 1, 1, 1], [], []>} : vector<8x8xf32>, vector<8x32xf32>, vector<8x32xf32> -> vector<8x32xf32>
    %47 = arith.addf %23, %46 : vector<8x32xf32>
    %cst_31 = arith.constant -1.000000e+00 : f32
    %cst_32 = arith.constant 1.000000e+00 : f32
    %48 = vector.broadcast %cst_31 : f32 to vector<8x32xf32>
    %49 = arith.maximumf %48, %47 : vector<8x32xf32>
    %50 = vector.broadcast %cst_32 : f32 to vector<8x32xf32>
    %51 = arith.minimumf %50, %49 : vector<8x32xf32>
    %cst_33 = arith.constant dense<0.000000e+00> : vector<32x4xf32>
    %52 = tpu.matmul %37, %40, %cst_33 {dimension_numbers = #tpu.dot_dimension_numbers<[0], [0], [1], [1], [0, 1, 1, 1], [], []>} : vector<8x32xf32>, vector<8x4xf32>, vector<32x4xf32> -> vector<32x4xf32>
    %53 = arith.addf %29, %52 : vector<32x4xf32>
    %cst_34 = arith.constant -1.000000e+00 : f32
    %cst_35 = arith.constant 1.000000e+00 : f32
    %54 = vector.broadcast %cst_34 : f32 to vector<32x4xf32>
    %55 = arith.maximumf %54, %53 : vector<32x4xf32>
    %56 = vector.broadcast %cst_35 : f32 to vector<32x4xf32>
    %57 = arith.minimumf %56, %55 : vector<32x4xf32>
    %58 = arith.mulf %0, %51 : vector<8x32xf32>
    %59 = arith.addf %31, %58 : vector<8x32xf32>
    %60 = arith.mulf %1, %57 : vector<32x4xf32>
    %61 = arith.addf %33, %60 : vector<32x4xf32>
    %c2_i32 = arith.constant 2 : i32
    %62 = arith.index_cast %c2_i32 : i32 to index
    %c0_36 = arith.constant 0 : index
    %c0_37 = arith.constant 0 : index
    %63 = vector.load %arg0[%62, %c0_36, %c0_37] : memref<16x8x8xf32, #tpu.memory_space<vmem>>, vector<1x8x8xf32>
    %64 = vector.shape_cast %63 : vector<1x8x8xf32> to vector<8x8xf32>
    %cst_38 = arith.constant dense<0.000000e+00> : vector<8x32xf32>
    %65 = tpu.matmul %64, %59, %cst_38 {dimension_numbers = #tpu.dot_dimension_numbers<[1], [0], [0], [1], [0, 0, 1, 1], [], []>} : vector<8x8xf32>, vector<8x32xf32>, vector<8x32xf32> -> vector<8x32xf32>
    %cst_39 = arith.constant 0.000000e+00 : f32
    %66 = vector.broadcast %cst_39 : f32 to vector<8x32xf32>
    %67 = arith.maximumf %65, %66 : vector<8x32xf32>
    %cst_40 = arith.constant dense<0.000000e+00> : vector<8x4xf32>
    %68 = tpu.matmul %67, %61, %cst_40 {dimension_numbers = #tpu.dot_dimension_numbers<[1], [0], [0], [1], [0, 0, 1, 1], [], []>} : vector<8x32xf32>, vector<32x4xf32>, vector<8x4xf32> -> vector<8x4xf32>
    %69 = math.tanh %68 : vector<8x4xf32>
    %70 = arith.index_cast %c2_i32 : i32 to index
    %c0_41 = arith.constant 0 : index
    %c0_42 = arith.constant 0 : index
    %71 = vector.load %arg7[%70, %c0_41, %c0_42] : memref<16x8x4xf32, #tpu.memory_space<vmem>>, vector<1x8x4xf32>
    %72 = vector.shape_cast %71 : vector<1x8x4xf32> to vector<8x4xf32>
    %73 = vector.shape_cast %69 : vector<8x4xf32> to vector<1x8x4xf32>
    tpu.vector_store %arg7[%70, %c0_41, %c0_42], %73 {strides = array<i32>} : memref<16x8x4xf32, #tpu.memory_space<vmem>>, vector<1x8x4xf32>,
    %cst_43 = arith.constant dense<0.000000e+00> : vector<8x32xf32>
    %74 = tpu.matmul %64, %65, %cst_43 {dimension_numbers = #tpu.dot_dimension_numbers<[0], [0], [1], [1], [0, 1, 1, 1], [], []>} : vector<8x8xf32>, vector<8x32xf32>, vector<8x32xf32> -> vector<8x32xf32>
    %75 = arith.addf %51, %74 : vector<8x32xf32>
    %cst_44 = arith.constant -1.000000e+00 : f32
    %cst_45 = arith.constant 1.000000e+00 : f32
    %76 = vector.broadcast %cst_44 : f32 to vector<8x32xf32>
    %77 = arith.maximumf %76, %75 : vector<8x32xf32>
    %78 = vector.broadcast %cst_45 : f32 to vector<8x32xf32>
    %79 = arith.minimumf %78, %77 : vector<8x32xf32>
    %cst_46 = arith.constant dense<0.000000e+00> : vector<32x4xf32>
    %80 = tpu.matmul %65, %68, %cst_46 {dimension_numbers = #tpu.dot_dimension_numbers<[0], [0], [1], [1], [0, 1, 1, 1], [], []>} : vector<8x32xf32>, vector<8x4xf32>, vector<32x4xf32> -> vector<32x4xf32>
    %81 = arith.addf %57, %80 : vector<32x4xf32>
    %cst_47 = arith.constant -1.000000e+00 : f32
    %cst_48 = arith.constant 1.000000e+00 : f32
    %82 = vector.broadcast %cst_47 : f32 to vector<32x4xf32>
    %83 = arith.maximumf %82, %81 : vector<32x4xf32>
    %84 = vector.broadcast %cst_48 : f32 to vector<32x4xf32>
    %85 = arith.minimumf %84, %83 : vector<32x4xf32>
    %86 = arith.mulf %0, %79 : vector<8x32xf32>
    %87 = arith.addf %59, %86 : vector<8x32xf32>
    %88 = arith.mulf %1, %85 : vector<32x4xf32>
    %89 = arith.addf %61, %88 : vector<32x4xf32>
    %c3_i32 = arith.constant 3 : i32
    %90 = arith.index_cast %c3_i32 : i32 to index
    %c0_49 = arith.constant 0 : index
    %c0_50 = arith.constant 0 : index
    %91 = vector.load %arg0[%90, %c0_49, %c0_50] : memref<16x8x8xf32, #tpu.memory_space<vmem>>, vector<1x8x8xf32>
    %92 = vector.shape_cast %91 : vector<1x8x8xf32> to vector<8x8xf32>
    %cst_51 = arith.constant dense<0.000000e+00> : vector<8x32xf32>
    %93 = tpu.matmul %92, %87, %cst_51 {dimension_numbers = #tpu.dot_dimension_numbers<[1], [0], [0], [1], [0, 0, 1, 1], [], []>} : vector<8x8xf32>, vector<8x32xf32>, vector<8x32xf32> -> vector<8x32xf32>
    %cst_52 = arith.constant 0.000000e+00 : f32
    %94 = vector.broadcast %cst_52 : f32 to vector<8x32xf32>
    %95 = arith.maximumf %93, %94 : vector<8x32xf32>
    %cst_53 = arith.constant dense<0.000000e+00> : vector<8x4xf32>
    %96 = tpu.matmul %95, %89, %cst_53 {dimension_numbers = #tpu.dot_dimension_numbers<[1], [0], [0], [1], [0, 0, 1, 1], [], []>} : vector<8x32xf32>, vector<32x4xf32>, vector<8x4xf32> -> vector<8x4xf32>
    %97 = math.tanh %96 : vector<8x4xf32>
    %98 = arith.index_cast %c3_i32 : i32 to index
    %c0_54 = arith.constant 0 : index
    %c0_55 = arith.constant 0 : index
    %99 = vector.load %arg7[%98, %c0_54, %c0_55] : memref<16x8x4xf32, #tpu.memory_space<vmem>>, vector<1x8x4xf32>
    %100 = vector.shape_cast %99 : vector<1x8x4xf32> to vector<8x4xf32>
    %101 = vector.shape_cast %97 : vector<8x4xf32> to vector<1x8x4xf32>
    tpu.vector_store %arg7[%98, %c0_54, %c0_55], %101 {strides = array<i32>} : memref<16x8x4xf32, #tpu.memory_space<vmem>>, vector<1x8x4xf32>,
    %cst_56 = arith.constant dense<0.000000e+00> : vector<8x32xf32>
    %102 = tpu.matmul %92, %93, %cst_56 {dimension_numbers = #tpu.dot_dimension_numbers<[0], [0], [1], [1], [0, 1, 1, 1], [], []>} : vector<8x8xf32>, vector<8x32xf32>, vector<8x32xf32> -> vector<8x32xf32>
    %103 = arith.addf %79, %102 : vector<8x32xf32>
    %cst_57 = arith.constant -1.000000e+00 : f32
    %cst_58 = arith.constant 1.000000e+00 : f32
    %104 = vector.broadcast %cst_57 : f32 to vector<8x32xf32>
    %105 = arith.maximumf %104, %103 : vector<8x32xf32>
    %106 = vector.broadcast %cst_58 : f32 to vector<8x32xf32>
    %107 = arith.minimumf %106, %105 : vector<8x32xf32>
    %cst_59 = arith.constant dense<0.000000e+00> : vector<32x4xf32>
    %108 = tpu.matmul %93, %96, %cst_59 {dimension_numbers = #tpu.dot_dimension_numbers<[0], [0], [1], [1], [0, 1, 1, 1], [], []>} : vector<8x32xf32>, vector<8x4xf32>, vector<32x4xf32> -> vector<32x4xf32>
    %109 = arith.addf %85, %108 : vector<32x4xf32>
    %cst_60 = arith.constant -1.000000e+00 : f32
    %cst_61 = arith.constant 1.000000e+00 : f32
    %110 = vector.broadcast %cst_60 : f32 to vector<32x4xf32>
    %111 = arith.maximumf %110, %109 : vector<32x4xf32>
    %112 = vector.broadcast %cst_61 : f32 to vector<32x4xf32>
    %113 = arith.minimumf %112, %111 : vector<32x4xf32>
    %114 = arith.mulf %0, %107 : vector<8x32xf32>
    %115 = arith.addf %87, %114 : vector<8x32xf32>
    %116 = arith.mulf %1, %113 : vector<32x4xf32>
    %117 = arith.addf %89, %116 : vector<32x4xf32>
    %c4_i32 = arith.constant 4 : i32
    %118 = arith.index_cast %c4_i32 : i32 to index
    %c0_62 = arith.constant 0 : index
    %c0_63 = arith.constant 0 : index
    %119 = vector.load %arg0[%118, %c0_62, %c0_63] : memref<16x8x8xf32, #tpu.memory_space<vmem>>, vector<1x8x8xf32>
    %120 = vector.shape_cast %119 : vector<1x8x8xf32> to vector<8x8xf32>
    %cst_64 = arith.constant dense<0.000000e+00> : vector<8x32xf32>
    %121 = tpu.matmul %120, %115, %cst_64 {dimension_numbers = #tpu.dot_dimension_numbers<[1], [0], [0], [1], [0, 0, 1, 1], [], []>} : vector<8x8xf32>, vector<8x32xf32>, vector<8x32xf32> -> vector<8x32xf32>
    %cst_65 = arith.constant 0.000000e+00 : f32
    %122 = vector.broadcast %cst_65 : f32 to vector<8x32xf32>
    %123 = arith.maximumf %121, %122 : vector<8x32xf32>
    %cst_66 = arith.constant dense<0.000000e+00> : vector<8x4xf32>
    %124 = tpu.matmul %123, %117, %cst_66 {dimension_numbers = #tpu.dot_dimension_numbers<[1], [0], [0], [1], [0, 0, 1, 1], [], []>} : vector<8x32xf32>, vector<32x4xf32>, vector<8x4xf32> -> vector<8x4xf32>
    %125 = math.tanh %124 : vector<8x4xf32>
    %126 = arith.index_cast %c4_i32 : i32 to index
    %c0_67 = arith.constant 0 : index
    %c0_68 = arith.constant 0 : index
    %127 = vector.load %arg7[%126, %c0_67, %c0_68] : memref<16x8x4xf32, #tpu.memory_space<vmem>>, vector<1x8x4xf32>
    %128 = vector.shape_cast %127 : vector<1x8x4xf32> to vector<8x4xf32>
    %129 = vector.shape_cast %125 : vector<8x4xf32> to vector<1x8x4xf32>
    tpu.vector_store %arg7[%126, %c0_67, %c0_68], %129 {strides = array<i32>} : memref<16x8x4xf32, #tpu.memory_space<vmem>>, vector<1x8x4xf32>,
    %cst_69 = arith.constant dense<0.000000e+00> : vector<8x32xf32>
    %130 = tpu.matmul %120, %121, %cst_69 {dimension_numbers = #tpu.dot_dimension_numbers<[0], [0], [1], [1], [0, 1, 1, 1], [], []>} : vector<8x8xf32>, vector<8x32xf32>, vector<8x32xf32> -> vector<8x32xf32>
    %131 = arith.addf %107, %130 : vector<8x32xf32>
    %cst_70 = arith.constant -1.000000e+00 : f32
    %cst_71 = arith.constant 1.000000e+00 : f32
    %132 = vector.broadcast %cst_70 : f32 to vector<8x32xf32>
    %133 = arith.maximumf %132, %131 : vector<8x32xf32>
    %134 = vector.broadcast %cst_71 : f32 to vector<8x32xf32>
    %135 = arith.minimumf %134, %133 : vector<8x32xf32>
    %cst_72 = arith.constant dense<0.000000e+00> : vector<32x4xf32>
    %136 = tpu.matmul %121, %124, %cst_72 {dimension_numbers = #tpu.dot_dimension_numbers<[0], [0], [1], [1], [0, 1, 1, 1], [], []>} : vector<8x32xf32>, vector<8x4xf32>, vector<32x4xf32> -> vector<32x4xf32>
    %137 = arith.addf %113, %136 : vector<32x4xf32>
    %cst_73 = arith.constant -1.000000e+00 : f32
    %cst_74 = arith.constant 1.000000e+00 : f32
    %138 = vector.broadcast %cst_73 : f32 to vector<32x4xf32>
    %139 = arith.maximumf %138, %137 : vector<32x4xf32>
    %140 = vector.broadcast %cst_74 : f32 to vector<32x4xf32>
    %141 = arith.minimumf %140, %139 : vector<32x4xf32>
    %142 = arith.mulf %0, %135 : vector<8x32xf32>
    %143 = arith.addf %115, %142 : vector<8x32xf32>
    %144 = arith.mulf %1, %141 : vector<32x4xf32>
    %145 = arith.addf %117, %144 : vector<32x4xf32>
    %c5_i32 = arith.constant 5 : i32
    %146 = arith.index_cast %c5_i32 : i32 to index
    %c0_75 = arith.constant 0 : index
    %c0_76 = arith.constant 0 : index
    %147 = vector.load %arg0[%146, %c0_75, %c0_76] : memref<16x8x8xf32, #tpu.memory_space<vmem>>, vector<1x8x8xf32>
    %148 = vector.shape_cast %147 : vector<1x8x8xf32> to vector<8x8xf32>
    %cst_77 = arith.constant dense<0.000000e+00> : vector<8x32xf32>
    %149 = tpu.matmul %148, %143, %cst_77 {dimension_numbers = #tpu.dot_dimension_numbers<[1], [0], [0], [1], [0, 0, 1, 1], [], []>} : vector<8x8xf32>, vector<8x32xf32>, vector<8x32xf32> -> vector<8x32xf32>
    %cst_78 = arith.constant 0.000000e+00 : f32
    %150 = vector.broadcast %cst_78 : f32 to vector<8x32xf32>
    %151 = arith.maximumf %149, %150 : vector<8x32xf32>
    %cst_79 = arith.constant dense<0.000000e+00> : vector<8x4xf32>
    %152 = tpu.matmul %151, %145, %cst_79 {dimension_numbers = #tpu.dot_dimension_numbers<[1], [0], [0], [1], [0, 0, 1, 1], [], []>} : vector<8x32xf32>, vector<32x4xf32>, vector<8x4xf32> -> vector<8x4xf32>
    %153 = math.tanh %152 : vector<8x4xf32>
    %154 = arith.index_cast %c5_i32 : i32 to index
    %c0_80 = arith.constant 0 : index
    %c0_81 = arith.constant 0 : index
    %155 = vector.load %arg7[%154, %c0_80, %c0_81] : memref<16x8x4xf32, #tpu.memory_space<vmem>>, vector<1x8x4xf32>
    %156 = vector.shape_cast %155 : vector<1x8x4xf32> to vector<8x4xf32>
    %157 = vector.shape_cast %153 : vector<8x4xf32> to vector<1x8x4xf32>
    tpu.vector_store %arg7[%154, %c0_80, %c0_81], %157 {strides = array<i32>} : memref<16x8x4xf32, #tpu.memory_space<vmem>>, vector<1x8x4xf32>,
    %cst_82 = arith.constant dense<0.000000e+00> : vector<8x32xf32>
    %158 = tpu.matmul %148, %149, %cst_82 {dimension_numbers = #tpu.dot_dimension_numbers<[0], [0], [1], [1], [0, 1, 1, 1], [], []>} : vector<8x8xf32>, vector<8x32xf32>, vector<8x32xf32> -> vector<8x32xf32>
    %159 = arith.addf %135, %158 : vector<8x32xf32>
    %cst_83 = arith.constant -1.000000e+00 : f32
    %cst_84 = arith.constant 1.000000e+00 : f32
    %160 = vector.broadcast %cst_83 : f32 to vector<8x32xf32>
    %161 = arith.maximumf %160, %159 : vector<8x32xf32>
    %162 = vector.broadcast %cst_84 : f32 to vector<8x32xf32>
    %163 = arith.minimumf %162, %161 : vector<8x32xf32>
    %cst_85 = arith.constant dense<0.000000e+00> : vector<32x4xf32>
    %164 = tpu.matmul %149, %152, %cst_85 {dimension_numbers = #tpu.dot_dimension_numbers<[0], [0], [1], [1], [0, 1, 1, 1], [], []>} : vector<8x32xf32>, vector<8x4xf32>, vector<32x4xf32> -> vector<32x4xf32>
    %165 = arith.addf %141, %164 : vector<32x4xf32>
    %cst_86 = arith.constant -1.000000e+00 : f32
    %cst_87 = arith.constant 1.000000e+00 : f32
    %166 = vector.broadcast %cst_86 : f32 to vector<32x4xf32>
    %167 = arith.maximumf %166, %165 : vector<32x4xf32>
    %168 = vector.broadcast %cst_87 : f32 to vector<32x4xf32>
    %169 = arith.minimumf %168, %167 : vector<32x4xf32>
    %170 = arith.mulf %0, %163 : vector<8x32xf32>
    %171 = arith.addf %143, %170 : vector<8x32xf32>
    %172 = arith.mulf %1, %169 : vector<32x4xf32>
    %173 = arith.addf %145, %172 : vector<32x4xf32>
    %c6_i32 = arith.constant 6 : i32
    %174 = arith.index_cast %c6_i32 : i32 to index
    %c0_88 = arith.constant 0 : index
    %c0_89 = arith.constant 0 : index
    %175 = vector.load %arg0[%174, %c0_88, %c0_89] : memref<16x8x8xf32, #tpu.memory_space<vmem>>, vector<1x8x8xf32>
    %176 = vector.shape_cast %175 : vector<1x8x8xf32> to vector<8x8xf32>
    %cst_90 = arith.constant dense<0.000000e+00> : vector<8x32xf32>
    %177 = tpu.matmul %176, %171, %cst_90 {dimension_numbers = #tpu.dot_dimension_numbers<[1], [0], [0], [1], [0, 0, 1, 1], [], []>} : vector<8x8xf32>, vector<8x32xf32>, vector<8x32xf32> -> vector<8x32xf32>
    %cst_91 = arith.constant 0.000000e+00 : f32
    %178 = vector.broadcast %cst_91 : f32 to vector<8x32xf32>
    %179 = arith.maximumf %177, %178 : vector<8x32xf32>
    %cst_92 = arith.constant dense<0.000000e+00> : vector<8x4xf32>
    %180 = tpu.matmul %179, %173, %cst_92 {dimension_numbers = #tpu.dot_dimension_numbers<[1], [0], [0], [1], [0, 0, 1, 1], [], []>} : vector<8x32xf32>, vector<32x4xf32>, vector<8x4xf32> -> vector<8x4xf32>
    %181 = math.tanh %180 : vector<8x4xf32>
    %182 = arith.index_cast %c6_i32 : i32 to index
    %c0_93 = arith.constant 0 : index
    %c0_94 = arith.constant 0 : index
    %183 = vector.load %arg7[%182, %c0_93, %c0_94] : memref<16x8x4xf32, #tpu.memory_space<vmem>>, vector<1x8x4xf32>
    %184 = vector.shape_cast %183 : vector<1x8x4xf32> to vector<8x4xf32>
    %185 = vector.shape_cast %181 : vector<8x4xf32> to vector<1x8x4xf32>
    tpu.vector_store %arg7[%182, %c0_93, %c0_94], %185 {strides = array<i32>} : memref<16x8x4xf32, #tpu.memory_space<vmem>>, vector<1x8x4xf32>,
    %cst_95 = arith.constant dense<0.000000e+00> : vector<8x32xf32>
    %186 = tpu.matmul %176, %177, %cst_95 {dimension_numbers = #tpu.dot_dimension_numbers<[0], [0], [1], [1], [0, 1, 1, 1], [], []>} : vector<8x8xf32>, vector<8x32xf32>, vector<8x32xf32> -> vector<8x32xf32>
    %187 = arith.addf %163, %186 : vector<8x32xf32>
    %cst_96 = arith.constant -1.000000e+00 : f32
    %cst_97 = arith.constant 1.000000e+00 : f32
    %188 = vector.broadcast %cst_96 : f32 to vector<8x32xf32>
    %189 = arith.maximumf %188, %187 : vector<8x32xf32>
    %190 = vector.broadcast %cst_97 : f32 to vector<8x32xf32>
    %191 = arith.minimumf %190, %189 : vector<8x32xf32>
    %cst_98 = arith.constant dense<0.000000e+00> : vector<32x4xf32>
    %192 = tpu.matmul %177, %180, %cst_98 {dimension_numbers = #tpu.dot_dimension_numbers<[0], [0], [1], [1], [0, 1, 1, 1], [], []>} : vector<8x32xf32>, vector<8x4xf32>, vector<32x4xf32> -> vector<32x4xf32>
    %193 = arith.addf %169, %192 : vector<32x4xf32>
    %cst_99 = arith.constant -1.000000e+00 : f32
    %cst_100 = arith.constant 1.000000e+00 : f32
    %194 = vector.broadcast %cst_99 : f32 to vector<32x4xf32>
    %195 = arith.maximumf %194, %193 : vector<32x4xf32>
    %196 = vector.broadcast %cst_100 : f32 to vector<32x4xf32>
    %197 = arith.minimumf %196, %195 : vector<32x4xf32>
    %198 = arith.mulf %0, %191 : vector<8x32xf32>
    %199 = arith.addf %171, %198 : vector<8x32xf32>
    %200 = arith.mulf %1, %197 : vector<32x4xf32>
    %201 = arith.addf %173, %200 : vector<32x4xf32>
    %c7_i32 = arith.constant 7 : i32
    %202 = arith.index_cast %c7_i32 : i32 to index
    %c0_101 = arith.constant 0 : index
    %c0_102 = arith.constant 0 : index
    %203 = vector.load %arg0[%202, %c0_101, %c0_102] : memref<16x8x8xf32, #tpu.memory_space<vmem>>, vector<1x8x8xf32>
    %204 = vector.shape_cast %203 : vector<1x8x8xf32> to vector<8x8xf32>
    %cst_103 = arith.constant dense<0.000000e+00> : vector<8x32xf32>
    %205 = tpu.matmul %204, %199, %cst_103 {dimension_numbers = #tpu.dot_dimension_numbers<[1], [0], [0], [1], [0, 0, 1, 1], [], []>} : vector<8x8xf32>, vector<8x32xf32>, vector<8x32xf32> -> vector<8x32xf32>
    %cst_104 = arith.constant 0.000000e+00 : f32
    %206 = vector.broadcast %cst_104 : f32 to vector<8x32xf32>
    %207 = arith.maximumf %205, %206 : vector<8x32xf32>
    %cst_105 = arith.constant dense<0.000000e+00> : vector<8x4xf32>
    %208 = tpu.matmul %207, %201, %cst_105 {dimension_numbers = #tpu.dot_dimension_numbers<[1], [0], [0], [1], [0, 0, 1, 1], [], []>} : vector<8x32xf32>, vector<32x4xf32>, vector<8x4xf32> -> vector<8x4xf32>
    %209 = math.tanh %208 : vector<8x4xf32>
    %210 = arith.index_cast %c7_i32 : i32 to index
    %c0_106 = arith.constant 0 : index
    %c0_107 = arith.constant 0 : index
    %211 = vector.load %arg7[%210, %c0_106, %c0_107] : memref<16x8x4xf32, #tpu.memory_space<vmem>>, vector<1x8x4xf32>
    %212 = vector.shape_cast %211 : vector<1x8x4xf32> to vector<8x4xf32>
    %213 = vector.shape_cast %209 : vector<8x4xf32> to vector<1x8x4xf32>
    tpu.vector_store %arg7[%210, %c0_106, %c0_107], %213 {strides = array<i32>} : memref<16x8x4xf32, #tpu.memory_space<vmem>>, vector<1x8x4xf32>,
    %cst_108 = arith.constant dense<0.000000e+00> : vector<8x32xf32>
    %214 = tpu.matmul %204, %205, %cst_108 {dimension_numbers = #tpu.dot_dimension_numbers<[0], [0], [1], [1], [0, 1, 1, 1], [], []>} : vector<8x8xf32>, vector<8x32xf32>, vector<8x32xf32> -> vector<8x32xf32>
    %215 = arith.addf %191, %214 : vector<8x32xf32>
    %cst_109 = arith.constant -1.000000e+00 : f32
    %cst_110 = arith.constant 1.000000e+00 : f32
    %216 = vector.broadcast %cst_109 : f32 to vector<8x32xf32>
    %217 = arith.maximumf %216, %215 : vector<8x32xf32>
    %218 = vector.broadcast %cst_110 : f32 to vector<8x32xf32>
    %219 = arith.minimumf %218, %217 : vector<8x32xf32>
    %cst_111 = arith.constant dense<0.000000e+00> : vector<32x4xf32>
    %220 = tpu.matmul %205, %208, %cst_111 {dimension_numbers = #tpu.dot_dimension_numbers<[0], [0], [1], [1], [0, 1, 1, 1], [], []>} : vector<8x32xf32>, vector<8x4xf32>, vector<32x4xf32> -> vector<32x4xf32>
    %221 = arith.addf %197, %220 : vector<32x4xf32>
    %cst_112 = arith.constant -1.000000e+00 : f32
    %cst_113 = arith.constant 1.000000e+00 : f32
    %222 = vector.broadcast %cst_112 : f32 to vector<32x4xf32>
    %223 = arith.maximumf %222, %221 : vector<32x4xf32>
    %224 = vector.broadcast %cst_113 : f32 to vector<32x4xf32>
    %225 = arith.minimumf %224, %223 : vector<32x4xf32>
    %226 = arith.mulf %0, %219 : vector<8x32xf32>
    %227 = arith.addf %199, %226 : vector<8x32xf32>
    %228 = arith.mulf %1, %225 : vector<32x4xf32>
    %229 = arith.addf %201, %228 : vector<32x4xf32>
    %c8_i32 = arith.constant 8 : i32
    %230 = arith.index_cast %c8_i32 : i32 to index
    %c0_114 = arith.constant 0 : index
    %c0_115 = arith.constant 0 : index
    %231 = vector.load %arg0[%230, %c0_114, %c0_115] : memref<16x8x8xf32, #tpu.memory_space<vmem>>, vector<1x8x8xf32>
    %232 = vector.shape_cast %231 : vector<1x8x8xf32> to vector<8x8xf32>
    %cst_116 = arith.constant dense<0.000000e+00> : vector<8x32xf32>
    %233 = tpu.matmul %232, %227, %cst_116 {dimension_numbers = #tpu.dot_dimension_numbers<[1], [0], [0], [1], [0, 0, 1, 1], [], []>} : vector<8x8xf32>, vector<8x32xf32>, vector<8x32xf32> -> vector<8x32xf32>
    %cst_117 = arith.constant 0.000000e+00 : f32
    %234 = vector.broadcast %cst_117 : f32 to vector<8x32xf32>
    %235 = arith.maximumf %233, %234 : vector<8x32xf32>
    %cst_118 = arith.constant dense<0.000000e+00> : vector<8x4xf32>
    %236 = tpu.matmul %235, %229, %cst_118 {dimension_numbers = #tpu.dot_dimension_numbers<[1], [0], [0], [1], [0, 0, 1, 1], [], []>} : vector<8x32xf32>, vector<32x4xf32>, vector<8x4xf32> -> vector<8x4xf32>
    %237 = math.tanh %236 : vector<8x4xf32>
    %238 = arith.index_cast %c8_i32 : i32 to index
    %c0_119 = arith.constant 0 : index
    %c0_120 = arith.constant 0 : index
    %239 = vector.load %arg7[%238, %c0_119, %c0_120] : memref<16x8x4xf32, #tpu.memory_space<vmem>>, vector<1x8x4xf32>
    %240 = vector.shape_cast %239 : vector<1x8x4xf32> to vector<8x4xf32>
    %241 = vector.shape_cast %237 : vector<8x4xf32> to vector<1x8x4xf32>
    tpu.vector_store %arg7[%238, %c0_119, %c0_120], %241 {strides = array<i32>} : memref<16x8x4xf32, #tpu.memory_space<vmem>>, vector<1x8x4xf32>,
    %cst_121 = arith.constant dense<0.000000e+00> : vector<8x32xf32>
    %242 = tpu.matmul %232, %233, %cst_121 {dimension_numbers = #tpu.dot_dimension_numbers<[0], [0], [1], [1], [0, 1, 1, 1], [], []>} : vector<8x8xf32>, vector<8x32xf32>, vector<8x32xf32> -> vector<8x32xf32>
    %243 = arith.addf %219, %242 : vector<8x32xf32>
    %cst_122 = arith.constant -1.000000e+00 : f32
    %cst_123 = arith.constant 1.000000e+00 : f32
    %244 = vector.broadcast %cst_122 : f32 to vector<8x32xf32>
    %245 = arith.maximumf %244, %243 : vector<8x32xf32>
    %246 = vector.broadcast %cst_123 : f32 to vector<8x32xf32>
    %247 = arith.minimumf %246, %245 : vector<8x32xf32>
    %cst_124 = arith.constant dense<0.000000e+00> : vector<32x4xf32>
    %248 = tpu.matmul %233, %236, %cst_124 {dimension_numbers = #tpu.dot_dimension_numbers<[0], [0], [1], [1], [0, 1, 1, 1], [], []>} : vector<8x32xf32>, vector<8x4xf32>, vector<32x4xf32> -> vector<32x4xf32>
    %249 = arith.addf %225, %248 : vector<32x4xf32>
    %cst_125 = arith.constant -1.000000e+00 : f32
    %cst_126 = arith.constant 1.000000e+00 : f32
    %250 = vector.broadcast %cst_125 : f32 to vector<32x4xf32>
    %251 = arith.maximumf %250, %249 : vector<32x4xf32>
    %252 = vector.broadcast %cst_126 : f32 to vector<32x4xf32>
    %253 = arith.minimumf %252, %251 : vector<32x4xf32>
    %254 = arith.mulf %0, %247 : vector<8x32xf32>
    %255 = arith.addf %227, %254 : vector<8x32xf32>
    %256 = arith.mulf %1, %253 : vector<32x4xf32>
    %257 = arith.addf %229, %256 : vector<32x4xf32>
    %c9_i32 = arith.constant 9 : i32
    %258 = arith.index_cast %c9_i32 : i32 to index
    %c0_127 = arith.constant 0 : index
    %c0_128 = arith.constant 0 : index
    %259 = vector.load %arg0[%258, %c0_127, %c0_128] : memref<16x8x8xf32, #tpu.memory_space<vmem>>, vector<1x8x8xf32>
    %260 = vector.shape_cast %259 : vector<1x8x8xf32> to vector<8x8xf32>
    %cst_129 = arith.constant dense<0.000000e+00> : vector<8x32xf32>
    %261 = tpu.matmul %260, %255, %cst_129 {dimension_numbers = #tpu.dot_dimension_numbers<[1], [0], [0], [1], [0, 0, 1, 1], [], []>} : vector<8x8xf32>, vector<8x32xf32>, vector<8x32xf32> -> vector<8x32xf32>
    %cst_130 = arith.constant 0.000000e+00 : f32
    %262 = vector.broadcast %cst_130 : f32 to vector<8x32xf32>
    %263 = arith.maximumf %261, %262 : vector<8x32xf32>
    %cst_131 = arith.constant dense<0.000000e+00> : vector<8x4xf32>
    %264 = tpu.matmul %263, %257, %cst_131 {dimension_numbers = #tpu.dot_dimension_numbers<[1], [0], [0], [1], [0, 0, 1, 1], [], []>} : vector<8x32xf32>, vector<32x4xf32>, vector<8x4xf32> -> vector<8x4xf32>
    %265 = math.tanh %264 : vector<8x4xf32>
    %266 = arith.index_cast %c9_i32 : i32 to index
    %c0_132 = arith.constant 0 : index
    %c0_133 = arith.constant 0 : index
    %267 = vector.load %arg7[%266, %c0_132, %c0_133] : memref<16x8x4xf32, #tpu.memory_space<vmem>>, vector<1x8x4xf32>
    %268 = vector.shape_cast %267 : vector<1x8x4xf32> to vector<8x4xf32>
    %269 = vector.shape_cast %265 : vector<8x4xf32> to vector<1x8x4xf32>
    tpu.vector_store %arg7[%266, %c0_132, %c0_133], %269 {strides = array<i32>} : memref<16x8x4xf32, #tpu.memory_space<vmem>>, vector<1x8x4xf32>,
    %cst_134 = arith.constant dense<0.000000e+00> : vector<8x32xf32>
    %270 = tpu.matmul %260, %261, %cst_134 {dimension_numbers = #tpu.dot_dimension_numbers<[0], [0], [1], [1], [0, 1, 1, 1], [], []>} : vector<8x8xf32>, vector<8x32xf32>, vector<8x32xf32> -> vector<8x32xf32>
    %271 = arith.addf %247, %270 : vector<8x32xf32>
    %cst_135 = arith.constant -1.000000e+00 : f32
    %cst_136 = arith.constant 1.000000e+00 : f32
    %272 = vector.broadcast %cst_135 : f32 to vector<8x32xf32>
    %273 = arith.maximumf %272, %271 : vector<8x32xf32>
    %274 = vector.broadcast %cst_136 : f32 to vector<8x32xf32>
    %275 = arith.minimumf %274, %273 : vector<8x32xf32>
    %cst_137 = arith.constant dense<0.000000e+00> : vector<32x4xf32>
    %276 = tpu.matmul %261, %264, %cst_137 {dimension_numbers = #tpu.dot_dimension_numbers<[0], [0], [1], [1], [0, 1, 1, 1], [], []>} : vector<8x32xf32>, vector<8x4xf32>, vector<32x4xf32> -> vector<32x4xf32>
    %277 = arith.addf %253, %276 : vector<32x4xf32>
    %cst_138 = arith.constant -1.000000e+00 : f32
    %cst_139 = arith.constant 1.000000e+00 : f32
    %278 = vector.broadcast %cst_138 : f32 to vector<32x4xf32>
    %279 = arith.maximumf %278, %277 : vector<32x4xf32>
    %280 = vector.broadcast %cst_139 : f32 to vector<32x4xf32>
    %281 = arith.minimumf %280, %279 : vector<32x4xf32>
    %282 = arith.mulf %0, %275 : vector<8x32xf32>
    %283 = arith.addf %255, %282 : vector<8x32xf32>
    %284 = arith.mulf %1, %281 : vector<32x4xf32>
    %285 = arith.addf %257, %284 : vector<32x4xf32>
    %c10_i32 = arith.constant 10 : i32
    %286 = arith.index_cast %c10_i32 : i32 to index
    %c0_140 = arith.constant 0 : index
    %c0_141 = arith.constant 0 : index
    %287 = vector.load %arg0[%286, %c0_140, %c0_141] : memref<16x8x8xf32, #tpu.memory_space<vmem>>, vector<1x8x8xf32>
    %288 = vector.shape_cast %287 : vector<1x8x8xf32> to vector<8x8xf32>
    %cst_142 = arith.constant dense<0.000000e+00> : vector<8x32xf32>
    %289 = tpu.matmul %288, %283, %cst_142 {dimension_numbers = #tpu.dot_dimension_numbers<[1], [0], [0], [1], [0, 0, 1, 1], [], []>} : vector<8x8xf32>, vector<8x32xf32>, vector<8x32xf32> -> vector<8x32xf32>
    %cst_143 = arith.constant 0.000000e+00 : f32
    %290 = vector.broadcast %cst_143 : f32 to vector<8x32xf32>
    %291 = arith.maximumf %289, %290 : vector<8x32xf32>
    %cst_144 = arith.constant dense<0.000000e+00> : vector<8x4xf32>
    %292 = tpu.matmul %291, %285, %cst_144 {dimension_numbers = #tpu.dot_dimension_numbers<[1], [0], [0], [1], [0, 0, 1, 1], [], []>} : vector<8x32xf32>, vector<32x4xf32>, vector<8x4xf32> -> vector<8x4xf32>
    %293 = math.tanh %292 : vector<8x4xf32>
    %294 = arith.index_cast %c10_i32 : i32 to index
    %c0_145 = arith.constant 0 : index
    %c0_146 = arith.constant 0 : index
    %295 = vector.load %arg7[%294, %c0_145, %c0_146] : memref<16x8x4xf32, #tpu.memory_space<vmem>>, vector<1x8x4xf32>
    %296 = vector.shape_cast %295 : vector<1x8x4xf32> to vector<8x4xf32>
    %297 = vector.shape_cast %293 : vector<8x4xf32> to vector<1x8x4xf32>
    tpu.vector_store %arg7[%294, %c0_145, %c0_146], %297 {strides = array<i32>} : memref<16x8x4xf32, #tpu.memory_space<vmem>>, vector<1x8x4xf32>,
    %cst_147 = arith.constant dense<0.000000e+00> : vector<8x32xf32>
    %298 = tpu.matmul %288, %289, %cst_147 {dimension_numbers = #tpu.dot_dimension_numbers<[0], [0], [1], [1], [0, 1, 1, 1], [], []>} : vector<8x8xf32>, vector<8x32xf32>, vector<8x32xf32> -> vector<8x32xf32>
    %299 = arith.addf %275, %298 : vector<8x32xf32>
    %cst_148 = arith.constant -1.000000e+00 : f32
    %cst_149 = arith.constant 1.000000e+00 : f32
    %300 = vector.broadcast %cst_148 : f32 to vector<8x32xf32>
    %301 = arith.maximumf %300, %299 : vector<8x32xf32>
    %302 = vector.broadcast %cst_149 : f32 to vector<8x32xf32>
    %303 = arith.minimumf %302, %301 : vector<8x32xf32>
    %cst_150 = arith.constant dense<0.000000e+00> : vector<32x4xf32>
    %304 = tpu.matmul %289, %292, %cst_150 {dimension_numbers = #tpu.dot_dimension_numbers<[0], [0], [1], [1], [0, 1, 1, 1], [], []>} : vector<8x32xf32>, vector<8x4xf32>, vector<32x4xf32> -> vector<32x4xf32>
    %305 = arith.addf %281, %304 : vector<32x4xf32>
    %cst_151 = arith.constant -1.000000e+00 : f32
    %cst_152 = arith.constant 1.000000e+00 : f32
    %306 = vector.broadcast %cst_151 : f32 to vector<32x4xf32>
    %307 = arith.maximumf %306, %305 : vector<32x4xf32>
    %308 = vector.broadcast %cst_152 : f32 to vector<32x4xf32>
    %309 = arith.minimumf %308, %307 : vector<32x4xf32>
    %310 = arith.mulf %0, %303 : vector<8x32xf32>
    %311 = arith.addf %283, %310 : vector<8x32xf32>
    %312 = arith.mulf %1, %309 : vector<32x4xf32>
    %313 = arith.addf %285, %312 : vector<32x4xf32>
    %c11_i32 = arith.constant 11 : i32
    %314 = arith.index_cast %c11_i32 : i32 to index
    %c0_153 = arith.constant 0 : index
    %c0_154 = arith.constant 0 : index
    %315 = vector.load %arg0[%314, %c0_153, %c0_154] : memref<16x8x8xf32, #tpu.memory_space<vmem>>, vector<1x8x8xf32>
    %316 = vector.shape_cast %315 : vector<1x8x8xf32> to vector<8x8xf32>
    %cst_155 = arith.constant dense<0.000000e+00> : vector<8x32xf32>
    %317 = tpu.matmul %316, %311, %cst_155 {dimension_numbers = #tpu.dot_dimension_numbers<[1], [0], [0], [1], [0, 0, 1, 1], [], []>} : vector<8x8xf32>, vector<8x32xf32>, vector<8x32xf32> -> vector<8x32xf32>
    %cst_156 = arith.constant 0.000000e+00 : f32
    %318 = vector.broadcast %cst_156 : f32 to vector<8x32xf32>
    %319 = arith.maximumf %317, %318 : vector<8x32xf32>
    %cst_157 = arith.constant dense<0.000000e+00> : vector<8x4xf32>
    %320 = tpu.matmul %319, %313, %cst_157 {dimension_numbers = #tpu.dot_dimension_numbers<[1], [0], [0], [1], [0, 0, 1, 1], [], []>} : vector<8x32xf32>, vector<32x4xf32>, vector<8x4xf32> -> vector<8x4xf32>
    %321 = math.tanh %320 : vector<8x4xf32>
    %322 = arith.index_cast %c11_i32 : i32 to index
    %c0_158 = arith.constant 0 : index
    %c0_159 = arith.constant 0 : index
    %323 = vector.load %arg7[%322, %c0_158, %c0_159] : memref<16x8x4xf32, #tpu.memory_space<vmem>>, vector<1x8x4xf32>
    %324 = vector.shape_cast %323 : vector<1x8x4xf32> to vector<8x4xf32>
    %325 = vector.shape_cast %321 : vector<8x4xf32> to vector<1x8x4xf32>
    tpu.vector_store %arg7[%322, %c0_158, %c0_159], %325 {strides = array<i32>} : memref<16x8x4xf32, #tpu.memory_space<vmem>>, vector<1x8x4xf32>,
    %cst_160 = arith.constant dense<0.000000e+00> : vector<8x32xf32>
    %326 = tpu.matmul %316, %317, %cst_160 {dimension_numbers = #tpu.dot_dimension_numbers<[0], [0], [1], [1], [0, 1, 1, 1], [], []>} : vector<8x8xf32>, vector<8x32xf32>, vector<8x32xf32> -> vector<8x32xf32>
    %327 = arith.addf %303, %326 : vector<8x32xf32>
    %cst_161 = arith.constant -1.000000e+00 : f32
    %cst_162 = arith.constant 1.000000e+00 : f32
    %328 = vector.broadcast %cst_161 : f32 to vector<8x32xf32>
    %329 = arith.maximumf %328, %327 : vector<8x32xf32>
    %330 = vector.broadcast %cst_162 : f32 to vector<8x32xf32>
    %331 = arith.minimumf %330, %329 : vector<8x32xf32>
    %cst_163 = arith.constant dense<0.000000e+00> : vector<32x4xf32>
    %332 = tpu.matmul %317, %320, %cst_163 {dimension_numbers = #tpu.dot_dimension_numbers<[0], [0], [1], [1], [0, 1, 1, 1], [], []>} : vector<8x32xf32>, vector<8x4xf32>, vector<32x4xf32> -> vector<32x4xf32>
    %333 = arith.addf %309, %332 : vector<32x4xf32>
    %cst_164 = arith.constant -1.000000e+00 : f32
    %cst_165 = arith.constant 1.000000e+00 : f32
    %334 = vector.broadcast %cst_164 : f32 to vector<32x4xf32>
    %335 = arith.maximumf %334, %333 : vector<32x4xf32>
    %336 = vector.broadcast %cst_165 : f32 to vector<32x4xf32>
    %337 = arith.minimumf %336, %335 : vector<32x4xf32>
    %338 = arith.mulf %0, %331 : vector<8x32xf32>
    %339 = arith.addf %311, %338 : vector<8x32xf32>
    %340 = arith.mulf %1, %337 : vector<32x4xf32>
    %341 = arith.addf %313, %340 : vector<32x4xf32>
    %c12_i32 = arith.constant 12 : i32
    %342 = arith.index_cast %c12_i32 : i32 to index
    %c0_166 = arith.constant 0 : index
    %c0_167 = arith.constant 0 : index
    %343 = vector.load %arg0[%342, %c0_166, %c0_167] : memref<16x8x8xf32, #tpu.memory_space<vmem>>, vector<1x8x8xf32>
    %344 = vector.shape_cast %343 : vector<1x8x8xf32> to vector<8x8xf32>
    %cst_168 = arith.constant dense<0.000000e+00> : vector<8x32xf32>
    %345 = tpu.matmul %344, %339, %cst_168 {dimension_numbers = #tpu.dot_dimension_numbers<[1], [0], [0], [1], [0, 0, 1, 1], [], []>} : vector<8x8xf32>, vector<8x32xf32>, vector<8x32xf32> -> vector<8x32xf32>
    %cst_169 = arith.constant 0.000000e+00 : f32
    %346 = vector.broadcast %cst_169 : f32 to vector<8x32xf32>
    %347 = arith.maximumf %345, %346 : vector<8x32xf32>
    %cst_170 = arith.constant dense<0.000000e+00> : vector<8x4xf32>
    %348 = tpu.matmul %347, %341, %cst_170 {dimension_numbers = #tpu.dot_dimension_numbers<[1], [0], [0], [1], [0, 0, 1, 1], [], []>} : vector<8x32xf32>, vector<32x4xf32>, vector<8x4xf32> -> vector<8x4xf32>
    %349 = math.tanh %348 : vector<8x4xf32>
    %350 = arith.index_cast %c12_i32 : i32 to index
    %c0_171 = arith.constant 0 : index
    %c0_172 = arith.constant 0 : index
    %351 = vector.load %arg7[%350, %c0_171, %c0_172] : memref<16x8x4xf32, #tpu.memory_space<vmem>>, vector<1x8x4xf32>
    %352 = vector.shape_cast %351 : vector<1x8x4xf32> to vector<8x4xf32>
    %353 = vector.shape_cast %349 : vector<8x4xf32> to vector<1x8x4xf32>
    tpu.vector_store %arg7[%350, %c0_171, %c0_172], %353 {strides = array<i32>} : memref<16x8x4xf32, #tpu.memory_space<vmem>>, vector<1x8x4xf32>,
    %cst_173 = arith.constant dense<0.000000e+00> : vector<8x32xf32>
    %354 = tpu.matmul %344, %345, %cst_173 {dimension_numbers = #tpu.dot_dimension_numbers<[0], [0], [1], [1], [0, 1, 1, 1], [], []>} : vector<8x8xf32>, vector<8x32xf32>, vector<8x32xf32> -> vector<8x32xf32>
    %355 = arith.addf %331, %354 : vector<8x32xf32>
    %cst_174 = arith.constant -1.000000e+00 : f32
    %cst_175 = arith.constant 1.000000e+00 : f32
    %356 = vector.broadcast %cst_174 : f32 to vector<8x32xf32>
    %357 = arith.maximumf %356, %355 : vector<8x32xf32>
    %358 = vector.broadcast %cst_175 : f32 to vector<8x32xf32>
    %359 = arith.minimumf %358, %357 : vector<8x32xf32>
    %cst_176 = arith.constant dense<0.000000e+00> : vector<32x4xf32>
    %360 = tpu.matmul %345, %348, %cst_176 {dimension_numbers = #tpu.dot_dimension_numbers<[0], [0], [1], [1], [0, 1, 1, 1], [], []>} : vector<8x32xf32>, vector<8x4xf32>, vector<32x4xf32> -> vector<32x4xf32>
    %361 = arith.addf %337, %360 : vector<32x4xf32>
    %cst_177 = arith.constant -1.000000e+00 : f32
    %cst_178 = arith.constant 1.000000e+00 : f32
    %362 = vector.broadcast %cst_177 : f32 to vector<32x4xf32>
    %363 = arith.maximumf %362, %361 : vector<32x4xf32>
    %364 = vector.broadcast %cst_178 : f32 to vector<32x4xf32>
    %365 = arith.minimumf %364, %363 : vector<32x4xf32>
    %366 = arith.mulf %0, %359 : vector<8x32xf32>
    %367 = arith.addf %339, %366 : vector<8x32xf32>
    %368 = arith.mulf %1, %365 : vector<32x4xf32>
    %369 = arith.addf %341, %368 : vector<32x4xf32>
    %c13_i32 = arith.constant 13 : i32
    %370 = arith.index_cast %c13_i32 : i32 to index
    %c0_179 = arith.constant 0 : index
    %c0_180 = arith.constant 0 : index
    %371 = vector.load %arg0[%370, %c0_179, %c0_180] : memref<16x8x8xf32, #tpu.memory_space<vmem>>, vector<1x8x8xf32>
    %372 = vector.shape_cast %371 : vector<1x8x8xf32> to vector<8x8xf32>
    %cst_181 = arith.constant dense<0.000000e+00> : vector<8x32xf32>
    %373 = tpu.matmul %372, %367, %cst_181 {dimension_numbers = #tpu.dot_dimension_numbers<[1], [0], [0], [1], [0, 0, 1, 1], [], []>} : vector<8x8xf32>, vector<8x32xf32>, vector<8x32xf32> -> vector<8x32xf32>
    %cst_182 = arith.constant 0.000000e+00 : f32
    %374 = vector.broadcast %cst_182 : f32 to vector<8x32xf32>
    %375 = arith.maximumf %373, %374 : vector<8x32xf32>
    %cst_183 = arith.constant dense<0.000000e+00> : vector<8x4xf32>
    %376 = tpu.matmul %375, %369, %cst_183 {dimension_numbers = #tpu.dot_dimension_numbers<[1], [0], [0], [1], [0, 0, 1, 1], [], []>} : vector<8x32xf32>, vector<32x4xf32>, vector<8x4xf32> -> vector<8x4xf32>
    %377 = math.tanh %376 : vector<8x4xf32>
    %378 = arith.index_cast %c13_i32 : i32 to index
    %c0_184 = arith.constant 0 : index
    %c0_185 = arith.constant 0 : index
    %379 = vector.load %arg7[%378, %c0_184, %c0_185] : memref<16x8x4xf32, #tpu.memory_space<vmem>>, vector<1x8x4xf32>
    %380 = vector.shape_cast %379 : vector<1x8x4xf32> to vector<8x4xf32>
    %381 = vector.shape_cast %377 : vector<8x4xf32> to vector<1x8x4xf32>
    tpu.vector_store %arg7[%378, %c0_184, %c0_185], %381 {strides = array<i32>} : memref<16x8x4xf32, #tpu.memory_space<vmem>>, vector<1x8x4xf32>,
    %cst_186 = arith.constant dense<0.000000e+00> : vector<8x32xf32>
    %382 = tpu.matmul %372, %373, %cst_186 {dimension_numbers = #tpu.dot_dimension_numbers<[0], [0], [1], [1], [0, 1, 1, 1], [], []>} : vector<8x8xf32>, vector<8x32xf32>, vector<8x32xf32> -> vector<8x32xf32>
    %383 = arith.addf %359, %382 : vector<8x32xf32>
    %cst_187 = arith.constant -1.000000e+00 : f32
    %cst_188 = arith.constant 1.000000e+00 : f32
    %384 = vector.broadcast %cst_187 : f32 to vector<8x32xf32>
    %385 = arith.maximumf %384, %383 : vector<8x32xf32>
    %386 = vector.broadcast %cst_188 : f32 to vector<8x32xf32>
    %387 = arith.minimumf %386, %385 : vector<8x32xf32>
    %cst_189 = arith.constant dense<0.000000e+00> : vector<32x4xf32>
    %388 = tpu.matmul %373, %376, %cst_189 {dimension_numbers = #tpu.dot_dimension_numbers<[0], [0], [1], [1], [0, 1, 1, 1], [], []>} : vector<8x32xf32>, vector<8x4xf32>, vector<32x4xf32> -> vector<32x4xf32>
    %389 = arith.addf %365, %388 : vector<32x4xf32>
    %cst_190 = arith.constant -1.000000e+00 : f32
    %cst_191 = arith.constant 1.000000e+00 : f32
    %390 = vector.broadcast %cst_190 : f32 to vector<32x4xf32>
    %391 = arith.maximumf %390, %389 : vector<32x4xf32>
    %392 = vector.broadcast %cst_191 : f32 to vector<32x4xf32>
    %393 = arith.minimumf %392, %391 : vector<32x4xf32>
    %394 = arith.mulf %0, %387 : vector<8x32xf32>
    %395 = arith.addf %367, %394 : vector<8x32xf32>
    %396 = arith.mulf %1, %393 : vector<32x4xf32>
    %397 = arith.addf %369, %396 : vector<32x4xf32>
    %c14_i32 = arith.constant 14 : i32
    %398 = arith.index_cast %c14_i32 : i32 to index
    %c0_192 = arith.constant 0 : index
    %c0_193 = arith.constant 0 : index
    %399 = vector.load %arg0[%398, %c0_192, %c0_193] : memref<16x8x8xf32, #tpu.memory_space<vmem>>, vector<1x8x8xf32>
    %400 = vector.shape_cast %399 : vector<1x8x8xf32> to vector<8x8xf32>
    %cst_194 = arith.constant dense<0.000000e+00> : vector<8x32xf32>
    %401 = tpu.matmul %400, %395, %cst_194 {dimension_numbers = #tpu.dot_dimension_numbers<[1], [0], [0], [1], [0, 0, 1, 1], [], []>} : vector<8x8xf32>, vector<8x32xf32>, vector<8x32xf32> -> vector<8x32xf32>
    %cst_195 = arith.constant 0.000000e+00 : f32
    %402 = vector.broadcast %cst_195 : f32 to vector<8x32xf32>
    %403 = arith.maximumf %401, %402 : vector<8x32xf32>
    %cst_196 = arith.constant dense<0.000000e+00> : vector<8x4xf32>
    %404 = tpu.matmul %403, %397, %cst_196 {dimension_numbers = #tpu.dot_dimension_numbers<[1], [0], [0], [1], [0, 0, 1, 1], [], []>} : vector<8x32xf32>, vector<32x4xf32>, vector<8x4xf32> -> vector<8x4xf32>
    %405 = math.tanh %404 : vector<8x4xf32>
    %406 = arith.index_cast %c14_i32 : i32 to index
    %c0_197 = arith.constant 0 : index
    %c0_198 = arith.constant 0 : index
    %407 = vector.load %arg7[%406, %c0_197, %c0_198] : memref<16x8x4xf32, #tpu.memory_space<vmem>>, vector<1x8x4xf32>
    %408 = vector.shape_cast %407 : vector<1x8x4xf32> to vector<8x4xf32>
    %409 = vector.shape_cast %405 : vector<8x4xf32> to vector<1x8x4xf32>
    tpu.vector_store %arg7[%406, %c0_197, %c0_198], %409 {strides = array<i32>} : memref<16x8x4xf32, #tpu.memory_space<vmem>>, vector<1x8x4xf32>,
    %cst_199 = arith.constant dense<0.000000e+00> : vector<8x32xf32>
    %410 = tpu.matmul %400, %401, %cst_199 {dimension_numbers = #tpu.dot_dimension_numbers<[0], [0], [1], [1], [0, 1, 1, 1], [], []>} : vector<8x8xf32>, vector<8x32xf32>, vector<8x32xf32> -> vector<8x32xf32>
    %411 = arith.addf %387, %410 : vector<8x32xf32>
    %cst_200 = arith.constant -1.000000e+00 : f32
    %cst_201 = arith.constant 1.000000e+00 : f32
    %412 = vector.broadcast %cst_200 : f32 to vector<8x32xf32>
    %413 = arith.maximumf %412, %411 : vector<8x32xf32>
    %414 = vector.broadcast %cst_201 : f32 to vector<8x32xf32>
    %415 = arith.minimumf %414, %413 : vector<8x32xf32>
    %cst_202 = arith.constant dense<0.000000e+00> : vector<32x4xf32>
    %416 = tpu.matmul %401, %404, %cst_202 {dimension_numbers = #tpu.dot_dimension_numbers<[0], [0], [1], [1], [0, 1, 1, 1], [], []>} : vector<8x32xf32>, vector<8x4xf32>, vector<32x4xf32> -> vector<32x4xf32>
    %417 = arith.addf %393, %416 : vector<32x4xf32>
    %cst_203 = arith.constant -1.000000e+00 : f32
    %cst_204 = arith.constant 1.000000e+00 : f32
    %418 = vector.broadcast %cst_203 : f32 to vector<32x4xf32>
    %419 = arith.maximumf %418, %417 : vector<32x4xf32>
    %420 = vector.broadcast %cst_204 : f32 to vector<32x4xf32>
    %421 = arith.minimumf %420, %419 : vector<32x4xf32>
    %422 = arith.mulf %0, %415 : vector<8x32xf32>
    %423 = arith.addf %395, %422 : vector<8x32xf32>
    %424 = arith.mulf %1, %421 : vector<32x4xf32>
    %425 = arith.addf %397, %424 : vector<32x4xf32>
    %c15_i32 = arith.constant 15 : i32
    %426 = arith.index_cast %c15_i32 : i32 to index
    %c0_205 = arith.constant 0 : index
    %c0_206 = arith.constant 0 : index
    %427 = vector.load %arg0[%426, %c0_205, %c0_206] : memref<16x8x8xf32, #tpu.memory_space<vmem>>, vector<1x8x8xf32>
    %428 = vector.shape_cast %427 : vector<1x8x8xf32> to vector<8x8xf32>
    %cst_207 = arith.constant dense<0.000000e+00> : vector<8x32xf32>
    %429 = tpu.matmul %428, %423, %cst_207 {dimension_numbers = #tpu.dot_dimension_numbers<[1], [0], [0], [1], [0, 0, 1, 1], [], []>} : vector<8x8xf32>, vector<8x32xf32>, vector<8x32xf32> -> vector<8x32xf32>
    %cst_208 = arith.constant 0.000000e+00 : f32
    %430 = vector.broadcast %cst_208 : f32 to vector<8x32xf32>
    %431 = arith.maximumf %429, %430 : vector<8x32xf32>
    %cst_209 = arith.constant dense<0.000000e+00> : vector<8x4xf32>
    %432 = tpu.matmul %431, %425, %cst_209 {dimension_numbers = #tpu.dot_dimension_numbers<[1], [0], [0], [1], [0, 0, 1, 1], [], []>} : vector<8x32xf32>, vector<32x4xf32>, vector<8x4xf32> -> vector<8x4xf32>
    %433 = math.tanh %432 : vector<8x4xf32>
    %434 = arith.index_cast %c15_i32 : i32 to index
    %c0_210 = arith.constant 0 : index
    %c0_211 = arith.constant 0 : index
    %435 = vector.load %arg7[%434, %c0_210, %c0_211] : memref<16x8x4xf32, #tpu.memory_space<vmem>>, vector<1x8x4xf32>
    %436 = vector.shape_cast %435 : vector<1x8x4xf32> to vector<8x4xf32>
    %437 = vector.shape_cast %433 : vector<8x4xf32> to vector<1x8x4xf32>
    tpu.vector_store %arg7[%434, %c0_210, %c0_211], %437 {strides = array<i32>} : memref<16x8x4xf32, #tpu.memory_space<vmem>>, vector<1x8x4xf32>,
    %cst_212 = arith.constant dense<0.000000e+00> : vector<8x32xf32>
    %438 = tpu.matmul %428, %429, %cst_212 {dimension_numbers = #tpu.dot_dimension_numbers<[0], [0], [1], [1], [0, 1, 1, 1], [], []>} : vector<8x8xf32>, vector<8x32xf32>, vector<8x32xf32> -> vector<8x32xf32>
    %439 = arith.addf %415, %438 : vector<8x32xf32>
    %cst_213 = arith.constant -1.000000e+00 : f32
    %cst_214 = arith.constant 1.000000e+00 : f32
    %440 = vector.broadcast %cst_213 : f32 to vector<8x32xf32>
    %441 = arith.maximumf %440, %439 : vector<8x32xf32>
    %442 = vector.broadcast %cst_214 : f32 to vector<8x32xf32>
    %443 = arith.minimumf %442, %441 : vector<8x32xf32>
    %cst_215 = arith.constant dense<0.000000e+00> : vector<32x4xf32>
    %444 = tpu.matmul %429, %432, %cst_215 {dimension_numbers = #tpu.dot_dimension_numbers<[0], [0], [1], [1], [0, 1, 1, 1], [], []>} : vector<8x32xf32>, vector<8x4xf32>, vector<32x4xf32> -> vector<32x4xf32>
    %445 = arith.addf %421, %444 : vector<32x4xf32>
    %cst_216 = arith.constant -1.000000e+00 : f32
    %cst_217 = arith.constant 1.000000e+00 : f32
    %446 = vector.broadcast %cst_216 : f32 to vector<32x4xf32>
    %447 = arith.maximumf %446, %445 : vector<32x4xf32>
    %448 = vector.broadcast %cst_217 : f32 to vector<32x4xf32>
    %449 = arith.minimumf %448, %447 : vector<32x4xf32>
    %450 = arith.mulf %0, %443 : vector<8x32xf32>
    %451 = arith.addf %423, %450 : vector<8x32xf32>
    %452 = arith.mulf %1, %449 : vector<32x4xf32>
    %453 = arith.addf %425, %452 : vector<32x4xf32>
    %c16_i32 = arith.constant 16 : i32
    %c0_218 = arith.constant 0 : index
    %c0_219 = arith.constant 0 : index
    %454 = vector.load %arg8[%c0_218, %c0_219] : memref<8x32xf32, #tpu.memory_space<vmem>>, vector<8x32xf32>
    tpu.vector_store %arg8[%c0_218, %c0_219], %451 {strides = array<i32>} : memref<8x32xf32, #tpu.memory_space<vmem>>, vector<8x32xf32>,
    %c0_220 = arith.constant 0 : index
    %c0_221 = arith.constant 0 : index
    %455 = vector.load %arg9[%c0_220, %c0_221] : memref<32x4xf32, #tpu.memory_space<vmem>>, vector<32x4xf32>
    tpu.vector_store %arg9[%c0_220, %c0_221], %453 {strides = array<i32>} : memref<32x4xf32, #tpu.memory_space<vmem>>, vector<32x4xf32>,
    %c0_222 = arith.constant 0 : index
    %c0_223 = arith.constant 0 : index
    %456 = vector.load %arg10[%c0_222, %c0_223] : memref<8x32xf32, #tpu.memory_space<vmem>>, vector<8x32xf32>
    tpu.vector_store %arg10[%c0_222, %c0_223], %443 {strides = array<i32>} : memref<8x32xf32, #tpu.memory_space<vmem>>, vector<8x32xf32>,
    %c0_224 = arith.constant 0 : index
    %c0_225 = arith.constant 0 : index
    %457 = vector.load %arg11[%c0_224, %c0_225] : memref<32x4xf32, #tpu.memory_space<vmem>>, vector<32x4xf32>
    tpu.vector_store %arg11[%c0_224, %c0_225], %449 {strides = array<i32>} : memref<32x4xf32, #tpu.memory_space<vmem>>, vector<32x4xf32>,
    return
  }
}

</mosaic_0001>

<llo_original>
// kernel: hebbian_mlp_rollout.1
$region0: #{hebbian_mlp_rollout.1}
  #allocation0 [shape = 'u32[]', space=smem, size = 0x4, offset = 0x4, fixed_abs, tag = 'smem constant byte address 0x4 - core index']
  #allocation1 [shape = 'u32[72,128]{1,0:T(1,128)}', space=vmem, size = 0x9000, scoped, tag = 'internal scratch']
  %s0 = inlined_call_operand.vmem [shape: f32[16,8,8], index: 0, kind: input, shape index: {}]
  %s1 = inlined_call_operand.vmem [shape: f32[8,32], index: 1, kind: input, shape index: {}, may-alias: {1,8}]
  %s2 = inlined_call_operand.vmem [shape: f32[32,4], index: 2, kind: input, shape index: {}, may-alias: {2,9}]
  %s3 = inlined_call_operand.vmem [shape: f32[8,32], index: 3, kind: input, shape index: {}]
  %s4 = inlined_call_operand.vmem [shape: f32[32,4], index: 4, kind: input, shape index: {}]
  %s5 = inlined_call_operand.vmem [shape: f32[8,32], index: 5, kind: input, shape index: {}]
  %s6 = inlined_call_operand.vmem [shape: f32[32,4], index: 6, kind: input, shape index: {}]
  %s7 = inlined_call_operand.vmem [shape: f32[16,8,4], index: 7, kind: output, shape index: {0}]
  %s8 = inlined_call_operand.vmem [shape: f32[8,32], index: 8, kind: output, shape index: {1}, may-alias: {1,8}]
  %s9 = inlined_call_operand.vmem [shape: f32[32,4], index: 9, kind: output, shape index: {2}, may-alias: {2,9}]
  %s10 = inlined_call_operand.hbm [shape: f32[8,32], index: 10, kind: output, shape index: {3}]
  %s11 = inlined_call_operand.vmem [shape: f32[32,4], index: 11, kind: output, shape index: {4}]
  %12 = xla_tuple %s7, %s8, %s9, %s10, %s11
  %s13 = sld [smem:[#allocation0]]
  $region70: #{hebbian_mlp_rollout.1} parent=0
    _
  %s15 = ssub.s32 1, %s13
  %s16 = scalar_select 0, %s15, %s13
  $region1: #{hebbian_mlp_rollout.1} parent=0
    #allocation2 [shape = 'u8[4096]{0}', space=vmem, size = 0x1000, scoped, tag = 'output window, operand 3, single buffered']
    #allocation3 [shape = 's32[1]{0}', space=sflag, size = 0x4, scoped, tag = 'scoped memory for hebbian_mlp_rollout.1']
    %17 = vsyncpa [#allocation3], 0
    // Predicated region
    $region2: #{hebbian_mlp_rollout.1} parent=1 // pred_check
      _
    $region3: #{hebbian_mlp_rollout.1} parent=1 // pred_check_branch
      %19 = sbr.rel (0) target = $region5
    $region4: #{hebbian_mlp_rollout.1} parent=1 // pred_region
      _
    $region5: #{hebbian_mlp_rollout.1} parent=1 // pred_fallthru
      _
    // Predicated region
    $region6: #{hebbian_mlp_rollout.1} parent=1 // pred_check
      _
    $region7: #{hebbian_mlp_rollout.1} parent=1 // pred_check_branch
      %21 = sbr.rel (0) target = $region9
    $region8: #{hebbian_mlp_rollout.1} parent=1 // pred_region
      _
    $region9: #{hebbian_mlp_rollout.1} parent=1 // pred_fallthru
      _
    // Predicated region
    $region10: #{hebbian_mlp_rollout.1} parent=1 // pred_check
      _
    $region11: #{hebbian_mlp_rollout.1} parent=1 // pred_check_branch
      %23 = sbr.rel (0) target = $region13
    $region12: #{hebbian_mlp_rollout.1} parent=1 // pred_region
      _
    $region13: #{hebbian_mlp_rollout.1} parent=1 // pred_fallthru
      _
    // Predicated region
    $region14: #{hebbian_mlp_rollout.1} parent=1 // pred_check
      _
    $region15: #{hebbian_mlp_rollout.1} parent=1 // pred_check_branch
      %25 = sbr.rel (0) target = $region17
    $region16: #{hebbian_mlp_rollout.1} parent=1 // pred_region
      _
    $region17: #{hebbian_mlp_rollout.1} parent=1 // pred_fallthru
      _
    // Predicated region
    $region18: #{hebbian_mlp_rollout.1} parent=1 // pred_check
      _
    $region19: #{hebbian_mlp_rollout.1} parent=1 // pred_check_branch
      %27 = sbr.rel (0) target = $region21
    $region20: #{hebbian_mlp_rollout.1} parent=1 // pred_region
      _
    $region21: #{hebbian_mlp_rollout.1} parent=1 // pred_fallthru
      _
    // Predicated region
    $region22: #{hebbian_mlp_rollout.1} parent=1 // pred_check
      _
    $region23: #{hebbian_mlp_rollout.1} parent=1 // pred_check_branch
      %29 = sbr.rel (0) target = $region25
    $region24: #{hebbian_mlp_rollout.1} parent=1 // pred_region
      _
    $region25: #{hebbian_mlp_rollout.1} parent=1 // pred_fallthru
      _
    // Predicated region
    $region26: #{hebbian_mlp_rollout.1} parent=1 // pred_check
      _
    $region27: #{hebbian_mlp_rollout.1} parent=1 // pred_check_branch
      %31 = sbr.rel (0) target = $region29
    $region28: #{hebbian_mlp_rollout.1} parent=1 // pred_region
      _
    $region29: #{hebbian_mlp_rollout.1} parent=1 // pred_fallthru
      _
    %v32 = vld [vmem:[%s3] sm:$0xff]
    %v33 = vld [vmem:[%s4] sm:$0xff]
    %v34 = vld [vmem:[%s4 + $0x8] sm:$0xff]
    %v35 = vld [vmem:[%s4 + $0x10] sm:$0xff]
    %v36 = vld [vmem:[%s4 + $0x18] sm:$0xff]
    %v37 = vld [vmem:[%s1] sm:$0xff]
    %v38 = vld [vmem:[%s2] sm:$0xff]
    %v39 = vld [vmem:[%s2 + $0x8] sm:$0xff]
    %v40 = vld [vmem:[%s2 + $0x10] sm:$0xff]
    %v41 = vld [vmem:[%s2 + $0x18] sm:$0xff]
    %v42 = vld [vmem:[%s5] sm:$0xff]
    %v43 = vld [vmem:[%s6] sm:$0xff]
    %v44 = vld [vmem:[%s6 + $0x8] sm:$0xff]
    %v45 = vld [vmem:[%s6 + $0x10] sm:$0xff]
    %v46 = vld [vmem:[%s6 + $0x18] sm:$0xff]
    %v47 = vld [vmem:[%s0] sm:$0xff]
    %vm48 = vcmask 64512
    %v50 = vsel %vm48, %v47, 0
    %52 = vmatpush.msra.mxu0 0.0
    %53 = vmatpush.msra.mxu0 0.0
    %54 = vmatpush.msra.mxu0 0.0
    %55 = vmatpush.msra.mxu0 0.0
    %56 = vmatpush.msra.mxu0 0.0
    %57 = vmatpush.msra.mxu0 0.0
    %58 = vmatpush.msra.mxu0 0.0
    %59 = vmatpush.msra.mxu0 0.0
    %60 = vmatpush.msra.mxu0 0.0
    %61 = vmatpush.msra.mxu0 0.0
    %62 = vmatpush.msra.mxu0 0.0
    %63 = vmatpush.msra.mxu0 0.0
    %64 = vmatpush.msra.mxu0 0.0
    %65 = vmatpush.msra.mxu0 0.0
    %66 = vmatpush.msra.mxu0 0.0
    %67 = vmatpush.msra.mxu0 %v37
    %68 = vmatmul.f32.gmra.mxu0 %v50
    %v69 = vpop.f32.mrf.mxu0
    %v70 = vadd.f32 0.0, %v69
    %71 = vdwg.mxu0
    %v72 = vmax.f32 %v70, 0.0
    %vm73 = vcmask 261120
    %v75 = vsel %vm73, %v72, 0
    %77 = vmatpush.msra.mxu0 0.0
    %78 = vmatpush.msra.mxu0 0.0
    %79 = vmatpush.msra.mxu0 0.0
    %80 = vmatpush.msra.mxu0 0.0
    %81 = vmatpush.msra.mxu0 0.0
    %82 = vmatpush.msra.mxu0 0.0
    %83 = vmatpush.msra.mxu0 0.0
    %84 = vmatpush.msra.mxu0 0.0
    %85 = vmatpush.msra.mxu0 0.0
    %86 = vmatpush.msra.mxu0 0.0
    %87 = vmatpush.msra.mxu0 0.0
    %88 = vmatpush.msra.mxu0 0.0
    %89 = vmatpush.msra.mxu0 %v41
    %90 = vmatpush.msra.mxu0 %v40
    %91 = vmatpush.msra.mxu0 %v39
    %92 = vmatpush.msra.mxu0 %v38
    %93 = vmatmul.f32.gmra.mxu0 %v75
    %v94 = vpop.f32.mrf.mxu0
    %v95 = vadd.f32 0.0, %v94
    %96 = vdwg.mxu0
    %v97 = vtanh.pop %v95
    %vm98 = vcmask 31744
    %99 = vst.msk [vmem:[%s7] sm:$0xff] %vm98, %v97
    %100 = vxpose.xlu0.b32.start [1/16] %v47, 128
    %101 = vxpose.xlu0.b32.cont [2/16] 0.0, 128
    %102 = vxpose.xlu0.b32.cont [3/16] 0.0, 128
    %103 = vxpose.xlu0.b32.cont [4/16] 0.0, 128
    %104 = vxpose.xlu0.b32.cont [5/16] 0.0, 128
    %105 = vxpose.xlu0.b32.cont [6/16] 0.0, 128
    %106 = vxpose.xlu0.b32.cont [7/16] 0.0, 128
    %107 = vxpose.xlu0.b32.cont [8/16] 0.0, 128
    %108 = vxpose.xlu0.b32.cont [9/16] 0.0, 128
    %109 = vxpose.xlu0.b32.cont [10/16] 0.0, 128
    %110 = vxpose.xlu0.b32.cont [11/16] 0.0, 128
    %111 = vxpose.xlu0.b32.cont [12/16] 0.0, 128
    %112 = vxpose.xlu0.b32.cont [13/16] 0.0, 128
    %113 = vxpose.xlu0.b32.cont [14/16] 0.0, 128
    %114 = vxpose.xlu0.b32.cont [15/16] 0.0, 128
    %115 = vxpose.xlu0.b32.end [16/16] 0.0, 128
    %v116 = vpop.trf.xlu0
    %v117 = vpop.trf.xlu0
    %v118 = vpop.trf.xlu0
    %v119 = vpop.trf.xlu0
    %v120 = vpop.trf.xlu0
    %v121 = vpop.trf.xlu0
    %v122 = vpop.trf.xlu0
    %v123 = vpop.trf.xlu0
    %v124 = vpop.trf.xlu0
    %v125 = vpop.trf.xlu0
    %v126 = vpop.trf.xlu0
    %v127 = vpop.trf.xlu0
    %v128 = vpop.trf.xlu0
    %v129 = vpop.trf.xlu0
    %v130 = vpop.trf.xlu0
    %v131 = vpop.trf.xlu0
    %v133 = vsel %vm48, %v116, 0
    %135 = vmatpush.msra.mxu0 0.0
    %136 = vmatpush.msra.mxu0 0.0
    %137 = vmatpush.msra.mxu0 0.0
    %138 = vmatpush.msra.mxu0 0.0
    %139 = vmatpush.msra.mxu0 0.0
    %140 = vmatpush.msra.mxu0 0.0
    %141 = vmatpush.msra.mxu0 0.0
    %142 = vmatpush.msra.mxu0 0.0
    %143 = vmatpush.msra.mxu0 0.0
    %144 = vmatpush.msra.mxu0 0.0
    %145 = vmatpush.msra.mxu0 0.0
    %146 = vmatpush.msra.mxu0 0.0
    %147 = vmatpush.msra.mxu0 0.0
    %148 = vmatpush.msra.mxu0 0.0
    %149 = vmatpush.msra.mxu0 0.0
    %150 = vmatpush.msra.mxu0 %v70
    %151 = vmatmul.f32.gmra.mxu0 %v133
    %v152 = vpop.f32.mrf.mxu0
    %v153 = vadd.f32 0.0, %v152
    %154 = vdwg.mxu0
    %v155 = vadd.f32 %v42, %v153
    %v156 = vmax.f32 %v155, -1.0
    %v157 = vmin.f32 %v156, 1.0
    %158 = vxpose.xlu0.b32.start [1/16] %v70, 128
    %159 = vxpose.xlu0.b32.cont [2/16] 0.0, 128
    %160 = vxpose.xlu0.b32.cont [3/16] 0.0, 128
    %161 = vxpose.xlu0.b32.cont [4/16] 0.0, 128
    %162 = vxpose.xlu0.b32.cont [5/16] 0.0, 128
    %163 = vxpose.xlu0.b32.cont [6/16] 0.0, 128
    %164 = vxpose.xlu0.b32.cont [7/16] 0.0, 128
    %165 = vxpose.xlu0.b32.cont [8/16] 0.0, 128
    %166 = vxpose.xlu0.b32.cont [9/16] 0.0, 128
    %167 = vxpose.xlu0.b32.cont [10/16] 0.0, 128
    %168 = vxpose.xlu0.b32.cont [11/16] 0.0, 128
    %169 = vxpose.xlu0.b32.cont [12/16] 0.0, 128
    %170 = vxpose.xlu0.b32.cont [13/16] 0.0, 128
    %171 = vxpose.xlu0.b32.cont [14/16] 0.0, 128
    %172 = vxpose.xlu0.b32.cont [15/16] 0.0, 128
    %173 = vxpose.xlu0.b32.end [16/16] 0.0, 128
    %v174 = vpop.trf.xlu0
    %v175 = vpop.trf.xlu0
    %v176 = vpop.trf.xlu0
    %v177 = vpop.trf.xlu0
    %v178 = vpop.trf.xlu0
    %v179 = vpop.trf.xlu0
    %v180 = vpop.trf.xlu0
    %v181 = vpop.trf.xlu0
    %v182 = vpop.trf.xlu0
    %v183 = vpop.trf.xlu0
    %v184 = vpop.trf.xlu0
    %v185 = vpop.trf.xlu0
    %v186 = vpop.trf.xlu0
    %v187 = vpop.trf.xlu0
    %v188 = vpop.trf.xlu0
    %v189 = vpop.trf.xlu0
    %v191 = vsel %vm48, %v174, 0
    %v194 = vsel %vm48, %v175, 0
    %v197 = vsel %vm48, %v176, 0
    %v200 = vsel %vm48, %v177, 0
    %202 = vmatpush.msra.mxu0 0.0
    %203 = vmatpush.msra.mxu0 0.0
    %204 = vmatpush.msra.mxu0 0.0
    %205 = vmatpush.msra.mxu0 0.0
    %206 = vmatpush.msra.mxu0 0.0
    %207 = vmatpush.msra.mxu0 0.0
    %208 = vmatpush.msra.mxu0 0.0
    %209 = vmatpush.msra.mxu0 0.0
    %210 = vmatpush.msra.mxu0 0.0
    %211 = vmatpush.msra.mxu0 0.0
    %212 = vmatpush.msra.mxu0 0.0
    %213 = vmatpush.msra.mxu0 0.0
    %214 = vmatpush.msra.mxu0 0.0
    %215 = vmatpush.msra.mxu0 0.0
    %216 = vmatpush.msra.mxu0 0.0
    %217 = vmatpush.msra.mxu0 %v95
    %218 = vmatmul.f32.gmra.mxu0 %v191
    %v219 = vpop.f32.mrf.mxu0
    %v220 = vadd.f32 0.0, %v219
    %221 = vmatmul.f32.gmra.mxu0 %v194
    %v222 = vpop.f32.mrf.mxu0
    %v223 = vadd.f32 0.0, %v222
    %224 = vmatmul.f32.gmra.mxu0 %v197
    %v225 = vpop.f32.mrf.mxu0
    %v226 = vadd.f32 0.0, %v225
    %227 = vmatmul.f32.gmra.mxu0 %v200
    %v228 = vpop.f32.mrf.mxu0
    %v229 = vadd.f32 0.0, %v228
    %230 = vdwg.mxu0
    %v231 = vadd.f32 %v43, %v220
    %v232 = vadd.f32 %v44, %v223
    %v233 = vadd.f32 %v45, %v226
    %v234 = vadd.f32 %v46, %v229
    %v235 = vmax.f32 %v231, -1.0
    %v236 = vmax.f32 %v232, -1.0
    %v237 = vmax.f32 %v233, -1.0
    %v238 = vmax.f32 %v234, -1.0
    %v239 = vmin.f32 %v235, 1.0
    %v240 = vmin.f32 %v236, 1.0
    %v241 = vmin.f32 %v237, 1.0
    %v242 = vmin.f32 %v238, 1.0
    %v243 = vmul.f32 %v32, %v157
    %v244 = vadd.f32 %v37, %v243
    %v245 = vmul.f32 %v33, %v239
    %v246 = vmul.f32 %v34, %v240
    %v247 = vmul.f32 %v35, %v241
    %v248 = vmul.f32 %v36, %v242
    %v249 = vadd.f32 %v38, %v245
    %v250 = vadd.f32 %v39, %v246
    %v251 = vadd.f32 %v40, %v247
    %v252 = vadd.f32 %v41, %v248
    %s253 = scalar_lea.vmem %s0, 8
    %v254 = vld [vmem:[%s253] sm:$0xff]
    %v256 = vsel %vm48, %v254, 0
    %258 = vmatpush.msra.mxu0 0.0
    %259 = vmatpush.msra.mxu0 0.0
    %260 = vmatpush.msra.mxu0 0.0
    %261 = vmatpush.msra.mxu0 0.0
    %262 = vmatpush.msra.mxu0 0.0
    %263 = vmatpush.msra.mxu0 0.0
    %264 = vmatpush.msra.mxu0 0.0
    %265 = vmatpush.msra.mxu0 0.0
    %266 = vmatpush.msra.mxu0 0.0
    %267 = vmatpush.msra.mxu0 0.0
    %268 = vmatpush.msra.mxu0 0.0
    %269 = vmatpush.msra.mxu0 0.0
    %270 = vmatpush.msra.mxu0 0.0
    %271 = vmatpush.msra.mxu0 0.0
    %272 = vmatpush.msra.mxu0 0.0
    %273 = vmatpush.msra.mxu0 %v244
    %274 = vmatmul.f32.gmra.mxu0 %v256
    %v275 = vpop.f32.mrf.mxu0
    %v276 = vadd.f32 0.0, %v275
    %277 = vdwg.mxu0
    %v278 = vmax.f32 %v276, 0.0
    %v280 = vsel %vm73, %v278, 0
    %282 = vmatpush.msra.mxu0 0.0
    %283 = vmatpush.msra.mxu0 0.0
    %284 = vmatpush.msra.mxu0 0.0
    %285 = vmatpush.msra.mxu0 0.0
    %286 = vmatpush.msra.mxu0 0.0
    %287 = vmatpush.msra.mxu0 0.0
    %288 = vmatpush.msra.mxu0 0.0
    %289 = vmatpush.msra.mxu0 0.0
    %290 = vmatpush.msra.mxu0 0.0
    %291 = vmatpush.msra.mxu0 0.0
    %292 = vmatpush.msra.mxu0 0.0
    %293 = vmatpush.msra.mxu0 0.0
    %294 = vmatpush.msra.mxu0 %v252
    %295 = vmatpush.msra.mxu0 %v251
    %296 = vmatpush.msra.mxu0 %v250
    %297 = vmatpush.msra.mxu0 %v249
    %298 = vmatmul.f32.gmra.mxu0 %v280
    %v299 = vpop.f32.mrf.mxu0
    %v300 = vadd.f32 0.0, %v299
    %301 = vdwg.mxu0
    %v302 = vtanh.pop %v300
    %s303 = scalar_lea.vmem %s7, 8
    %304 = vst.msk [vmem:[%s303] sm:$0xff] %vm98, %v302
    %305 = vxpose.xlu0.b32.start [1/16] %v254, 128
    %306 = vxpose.xlu0.b32.cont [2/16] 0.0, 128
    %307 = vxpose.xlu0.b32.cont [3/16] 0.0, 128
    %308 = vxpose.xlu0.b32.cont [4/16] 0.0, 128
    %309 = vxpose.xlu0.b32.cont [5/16] 0.0, 128
    %310 = vxpose.xlu0.b32.cont [6/16] 0.0, 128
    %311 = vxpose.xlu0.b32.cont [7/16] 0.0, 128
    %312 = vxpose.xlu0.b32.cont [8/16] 0.0, 128
    %313 = vxpose.xlu0.b32.cont [9/16] 0.0, 128
    %314 = vxpose.xlu0.b32.cont [10/16] 0.0, 128
    %315 = vxpose.xlu0.b32.cont [11/16] 0.0, 128
    %316 = vxpose.xlu0.b32.cont [12/16] 0.0, 128
    %317 = vxpose.xlu0.b32.cont [13/16] 0.0, 128
    %318 = vxpose.xlu0.b32.cont [14/16] 0.0, 128
    %319 = vxpose.xlu0.b32.cont [15/16] 0.0, 128
    %320 = vxpose.xlu0.b32.end [16/16] 0.0, 128
    %v321 = vpop.trf.xlu0
    %v322 = vpop.trf.xlu0
    %v323 = vpop.trf.xlu0
    %v324 = vpop.trf.xlu0
    %v325 = vpop.trf.xlu0
    %v326 = vpop.trf.xlu0
    %v327 = vpop.trf.xlu0
    %v328 = vpop.trf.xlu0
    %v329 = vpop.trf.xlu0
    %v330 = vpop.trf.xlu0
    %v331 = vpop.trf.xlu0
    %v332 = vpop.trf.xlu0
    %v333 = vpop.trf.xlu0
    %v334 = vpop.trf.xlu0
    %v335 = vpop.trf.xlu0
    %v336 = vpop.trf.xlu0
    %v338 = vsel %vm48, %v321, 0
    %340 = vmatpush.msra.mxu0 0.0
    %341 = vmatpush.msra.mxu0 0.0
    %342 = vmatpush.msra.mxu0 0.0
    %343 = vmatpush.msra.mxu0 0.0
    %344 = vmatpush.msra.mxu0 0.0
    %345 = vmatpush.msra.mxu0 0.0
    %346 = vmatpush.msra.mxu0 0.0
    %347 = vmatpush.msra.mxu0 0.0
    %348 = vmatpush.msra.mxu0 0.0
    %349 = vmatpush.msra.mxu0 0.0
    %350 = vmatpush.msra.mxu0 0.0
    %351 = vmatpush.msra.mxu0 0.0
    %352 = vmatpush.msra.mxu0 0.0
    %353 = vmatpush.msra.mxu0 0.0
    %354 = vmatpush.msra.mxu0 0.0
    %355 = vmatpush.msra.mxu0 %v276
    %356 = vmatmul.f32.gmra.mxu0 %v338
    %v357 = vpop.f32.mrf.mxu0
    %v358 = vadd.f32 0.0, %v357
    %359 = vdwg.mxu0
    %v360 = vadd.f32 %v157, %v358
    %v361 = vmax.f32 %v360, -1.0
    %v362 = vmin.f32 %v361, 1.0
    %363 = vxpose.xlu0.b32.start [1/16] %v276, 128
    %364 = vxpose.xlu0.b32.cont [2/16] 0.0, 128
    %365 = vxpose.xlu0.b32.cont [3/16] 0.0, 128
    %366 = vxpose.xlu0.b32.cont [4/16] 0.0, 128
    %367 = vxpose.xlu0.b32.cont [5/16] 0.0, 128
    %368 = vxpose.xlu0.b32.cont [6/16] 0.0, 128
    %369 = vxpose.xlu0.b32.cont [7/16] 0.0, 128
    %370 = vxpose.xlu0.b32.cont [8/16] 0.0, 128
    %371 = vxpose.xlu0.b32.cont [9/16] 0.0, 128
    %372 = vxpose.xlu0.b32.cont [10/16] 0.0, 128
    %373 = vxpose.xlu0.b32.cont [11/16] 0.0, 128
    %374 = vxpose.xlu0.b32.cont [12/16] 0.0, 128
    %375 = vxpose.xlu0.b32.cont [13/16] 0.0, 128
    %376 = vxpose.xlu0.b32.cont [14/16] 0.0, 128
    %377 = vxpose.xlu0.b32.cont [15/16] 0.0, 128
    %378 = vxpose.xlu0.b32.end [16/16] 0.0, 128
    %v379 = vpop.trf.xlu0
    %v380 = vpop.trf.xlu0
    %v381 = vpop.trf.xlu0
    %v382 = vpop.trf.xlu0
    %v383 = vpop.trf.xlu0
    %v384 = vpop.trf.xlu0
    %v385 = vpop.trf.xlu0
    %v386 = vpop.trf.xlu0
    %v387 = vpop.trf.xlu0
    %v388 = vpop.trf.xlu0
    %v389 = vpop.trf.xlu0
    %v390 = vpop.trf.xlu0
    %v391 = vpop.trf.xlu0
    %v392 = vpop.trf.xlu0
    %v393 = vpop.trf.xlu0
    %v394 = vpop.trf.xlu0
    %v396 = vsel %vm48, %v379, 0
    %v399 = vsel %vm48, %v380, 0
    %v402 = vsel %vm48, %v381, 0
    %v405 = vsel %vm48, %v382, 0
    %407 = vmatpush.msra.mxu0 0.0
    %408 = vmatpush.msra.mxu0 0.0
    %409 = vmatpush.msra.mxu0 0.0
    %410 = vmatpush.msra.mxu0 0.0
    %411 = vmatpush.msra.mxu0 0.0
    %412 = vmatpush.msra.mxu0 0.0
    %413 = vmatpush.msra.mxu0 0.0
    %414 = vmatpush.msra.mxu0 0.0
    %415 = vmatpush.msra.mxu0 0.0
    %416 = vmatpush.msra.mxu0 0.0
    %417 = vmatpush.msra.mxu0 0.0
    %418 = vmatpush.msra.mxu0 0.0
    %419 = vmatpush.msra.mxu0 0.0
    %420 = vmatpush.msra.mxu0 0.0
    %421 = vmatpush.msra.mxu0 0.0
    %422 = vmatpush.msra.mxu0 %v300
    %423 = vmatmul.f32.gmra.mxu0 %v396
    %v424 = vpop.f32.mrf.mxu0
    %v425 = vadd.f32 0.0, %v424
    %426 = vmatmul.f32.gmra.mxu0 %v399
    %v427 = vpop.f32.mrf.mxu0
    %v428 = vadd.f32 0.0, %v427
    %429 = vmatmul.f32.gmra.mxu0 %v402
    %v430 = vpop.f32.mrf.mxu0
    %v431 = vadd.f32 0.0, %v430
    %432 = vmatmul.f32.gmra.mxu0 %v405
    %v433 = vpop.f32.mrf.mxu0
    %v434 = vadd.f32 0.0, %v433
    %435 = vdwg.mxu0
    %v436 = vadd.f32 %v239, %v425
    %v437 = vadd.f32 %v240, %v428
    %v438 = vadd.f32 %v241, %v431
    %v439 = vadd.f32 %v242, %v434
    %v440 = vmax.f32 %v436, -1.0
    %v441 = vmax.f32 %v437, -1.0
    %v442 = vmax.f32 %v438, -1.0
    %v443 = vmax.f32 %v439, -1.0
    %v444 = vmin.f32 %v440, 1.0
    %v445 = vmin.f32 %v441, 1.0
    %v446 = vmin.f32 %v442, 1.0
    %v447 = vmin.f32 %v443, 1.0
    %v448 = vmul.f32 %v32, %v362
    %v449 = vadd.f32 %v244, %v448
    %v450 = vmul.f32 %v33, %v444
    %v451 = vmul.f32 %v34, %v445
    %v452 = vmul.f32 %v35, %v446
    %v453 = vmul.f32 %v36, %v447
    %v454 = vadd.f32 %v249, %v450
    %v455 = vadd.f32 %v250, %v451
    %v456 = vadd.f32 %v251, %v452
    %v457 = vadd.f32 %v252, %v453
    %s458 = scalar_lea.vmem %s0, 16
    %v459 = vld [vmem:[%s458] sm:$0xff]
    %v461 = vsel %vm48, %v459, 0
    %463 = vmatpush.msra.mxu0 0.0
    %464 = vmatpush.msra.mxu0 0.0
    %465 = vmatpush.msra.mxu0 0.0
    %466 = vmatpush.msra.mxu0 0.0
    %467 = vmatpush.msra.mxu0 0.0
    %468 = vmatpush.msra.mxu0 0.0
    %469 = vmatpush.msra.mxu0 0.0
    %470 = vmatpush.msra.mxu0 0.0
    %471 = vmatpush.msra.mxu0 0.0
    %472 = vmatpush.msra.mxu0 0.0
    %473 = vmatpush.msra.mxu0 0.0
    %474 = vmatpush.msra.mxu0 0.0
    %475 = vmatpush.msra.mxu0 0.0
    %476 = vmatpush.msra.mxu0 0.0
    %477 = vmatpush.msra.mxu0 0.0
    %478 = vmatpush.msra.mxu0 %v449
    %479 = vmatmul.f32.gmra.mxu0 %v461
    %v480 = vpop.f32.mrf.mxu0
    %v481 = vadd.f32 0.0, %v480
    %482 = vdwg.mxu0
    %v483 = vmax.f32 %v481, 0.0
    %v485 = vsel %vm73, %v483, 0
    %487 = vmatpush.msra.mxu0 0.0
    %488 = vmatpush.msra.mxu0 0.0
    %489 = vmatpush.msra.mxu0 0.0
    %490 = vmatpush.msra.mxu0 0.0
    %491 = vmatpush.msra.mxu0 0.0
    %492 = vmatpush.msra.mxu0 0.0
    %493 = vmatpush.msra.mxu0 0.0
    %494 = vmatpush.msra.mxu0 0.0
    %495 = vmatpush.msra.mxu0 0.0
    %496 = vmatpush.msra.mxu0 0.0
    %497 = vmatpush.msra.mxu0 0.0
    %498 = vmatpush.msra.mxu0 0.0
    %499 = vmatpush.msra.mxu0 %v457
    %500 = vmatpush.msra.mxu0 %v456
    %501 = vmatpush.msra.mxu0 %v455
    %502 = vmatpush.msra.mxu0 %v454
    %503 = vmatmul.f32.gmra.mxu0 %v485
    %v504 = vpop.f32.mrf.mxu0
    %v505 = vadd.f32 0.0, %v504
    %506 = vdwg.mxu0
    %v507 = vtanh.pop %v505
    %s508 = scalar_lea.vmem %s7, 16
    %509 = vst.msk [vmem:[%s508] sm:$0xff] %vm98, %v507
    %510 = vxpose.xlu0.b32.start [1/16] %v459, 128
    %511 = vxpose.xlu0.b32.cont [2/16] 0.0, 128
    %512 = vxpose.xlu0.b32.cont [3/16] 0.0, 128
    %513 = vxpose.xlu0.b32.cont [4/16] 0.0, 128
    %514 = vxpose.xlu0.b32.cont [5/16] 0.0, 128
    %515 = vxpose.xlu0.b32.cont [6/16] 0.0, 128
    %516 = vxpose.xlu0.b32.cont [7/16] 0.0, 128
    %517 = vxpose.xlu0.b32.cont [8/16] 0.0, 128
    %518 = vxpose.xlu0.b32.cont [9/16] 0.0, 128
    %519 = vxpose.xlu0.b32.cont [10/16] 0.0, 128
    %520 = vxpose.xlu0.b32.cont [11/16] 0.0, 128
    %521 = vxpose.xlu0.b32.cont [12/16] 0.0, 128
    %522 = vxpose.xlu0.b32.cont [13/16] 0.0, 128
    %523 = vxpose.xlu0.b32.cont [14/16] 0.0, 128
    %524 = vxpose.xlu0.b32.cont [15/16] 0.0, 128
    %525 = vxpose.xlu0.b32.end [16/16] 0.0, 128
    %v526 = vpop.trf.xlu0
    %v527 = vpop.trf.xlu0
    %v528 = vpop.trf.xlu0
    %v529 = vpop.trf.xlu0
    %v530 = vpop.trf.xlu0
    %v531 = vpop.trf.xlu0
    %v532 = vpop.trf.xlu0
    %v533 = vpop.trf.xlu0
    %v534 = vpop.trf.xlu0
    %v535 = vpop.trf.xlu0
    %v536 = vpop.trf.xlu0
    %v537 = vpop.trf.xlu0
    %v538 = vpop.trf.xlu0
    %v539 = vpop.trf.xlu0
    %v540 = vpop.trf.xlu0
    %v541 = vpop.trf.xlu0
    %v543 = vsel %vm48, %v526, 0
    %545 = vmatpush.msra.mxu0 0.0
    %546 = vmatpush.msra.mxu0 0.0
    %547 = vmatpush.msra.mxu0 0.0
    %548 = vmatpush.msra.mxu0 0.0
    %549 = vmatpush.msra.mxu0 0.0
    %550 = vmatpush.msra.mxu0 0.0
    %551 = vmatpush.msra.mxu0 0.0
    %552 = vmatpush.msra.mxu0 0.0
    %553 = vmatpush.msra.mxu0 0.0
    %554 = vmatpush.msra.mxu0 0.0
    %555 = vmatpush.msra.mxu0 0.0
    %556 = vmatpush.msra.mxu0 0.0
    %557 = vmatpush.msra.mxu0 0.0
    %558 = vmatpush.msra.mxu0 0.0
    %559 = vmatpush.msra.mxu0 0.0
    %560 = vmatpush.msra.mxu0 %v481
    %561 = vmatmul.f32.gmra.mxu0 %v543
    %v562 = vpop.f32.mrf.mxu0
    %v563 = vadd.f32 0.0, %v562
    %564 = vdwg.mxu0
    %v565 = vadd.f32 %v362, %v563
    %v566 = vmax.f32 %v565, -1.0
    %v567 = vmin.f32 %v566, 1.0
    %568 = vxpose.xlu0.b32.start [1/16] %v481, 128
    %569 = vxpose.xlu0.b32.cont [2/16] 0.0, 128
    %570 = vxpose.xlu0.b32.cont [3/16] 0.0, 128
    %571 = vxpose.xlu0.b32.cont [4/16] 0.0, 128
    %572 = vxpose.xlu0.b32.cont [5/16] 0.0, 128
    %573 = vxpose.xlu0.b32.cont [6/16] 0.0, 128
    %574 = vxpose.xlu0.b32.cont [7/16] 0.0, 128
    %575 = vxpose.xlu0.b32.cont [8/16] 0.0, 128
    %576 = vxpose.xlu0.b32.cont [9/16] 0.0, 128
    %577 = vxpose.xlu0.b32.cont [10/16] 0.0, 128
    %578 = vxpose.xlu0.b32.cont [11/16] 0.0, 128
    %579 = vxpose.xlu0.b32.cont [12/16] 0.0, 128
    %580 = vxpose.xlu0.b32.cont [13/16] 0.0, 128
    %581 = vxpose.xlu0.b32.cont [14/16] 0.0, 128
    %582 = vxpose.xlu0.b32.cont [15/16] 0.0, 128
    %583 = vxpose.xlu0.b32.end [16/16] 0.0, 128
    %v584 = vpop.trf.xlu0
    %v585 = vpop.trf.xlu0
    %v586 = vpop.trf.xlu0
    %v587 = vpop.trf.xlu0
    %v588 = vpop.trf.xlu0
    %v589 = vpop.trf.xlu0
    %v590 = vpop.trf.xlu0
    %v591 = vpop.trf.xlu0
    %v592 = vpop.trf.xlu0
    %v593 = vpop.trf.xlu0
    %v594 = vpop.trf.xlu0
    %v595 = vpop.trf.xlu0
    %v596 = vpop.trf.xlu0
    %v597 = vpop.trf.xlu0
    %v598 = vpop.trf.xlu0
    %v599 = vpop.trf.xlu0
    %v601 = vsel %vm48, %v584, 0
    %v604 = vsel %vm48, %v585, 0
    %v607 = vsel %vm48, %v586, 0
    %v610 = vsel %vm48, %v587, 0
    %612 = vmatpush.msra.mxu0 0.0
    %613 = vmatpush.msra.mxu0 0.0
    %614 = vmatpush.msra.mxu0 0.0
    %615 = vmatpush.msra.mxu0 0.0
    %616 = vmatpush.msra.mxu0 0.0
    %617 = vmatpush.msra.mxu0 0.0
    %618 = vmatpush.msra.mxu0 0.0
    %619 = vmatpush.msra.mxu0 0.0
    %620 = vmatpush.msra.mxu0 0.0
    %621 = vmatpush.msra.mxu0 0.0
    %622 = vmatpush.msra.mxu0 0.0
    %623 = vmatpush.msra.mxu0 0.0
    %624 = vmatpush.msra.mxu0 0.0
    %625 = vmatpush.msra.mxu0 0.0
    %626 = vmatpush.msra.mxu0 0.0
    %627 = vmatpush.msra.mxu0 %v505
    %628 = vmatmul.f32.gmra.mxu0 %v601
    %v629 = vpop.f32.mrf.mxu0
    %v630 = vadd.f32 0.0, %v629
    %631 = vmatmul.f32.gmra.mxu0 %v604
    %v632 = vpop.f32.mrf.mxu0
    %v633 = vadd.f32 0.0, %v632
    %634 = vmatmul.f32.gmra.mxu0 %v607
    %v635 = vpop.f32.mrf.mxu0
    %v636 = vadd.f32 0.0, %v635
    %637 = vmatmul.f32.gmra.mxu0 %v610
    %v638 = vpop.f32.mrf.mxu0
    %v639 = vadd.f32 0.0, %v638
    %640 = vdwg.mxu0
    %v641 = vadd.f32 %v444, %v630
    %v642 = vadd.f32 %v445, %v633
    %v643 = vadd.f32 %v446, %v636
    %v644 = vadd.f32 %v447, %v639
    %v645 = vmax.f32 %v641, -1.0
    %v646 = vmax.f32 %v642, -1.0
    %v647 = vmax.f32 %v643, -1.0
    %v648 = vmax.f32 %v644, -1.0
    %v649 = vmin.f32 %v645, 1.0
    %v650 = vmin.f32 %v646, 1.0
    %v651 = vmin.f32 %v647, 1.0
    %v652 = vmin.f32 %v648, 1.0
    %v653 = vmul.f32 %v32, %v567
    %v654 = vadd.f32 %v449, %v653
    %v655 = vmul.f32 %v33, %v649
    %v656 = vmul.f32 %v34, %v650
    %v657 = vmul.f32 %v35, %v651
    %v658 = vmul.f32 %v36, %v652
    %v659 = vadd.f32 %v454, %v655
    %v660 = vadd.f32 %v455, %v656
    %v661 = vadd.f32 %v456, %v657
    %v662 = vadd.f32 %v457, %v658
    %s663 = scalar_lea.vmem %s0, 24
    %v664 = vld [vmem:[%s663] sm:$0xff]
    %v666 = vsel %vm48, %v664, 0
    %668 = vmatpush.msra.mxu0 0.0
    %669 = vmatpush.msra.mxu0 0.0
    %670 = vmatpush.msra.mxu0 0.0
    %671 = vmatpush.msra.mxu0 0.0
    %672 = vmatpush.msra.mxu0 0.0
    %673 = vmatpush.msra.mxu0 0.0
    %674 = vmatpush.msra.mxu0 0.0
    %675 = vmatpush.msra.mxu0 0.0
    %676 = vmatpush.msra.mxu0 0.0
    %677 = vmatpush.msra.mxu0 0.0
    %678 = vmatpush.msra.mxu0 0.0
    %679 = vmatpush.msra.mxu0 0.0
    %680 = vmatpush.msra.mxu0 0.0
    %681 = vmatpush.msra.mxu0 0.0
    %682 = vmatpush.msra.mxu0 0.0
    %683 = vmatpush.msra.mxu0 %v654
    %684 = vmatmul.f32.gmra.mxu0 %v666
    %v685 = vpop.f32.mrf.mxu0
    %v686 = vadd.f32 0.0, %v685
    %687 = vdwg.mxu0
    %v688 = vmax.f32 %v686, 0.0
    %v690 = vsel %vm73, %v688, 0
    %692 = vmatpush.msra.mxu0 0.0
    %693 = vmatpush.msra.mxu0 0.0
    %694 = vmatpush.msra.mxu0 0.0
    %695 = vmatpush.msra.mxu0 0.0
    %696 = vmatpush.msra.mxu0 0.0
    %697 = vmatpush.msra.mxu0 0.0
    %698 = vmatpush.msra.mxu0 0.0
    %699 = vmatpush.msra.mxu0 0.0
    %700 = vmatpush.msra.mxu0 0.0
    %701 = vmatpush.msra.mxu0 0.0
    %702 = vmatpush.msra.mxu0 0.0
    %703 = vmatpush.msra.mxu0 0.0
    %704 = vmatpush.msra.mxu0 %v662
    %705 = vmatpush.msra.mxu0 %v661
    %706 = vmatpush.msra.mxu0 %v660
    %707 = vmatpush.msra.mxu0 %v659
    %708 = vmatmul.f32.gmra.mxu0 %v690
    %v709 = vpop.f32.mrf.mxu0
    %v710 = vadd.f32 0.0, %v709
    %711 = vdwg.mxu0
    %v712 = vtanh.pop %v710
    %s713 = scalar_lea.vmem %s7, 24
    %714 = vst.msk [vmem:[%s713] sm:$0xff] %vm98, %v712
    %715 = vxpose.xlu0.b32.start [1/16] %v664, 128
    %716 = vxpose.xlu0.b32.cont [2/16] 0.0, 128
    %717 = vxpose.xlu0.b32.cont [3/16] 0.0, 128
    %718 = vxpose.xlu0.b32.cont [4/16] 0.0, 128
    %719 = vxpose.xlu0.b32.cont [5/16] 0.0, 128
    %720 = vxpose.xlu0.b32.cont [6/16] 0.0, 128
    %721 = vxpose.xlu0.b32.cont [7/16] 0.0, 128
    %722 = vxpose.xlu0.b32.cont [8/16] 0.0, 128
    %723 = vxpose.xlu0.b32.cont [9/16] 0.0, 128
    %724 = vxpose.xlu0.b32.cont [10/16] 0.0, 128
    %725 = vxpose.xlu0.b32.cont [11/16] 0.0, 128
    %726 = vxpose.xlu0.b32.cont [12/16] 0.0, 128
    %727 = vxpose.xlu0.b32.cont [13/16] 0.0, 128
    %728 = vxpose.xlu0.b32.cont [14/16] 0.0, 128
    %729 = vxpose.xlu0.b32.cont [15/16] 0.0, 128
    %730 = vxpose.xlu0.b32.end [16/16] 0.0, 128
    %v731 = vpop.trf.xlu0
    %v732 = vpop.trf.xlu0
    %v733 = vpop.trf.xlu0
    %v734 = vpop.trf.xlu0
    %v735 = vpop.trf.xlu0
    %v736 = vpop.trf.xlu0
    %v737 = vpop.trf.xlu0
    %v738 = vpop.trf.xlu0
    %v739 = vpop.trf.xlu0
    %v740 = vpop.trf.xlu0
    %v741 = vpop.trf.xlu0
    %v742 = vpop.trf.xlu0
    %v743 = vpop.trf.xlu0
    %v744 = vpop.trf.xlu0
    %v745 = vpop.trf.xlu0
    %v746 = vpop.trf.xlu0
    %v748 = vsel %vm48, %v731, 0
    %750 = vmatpush.msra.mxu0 0.0
    %751 = vmatpush.msra.mxu0 0.0
    %752 = vmatpush.msra.mxu0 0.0
    %753 = vmatpush.msra.mxu0 0.0
    %754 = vmatpush.msra.mxu0 0.0
    %755 = vmatpush.msra.mxu0 0.0
    %756 = vmatpush.msra.mxu0 0.0
    %757 = vmatpush.msra.mxu0 0.0
    %758 = vmatpush.msra.mxu0 0.0
    %759 = vmatpush.msra.mxu0 0.0
    %760 = vmatpush.msra.mxu0 0.0
    %761 = vmatpush.msra.mxu0 0.0
    %762 = vmatpush.msra.mxu0 0.0
    %763 = vmatpush.msra.mxu0 0.0
    %764 = vmatpush.msra.mxu0 0.0
    %765 = vmatpush.msra.mxu0 %v686
    %766 = vmatmul.f32.gmra.mxu0 %v748
    %v767 = vpop.f32.mrf.mxu0
    %v768 = vadd.f32 0.0, %v767
    %769 = vdwg.mxu0
    %v770 = vadd.f32 %v567, %v768
    %v771 = vmax.f32 %v770, -1.0
    %v772 = vmin.f32 %v771, 1.0
    %773 = vxpose.xlu0.b32.start [1/16] %v686, 128
    %774 = vxpose.xlu0.b32.cont [2/16] 0.0, 128
    %775 = vxpose.xlu0.b32.cont [3/16] 0.0, 128
    %776 = vxpose.xlu0.b32.cont [4/16] 0.0, 128
    %777 = vxpose.xlu0.b32.cont [5/16] 0.0, 128
    %778 = vxpose.xlu0.b32.cont [6/16] 0.0, 128
    %779 = vxpose.xlu0.b32.cont [7/16] 0.0, 128
    %780 = vxpose.xlu0.b32.cont [8/16] 0.0, 128
    %781 = vxpose.xlu0.b32.cont [9/16] 0.0, 128
    %782 = vxpose.xlu0.b32.cont [10/16] 0.0, 128
    %783 = vxpose.xlu0.b32.cont [11/16] 0.0, 128
    %784 = vxpose.xlu0.b32.cont [12/16] 0.0, 128
    %785 = vxpose.xlu0.b32.cont [13/16] 0.0, 128
    %786 = vxpose.xlu0.b32.cont [14/16] 0.0, 128
    %787 = vxpose.xlu0.b32.cont [15/16] 0.0, 128
    %788 = vxpose.xlu0.b32.end [16/16] 0.0, 128
    %v789 = vpop.trf.xlu0
    %v790 = vpop.trf.xlu0
    %v791 = vpop.trf.xlu0
    %v792 = vpop.trf.xlu0
    %v793 = vpop.trf.xlu0
    %v794 = vpop.trf.xlu0
    %v795 = vpop.trf.xlu0
    %v796 = vpop.trf.xlu0
    %v797 = vpop.trf.xlu0
    %v798 = vpop.trf.xlu0
    %v799 = vpop.trf.xlu0
    %v800 = vpop.trf.xlu0
    %v801 = vpop.trf.xlu0
    %v802 = vpop.trf.xlu0
    %v803 = vpop.trf.xlu0
    %v804 = vpop.trf.xlu0
    %v806 = vsel %vm48, %v789, 0
    %v809 = vsel %vm48, %v790, 0
    %v812 = vsel %vm48, %v791, 0
    %v815 = vsel %vm48, %v792, 0
    %817 = vmatpush.msra.mxu0 0.0
    %818 = vmatpush.msra.mxu0 0.0
    %819 = vmatpush.msra.mxu0 0.0
    %820 = vmatpush.msra.mxu0 0.0
    %821 = vmatpush.msra.mxu0 0.0
    %822 = vmatpush.msra.mxu0 0.0
    %823 = vmatpush.msra.mxu0 0.0
    %824 = vmatpush.msra.mxu0 0.0
    %825 = vmatpush.msra.mxu0 0.0
    %826 = vmatpush.msra.mxu0 0.0
    %827 = vmatpush.msra.mxu0 0.0
    %828 = vmatpush.msra.mxu0 0.0
    %829 = vmatpush.msra.mxu0 0.0
    %830 = vmatpush.msra.mxu0 0.0
    %831 = vmatpush.msra.mxu0 0.0
    %832 = vmatpush.msra.mxu0 %v710
    %833 = vmatmul.f32.gmra.mxu0 %v806
    %v834 = vpop.f32.mrf.mxu0
    %v835 = vadd.f32 0.0, %v834
    %836 = vmatmul.f32.gmra.mxu0 %v809
    %v837 = vpop.f32.mrf.mxu0
    %v838 = vadd.f32 0.0, %v837
    %839 = vmatmul.f32.gmra.mxu0 %v812
    %v840 = vpop.f32.mrf.mxu0
    %v841 = vadd.f32 0.0, %v840
    %842 = vmatmul.f32.gmra.mxu0 %v815
    %v843 = vpop.f32.mrf.mxu0
    %v844 = vadd.f32 0.0, %v843
    %845 = vdwg.mxu0
    %v846 = vadd.f32 %v649, %v835
    %v847 = vadd.f32 %v650, %v838
    %v848 = vadd.f32 %v651, %v841
    %v849 = vadd.f32 %v652, %v844
    %v850 = vmax.f32 %v846, -1.0
    %v851 = vmax.f32 %v847, -1.0
    %v852 = vmax.f32 %v848, -1.0
    %v853 = vmax.f32 %v849, -1.0
    %v854 = vmin.f32 %v850, 1.0
    %v855 = vmin.f32 %v851, 1.0
    %v856 = vmin.f32 %v852, 1.0
    %v857 = vmin.f32 %v853, 1.0
    %v858 = vmul.f32 %v32, %v772
    %v859 = vadd.f32 %v654, %v858
    %v860 = vmul.f32 %v33, %v854
    %v861 = vmul.f32 %v34, %v855
    %v862 = vmul.f32 %v35, %v856
    %v863 = vmul.f32 %v36, %v857
    %v864 = vadd.f32 %v659, %v860
    %v865 = vadd.f32 %v660, %v861
    %v866 = vadd.f32 %v661, %v862
    %v867 = vadd.f32 %v662, %v863
    %s868 = scalar_lea.vmem %s0, 32
    %v869 = vld [vmem:[%s868] sm:$0xff]
    %v871 = vsel %vm48, %v869, 0
    %873 = vmatpush.msra.mxu0 0.0
    %874 = vmatpush.msra.mxu0 0.0
    %875 = vmatpush.msra.mxu0 0.0
    %876 = vmatpush.msra.mxu0 0.0
    %877 = vmatpush.msra.mxu0 0.0
    %878 = vmatpush.msra.mxu0 0.0
    %879 = vmatpush.msra.mxu0 0.0
    %880 = vmatpush.msra.mxu0 0.0
    %881 = vmatpush.msra.mxu0 0.0
    %882 = vmatpush.msra.mxu0 0.0
    %883 = vmatpush.msra.mxu0 0.0
    %884 = vmatpush.msra.mxu0 0.0
    %885 = vmatpush.msra.mxu0 0.0
    %886 = vmatpush.msra.mxu0 0.0
    %887 = vmatpush.msra.mxu0 0.0
    %888 = vmatpush.msra.mxu0 %v859
    %889 = vmatmul.f32.gmra.mxu0 %v871
    %v890 = vpop.f32.mrf.mxu0
    %v891 = vadd.f32 0.0, %v890
    %892 = vdwg.mxu0
    %v893 = vmax.f32 %v891, 0.0
    %v895 = vsel %vm73, %v893, 0
    %897 = vmatpush.msra.mxu0 0.0
    %898 = vmatpush.msra.mxu0 0.0
    %899 = vmatpush.msra.mxu0 0.0
    %900 = vmatpush.msra.mxu0 0.0
    %901 = vmatpush.msra.mxu0 0.0
    %902 = vmatpush.msra.mxu0 0.0
    %903 = vmatpush.msra.mxu0 0.0
    %904 = vmatpush.msra.mxu0 0.0
    %905 = vmatpush.msra.mxu0 0.0
    %906 = vmatpush.msra.mxu0 0.0
    %907 = vmatpush.msra.mxu0 0.0
    %908 = vmatpush.msra.mxu0 0.0
    %909 = vmatpush.msra.mxu0 %v867
    %910 = vmatpush.msra.mxu0 %v866
    %911 = vmatpush.msra.mxu0 %v865
    %912 = vmatpush.msra.mxu0 %v864
    %913 = vmatmul.f32.gmra.mxu0 %v895
    %v914 = vpop.f32.mrf.mxu0
    %v915 = vadd.f32 0.0, %v914
    %916 = vdwg.mxu0
    %v917 = vtanh.pop %v915
    %s918 = scalar_lea.vmem %s7, 32
    %919 = vst.msk [vmem:[%s918] sm:$0xff] %vm98, %v917
    %920 = vxpose.xlu0.b32.start [1/16] %v869, 128
    %921 = vxpose.xlu0.b32.cont [2/16] 0.0, 128
    %922 = vxpose.xlu0.b32.cont [3/16] 0.0, 128
    %923 = vxpose.xlu0.b32.cont [4/16] 0.0, 128
    %924 = vxpose.xlu0.b32.cont [5/16] 0.0, 128
    %925 = vxpose.xlu0.b32.cont [6/16] 0.0, 128
    %926 = vxpose.xlu0.b32.cont [7/16] 0.0, 128
    %927 = vxpose.xlu0.b32.cont [8/16] 0.0, 128
    %928 = vxpose.xlu0.b32.cont [9/16] 0.0, 128
    %929 = vxpose.xlu0.b32.cont [10/16] 0.0, 128
    %930 = vxpose.xlu0.b32.cont [11/16] 0.0, 128
    %931 = vxpose.xlu0.b32.cont [12/16] 0.0, 128
    %932 = vxpose.xlu0.b32.cont [13/16] 0.0, 128
    %933 = vxpose.xlu0.b32.cont [14/16] 0.0, 128
    %934 = vxpose.xlu0.b32.cont [15/16] 0.0, 128
    %935 = vxpose.xlu0.b32.end [16/16] 0.0, 128
    %v936 = vpop.trf.xlu0
    %v937 = vpop.trf.xlu0
    %v938 = vpop.trf.xlu0
    %v939 = vpop.trf.xlu0
    %v940 = vpop.trf.xlu0
    %v941 = vpop.trf.xlu0
    %v942 = vpop.trf.xlu0
    %v943 = vpop.trf.xlu0
    %v944 = vpop.trf.xlu0
    %v945 = vpop.trf.xlu0
    %v946 = vpop.trf.xlu0
    %v947 = vpop.trf.xlu0
    %v948 = vpop.trf.xlu0
    %v949 = vpop.trf.xlu0
    %v950 = vpop.trf.xlu0
    %v951 = vpop.trf.xlu0
    %v953 = vsel %vm48, %v936, 0
    %955 = vmatpush.msra.mxu0 0.0
    %956 = vmatpush.msra.mxu0 0.0
    %957 = vmatpush.msra.mxu0 0.0
    %958 = vmatpush.msra.mxu0 0.0
    %959 = vmatpush.msra.mxu0 0.0
    %960 = vmatpush.msra.mxu0 0.0
    %961 = vmatpush.msra.mxu0 0.0
    %962 = vmatpush.msra.mxu0 0.0
    %963 = vmatpush.msra.mxu0 0.0
    %964 = vmatpush.msra.mxu0 0.0
    %965 = vmatpush.msra.mxu0 0.0
    %966 = vmatpush.msra.mxu0 0.0
    %967 = vmatpush.msra.mxu0 0.0
    %968 = vmatpush.msra.mxu0 0.0
    %969 = vmatpush.msra.mxu0 0.0
    %970 = vmatpush.msra.mxu0 %v891
    %971 = vmatmul.f32.gmra.mxu0 %v953
    %v972 = vpop.f32.mrf.mxu0
    %v973 = vadd.f32 0.0, %v972
    %974 = vdwg.mxu0
    %v975 = vadd.f32 %v772, %v973
    %v976 = vmax.f32 %v975, -1.0
    %v977 = vmin.f32 %v976, 1.0
    %978 = vxpose.xlu0.b32.start [1/16] %v891, 128
    %979 = vxpose.xlu0.b32.cont [2/16] 0.0, 128
    %980 = vxpose.xlu0.b32.cont [3/16] 0.0, 128
    %981 = vxpose.xlu0.b32.cont [4/16] 0.0, 128
    %982 = vxpose.xlu0.b32.cont [5/16] 0.0, 128
    %983 = vxpose.xlu0.b32.cont [6/16] 0.0, 128
    %984 = vxpose.xlu0.b32.cont [7/16] 0.0, 128
    %985 = vxpose.xlu0.b32.cont [8/16] 0.0, 128
    %986 = vxpose.xlu0.b32.cont [9/16] 0.0, 128
    %987 = vxpose.xlu0.b32.cont [10/16] 0.0, 128
    %988 = vxpose.xlu0.b32.cont [11/16] 0.0, 128
    %989 = vxpose.xlu0.b32.cont [12/16] 0.0, 128
    %990 = vxpose.xlu0.b32.cont [13/16] 0.0, 128
    %991 = vxpose.xlu0.b32.cont [14/16] 0.0, 128
    %992 = vxpose.xlu0.b32.cont [15/16] 0.0, 128
    %993 = vxpose.xlu0.b32.end [16/16] 0.0, 128
    %v994 = vpop.trf.xlu0
    %v995 = vpop.trf.xlu0
    %v996 = vpop.trf.xlu0
    %v997 = vpop.trf.xlu0
    %v998 = vpop.trf.xlu0
    %v999 = vpop.trf.xlu0
    %v1000 = vpop.trf.xlu0
    %v1001 = vpop.trf.xlu0
    %v1002 = vpop.trf.xlu0
    %v1003 = vpop.trf.xlu0
    %v1004 = vpop.trf.xlu0
    %v1005 = vpop.trf.xlu0
    %v1006 = vpop.trf.xlu0
    %v1007 = vpop.trf.xlu0
    %v1008 = vpop.trf.xlu0
    %v1009 = vpop.trf.xlu0
    %v1011 = vsel %vm48, %v994, 0
    %v1014 = vsel %vm48, %v995, 0
    %v1017 = vsel %vm48, %v996, 0
    %v1020 = vsel %vm48, %v997, 0
    %1022 = vmatpush.msra.mxu0 0.0
    %1023 = vmatpush.msra.mxu0 0.0
    %1024 = vmatpush.msra.mxu0 0.0
    %1025 = vmatpush.msra.mxu0 0.0
    %1026 = vmatpush.msra.mxu0 0.0
    %1027 = vmatpush.msra.mxu0 0.0
    %1028 = vmatpush.msra.mxu0 0.0
    %1029 = vmatpush.msra.mxu0 0.0
    %1030 = vmatpush.msra.mxu0 0.0
    %1031 = vmatpush.msra.mxu0 0.0
    %1032 = vmatpush.msra.mxu0 0.0
    %1033 = vmatpush.msra.mxu0 0.0
    %1034 = vmatpush.msra.mxu0 0.0
    %1035 = vmatpush.msra.mxu0 0.0
    %1036 = vmatpush.msra.mxu0 0.0
    %1037 = vmatpush.msra.mxu0 %v915
    %1038 = vmatmul.f32.gmra.mxu0 %v1011
    %v1039 = vpop.f32.mrf.mxu0
    %v1040 = vadd.f32 0.0, %v1039
    %1041 = vmatmul.f32.gmra.mxu0 %v1014
    %v1042 = vpop.f32.mrf.mxu0
    %v1043 = vadd.f32 0.0, %v1042
    %1044 = vmatmul.f32.gmra.mxu0 %v1017
    %v1045 = vpop.f32.mrf.mxu0
    %v1046 = vadd.f32 0.0, %v1045
    %1047 = vmatmul.f32.gmra.mxu0 %v1020
    %v1048 = vpop.f32.mrf.mxu0
    %v1049 = vadd.f32 0.0, %v1048
    %1050 = vdwg.mxu0
    %v1051 = vadd.f32 %v854, %v1040
    %v1052 = vadd.f32 %v855, %v1043
    %v1053 = vadd.f32 %v856, %v1046
    %v1054 = vadd.f32 %v857, %v1049
    %v1055 = vmax.f32 %v1051, -1.0
    %v1056 = vmax.f32 %v1052, -1.0
    %v1057 = vmax.f32 %v1053, -1.0
    %v1058 = vmax.f32 %v1054, -1.0
    %v1059 = vmin.f32 %v1055, 1.0
    %v1060 = vmin.f32 %v1056, 1.0
    %v1061 = vmin.f32 %v1057, 1.0
    %v1062 = vmin.f32 %v1058, 1.0
    %v1063 = vmul.f32 %v32, %v977
    %v1064 = vadd.f32 %v859, %v1063
    %v1065 = vmul.f32 %v33, %v1059
    %v1066 = vmul.f32 %v34, %v1060
    %v1067 = vmul.f32 %v35, %v1061
    %v1068 = vmul.f32 %v36, %v1062
    %v1069 = vadd.f32 %v864, %v1065
    %v1070 = vadd.f32 %v865, %v1066
    %v1071 = vadd.f32 %v866, %v1067
    %v1072 = vadd.f32 %v867, %v1068
    %s1073 = scalar_lea.vmem %s0, 40
    %v1074 = vld [vmem:[%s1073] sm:$0xff]
    %v1076 = vsel %vm48, %v1074, 0
    %1078 = vmatpush.msra.mxu0 0.0
    %1079 = vmatpush.msra.mxu0 0.0
    %1080 = vmatpush.msra.mxu0 0.0
    %1081 = vmatpush.msra.mxu0 0.0
    %1082 = vmatpush.msra.mxu0 0.0
    %1083 = vmatpush.msra.mxu0 0.0
    %1084 = vmatpush.msra.mxu0 0.0
    %1085 = vmatpush.msra.mxu0 0.0
    %1086 = vmatpush.msra.mxu0 0.0
    %1087 = vmatpush.msra.mxu0 0.0
    %1088 = vmatpush.msra.mxu0 0.0
    %1089 = vmatpush.msra.mxu0 0.0
    %1090 = vmatpush.msra.mxu0 0.0
    %1091 = vmatpush.msra.mxu0 0.0
    %1092 = vmatpush.msra.mxu0 0.0
    %1093 = vmatpush.msra.mxu0 %v1064
    %1094 = vmatmul.f32.gmra.mxu0 %v1076
    %v1095 = vpop.f32.mrf.mxu0
    %v1096 = vadd.f32 0.0, %v1095
    %1097 = vdwg.mxu0
    %v1098 = vmax.f32 %v1096, 0.0
    %v1100 = vsel %vm73, %v1098, 0
    %1102 = vmatpush.msra.mxu0 0.0
    %1103 = vmatpush.msra.mxu0 0.0
    %1104 = vmatpush.msra.mxu0 0.0
    %1105 = vmatpush.msra.mxu0 0.0
    %1106 = vmatpush.msra.mxu0 0.0
    %1107 = vmatpush.msra.mxu0 0.0
    %1108 = vmatpush.msra.mxu0 0.0
    %1109 = vmatpush.msra.mxu0 0.0
    %1110 = vmatpush.msra.mxu0 0.0
    %1111 = vmatpush.msra.mxu0 0.0
    %1112 = vmatpush.msra.mxu0 0.0
    %1113 = vmatpush.msra.mxu0 0.0
    %1114 = vmatpush.msra.mxu0 %v1072
    %1115 = vmatpush.msra.mxu0 %v1071
    %1116 = vmatpush.msra.mxu0 %v1070
    %1117 = vmatpush.msra.mxu0 %v1069
    %1118 = vmatmul.f32.gmra.mxu0 %v1100
    %v1119 = vpop.f32.mrf.mxu0
    %v1120 = vadd.f32 0.0, %v1119
    %1121 = vdwg.mxu0
    %v1122 = vtanh.pop %v1120
    %s1123 = scalar_lea.vmem %s7, 40
    %1124 = vst.msk [vmem:[%s1123] sm:$0xff] %vm98, %v1122
    %1125 = vxpose.xlu0.b32.start [1/16] %v1074, 128
    %1126 = vxpose.xlu0.b32.cont [2/16] 0.0, 128
    %1127 = vxpose.xlu0.b32.cont [3/16] 0.0, 128
    %1128 = vxpose.xlu0.b32.cont [4/16] 0.0, 128
    %1129 = vxpose.xlu0.b32.cont [5/16] 0.0, 128
    %1130 = vxpose.xlu0.b32.cont [6/16] 0.0, 128
    %1131 = vxpose.xlu0.b32.cont [7/16] 0.0, 128
    %1132 = vxpose.xlu0.b32.cont [8/16] 0.0, 128
    %1133 = vxpose.xlu0.b32.cont [9/16] 0.0, 128
    %1134 = vxpose.xlu0.b32.cont [10/16] 0.0, 128
    %1135 = vxpose.xlu0.b32.cont [11/16] 0.0, 128
    %1136 = vxpose.xlu0.b32.cont [12/16] 0.0, 128
    %1137 = vxpose.xlu0.b32.cont [13/16] 0.0, 128
    %1138 = vxpose.xlu0.b32.cont [14/16] 0.0, 128
    %1139 = vxpose.xlu0.b32.cont [15/16] 0.0, 128
    %1140 = vxpose.xlu0.b32.end [16/16] 0.0, 128
    %v1141 = vpop.trf.xlu0
    %v1142 = vpop.trf.xlu0
    %v1143 = vpop.trf.xlu0
    %v1144 = vpop.trf.xlu0
    %v1145 = vpop.trf.xlu0
    %v1146 = vpop.trf.xlu0
    %v1147 = vpop.trf.xlu0
    %v1148 = vpop.trf.xlu0
    %v1149 = vpop.trf.xlu0
    %v1150 = vpop.trf.xlu0
    %v1151 = vpop.trf.xlu0
    %v1152 = vpop.trf.xlu0
    %v1153 = vpop.trf.xlu0
    %v1154 = vpop.trf.xlu0
    %v1155 = vpop.trf.xlu0
    %v1156 = vpop.trf.xlu0
    %v1158 = vsel %vm48, %v1141, 0
    %1160 = vmatpush.msra.mxu0 0.0
    %1161 = vmatpush.msra.mxu0 0.0
    %1162 = vmatpush.msra.mxu0 0.0
    %1163 = vmatpush.msra.mxu0 0.0
    %1164 = vmatpush.msra.mxu0 0.0
    %1165 = vmatpush.msra.mxu0 0.0
    %1166 = vmatpush.msra.mxu0 0.0
    %1167 = vmatpush.msra.mxu0 0.0
    %1168 = vmatpush.msra.mxu0 0.0
    %1169 = vmatpush.msra.mxu0 0.0
    %1170 = vmatpush.msra.mxu0 0.0
    %1171 = vmatpush.msra.mxu0 0.0
    %1172 = vmatpush.msra.mxu0 0.0
    %1173 = vmatpush.msra.mxu0 0.0
    %1174 = vmatpush.msra.mxu0 0.0
    %1175 = vmatpush.msra.mxu0 %v1096
    %1176 = vmatmul.f32.gmra.mxu0 %v1158
    %v1177 = vpop.f32.mrf.mxu0
    %v1178 = vadd.f32 0.0, %v1177
    %1179 = vdwg.mxu0
    %v1180 = vadd.f32 %v977, %v1178
    %v1181 = vmax.f32 %v1180, -1.0
    %v1182 = vmin.f32 %v1181, 1.0
    %1183 = vxpose.xlu0.b32.start [1/16] %v1096, 128
    %1184 = vxpose.xlu0.b32.cont [2/16] 0.0, 128
    %1185 = vxpose.xlu0.b32.cont [3/16] 0.0, 128
    %1186 = vxpose.xlu0.b32.cont [4/16] 0.0, 128
    %1187 = vxpose.xlu0.b32.cont [5/16] 0.0, 128
    %1188 = vxpose.xlu0.b32.cont [6/16] 0.0, 128
    %1189 = vxpose.xlu0.b32.cont [7/16] 0.0, 128
    %1190 = vxpose.xlu0.b32.cont [8/16] 0.0, 128
    %1191 = vxpose.xlu0.b32.cont [9/16] 0.0, 128
    %1192 = vxpose.xlu0.b32.cont [10/16] 0.0, 128
    %1193 = vxpose.xlu0.b32.cont [11/16] 0.0, 128
    %1194 = vxpose.xlu0.b32.cont [12/16] 0.0, 128
    %1195 = vxpose.xlu0.b32.cont [13/16] 0.0, 128
    %1196 = vxpose.xlu0.b32.cont [14/16] 0.0, 128
    %1197 = vxpose.xlu0.b32.cont [15/16] 0.0, 128
    %1198 = vxpose.xlu0.b32.end [16/16] 0.0, 128
    %v1199 = vpop.trf.xlu0
    %v1200 = vpop.trf.xlu0
    %v1201 = vpop.trf.xlu0
    %v1202 = vpop.trf.xlu0
    %v1203 = vpop.trf.xlu0
    %v1204 = vpop.trf.xlu0
    %v1205 = vpop.trf.xlu0
    %v1206 = vpop.trf.xlu0
    %v1207 = vpop.trf.xlu0
    %v1208 = vpop.trf.xlu0
    %v1209 = vpop.trf.xlu0
    %v1210 = vpop.trf.xlu0
    %v1211 = vpop.trf.xlu0
    %v1212 = vpop.trf.xlu0
    %v1213 = vpop.trf.xlu0
    %v1214 = vpop.trf.xlu0
    %v1216 = vsel %vm48, %v1199, 0
    %v1219 = vsel %vm48, %v1200, 0
    %v1222 = vsel %vm48, %v1201, 0
    %v1225 = vsel %vm48, %v1202, 0
    %1227 = vmatpush.msra.mxu0 0.0
    %1228 = vmatpush.msra.mxu0 0.0
    %1229 = vmatpush.msra.mxu0 0.0
    %1230 = vmatpush.msra.mxu0 0.0
    %1231 = vmatpush.msra.mxu0 0.0
    %1232 = vmatpush.msra.mxu0 0.0
    %1233 = vmatpush.msra.mxu0 0.0
    %1234 = vmatpush.msra.mxu0 0.0
    %1235 = vmatpush.msra.mxu0 0.0
    %1236 = vmatpush.msra.mxu0 0.0
    %1237 = vmatpush.msra.mxu0 0.0
    %1238 = vmatpush.msra.mxu0 0.0
    %1239 = vmatpush.msra.mxu0 0.0
    %1240 = vmatpush.msra.mxu0 0.0
    %1241 = vmatpush.msra.mxu0 0.0
    %1242 = vmatpush.msra.mxu0 %v1120
    %1243 = vmatmul.f32.gmra.mxu0 %v1216
    %v1244 = vpop.f32.mrf.mxu0
    %v1245 = vadd.f32 0.0, %v1244
    %1246 = vmatmul.f32.gmra.mxu0 %v1219
    %v1247 = vpop.f32.mrf.mxu0
    %v1248 = vadd.f32 0.0, %v1247
    %1249 = vmatmul.f32.gmra.mxu0 %v1222
    %v1250 = vpop.f32.mrf.mxu0
    %v1251 = vadd.f32 0.0, %v1250
    %1252 = vmatmul.f32.gmra.mxu0 %v1225
    %v1253 = vpop.f32.mrf.mxu0
    %v1254 = vadd.f32 0.0, %v1253
    %1255 = vdwg.mxu0
    %v1256 = vadd.f32 %v1059, %v1245
    %v1257 = vadd.f32 %v1060, %v1248
    %v1258 = vadd.f32 %v1061, %v1251
    %v1259 = vadd.f32 %v1062, %v1254
    %v1260 = vmax.f32 %v1256, -1.0
    %v1261 = vmax.f32 %v1257, -1.0
    %v1262 = vmax.f32 %v1258, -1.0
    %v1263 = vmax.f32 %v1259, -1.0
    %v1264 = vmin.f32 %v1260, 1.0
    %v1265 = vmin.f32 %v1261, 1.0
    %v1266 = vmin.f32 %v1262, 1.0
    %v1267 = vmin.f32 %v1263, 1.0
    %v1268 = vmul.f32 %v32, %v1182
    %v1269 = vadd.f32 %v1064, %v1268
    %v1270 = vmul.f32 %v33, %v1264
    %v1271 = vmul.f32 %v34, %v1265
    %v1272 = vmul.f32 %v35, %v1266
    %v1273 = vmul.f32 %v36, %v1267
    %v1274 = vadd.f32 %v1069, %v1270
    %v1275 = vadd.f32 %v1070, %v1271
    %v1276 = vadd.f32 %v1071, %v1272
    %v1277 = vadd.f32 %v1072, %v1273
    %s1278 = scalar_lea.vmem %s0, 48
    %v1279 = vld [vmem:[%s1278] sm:$0xff]
    %v1281 = vsel %vm48, %v1279, 0
    %1283 = vmatpush.msra.mxu0 0.0
    %1284 = vmatpush.msra.mxu0 0.0
    %1285 = vmatpush.msra.mxu0 0.0
    %1286 = vmatpush.msra.mxu0 0.0
    %1287 = vmatpush.msra.mxu0 0.0
    %1288 = vmatpush.msra.mxu0 0.0
    %1289 = vmatpush.msra.mxu0 0.0
    %1290 = vmatpush.msra.mxu0 0.0
    %1291 = vmatpush.msra.mxu0 0.0
    %1292 = vmatpush.msra.mxu0 0.0
    %1293 = vmatpush.msra.mxu0 0.0
    %1294 = vmatpush.msra.mxu0 0.0
    %1295 = vmatpush.msra.mxu0 0.0
    %1296 = vmatpush.msra.mxu0 0.0
    %1297 = vmatpush.msra.mxu0 0.0
    %1298 = vmatpush.msra.mxu0 %v1269
    %1299 = vmatmul.f32.gmra.mxu0 %v1281
    %v1300 = vpop.f32.mrf.mxu0
    %v1301 = vadd.f32 0.0, %v1300
    %1302 = vdwg.mxu0
    %v1303 = vmax.f32 %v1301, 0.0
    %v1305 = vsel %vm73, %v1303, 0
    %1307 = vmatpush.msra.mxu0 0.0
    %1308 = vmatpush.msra.mxu0 0.0
    %1309 = vmatpush.msra.mxu0 0.0
    %1310 = vmatpush.msra.mxu0 0.0
    %1311 = vmatpush.msra.mxu0 0.0
    %1312 = vmatpush.msra.mxu0 0.0
    %1313 = vmatpush.msra.mxu0 0.0
    %1314 = vmatpush.msra.mxu0 0.0
    %1315 = vmatpush.msra.mxu0 0.0
    %1316 = vmatpush.msra.mxu0 0.0
    %1317 = vmatpush.msra.mxu0 0.0
    %1318 = vmatpush.msra.mxu0 0.0
    %1319 = vmatpush.msra.mxu0 %v1277
    %1320 = vmatpush.msra.mxu0 %v1276
    %1321 = vmatpush.msra.mxu0 %v1275
    %1322 = vmatpush.msra.mxu0 %v1274
    %1323 = vmatmul.f32.gmra.mxu0 %v1305
    %v1324 = vpop.f32.mrf.mxu0
    %v1325 = vadd.f32 0.0, %v1324
    %1326 = vdwg.mxu0
    %v1327 = vtanh.pop %v1325
    %s1328 = scalar_lea.vmem %s7, 48
    %1329 = vst.msk [vmem:[%s1328] sm:$0xff] %vm98, %v1327
    %1330 = vxpose.xlu0.b32.start [1/16] %v1279, 128
    %1331 = vxpose.xlu0.b32.cont [2/16] 0.0, 128
    %1332 = vxpose.xlu0.b32.cont [3/16] 0.0, 128
    %1333 = vxpose.xlu0.b32.cont [4/16] 0.0, 128
    %1334 = vxpose.xlu0.b32.cont [5/16] 0.0, 128
    %1335 = vxpose.xlu0.b32.cont [6/16] 0.0, 128
    %1336 = vxpose.xlu0.b32.cont [7/16] 0.0, 128
    %1337 = vxpose.xlu0.b32.cont [8/16] 0.0, 128
    %1338 = vxpose.xlu0.b32.cont [9/16] 0.0, 128
    %1339 = vxpose.xlu0.b32.cont [10/16] 0.0, 128
    %1340 = vxpose.xlu0.b32.cont [11/16] 0.0, 128
    %1341 = vxpose.xlu0.b32.cont [12/16] 0.0, 128
    %1342 = vxpose.xlu0.b32.cont [13/16] 0.0, 128
    %1343 = vxpose.xlu0.b32.cont [14/16] 0.0, 128
    %1344 = vxpose.xlu0.b32.cont [15/16] 0.0, 128
    %1345 = vxpose.xlu0.b32.end [16/16] 0.0, 128
    %v1346 = vpop.trf.xlu0
    %v1347 = vpop.trf.xlu0
    %v1348 = vpop.trf.xlu0
    %v1349 = vpop.trf.xlu0
    %v1350 = vpop.trf.xlu0
    %v1351 = vpop.trf.xlu0
    %v1352 = vpop.trf.xlu0
    %v1353 = vpop.trf.xlu0
    %v1354 = vpop.trf.xlu0
    %v1355 = vpop.trf.xlu0
    %v1356 = vpop.trf.xlu0
    %v1357 = vpop.trf.xlu0
    %v1358 = vpop.trf.xlu0
    %v1359 = vpop.trf.xlu0
    %v1360 = vpop.trf.xlu0
    %v1361 = vpop.trf.xlu0
    %v1363 = vsel %vm48, %v1346, 0
    %1365 = vmatpush.msra.mxu0 0.0
    %1366 = vmatpush.msra.mxu0 0.0
    %1367 = vmatpush.msra.mxu0 0.0
    %1368 = vmatpush.msra.mxu0 0.0
    %1369 = vmatpush.msra.mxu0 0.0
    %1370 = vmatpush.msra.mxu0 0.0
    %1371 = vmatpush.msra.mxu0 0.0
    %1372 = vmatpush.msra.mxu0 0.0
    %1373 = vmatpush.msra.mxu0 0.0
    %1374 = vmatpush.msra.mxu0 0.0
    %1375 = vmatpush.msra.mxu0 0.0
    %1376 = vmatpush.msra.mxu0 0.0
    %1377 = vmatpush.msra.mxu0 0.0
    %1378 = vmatpush.msra.mxu0 0.0
    %1379 = vmatpush.msra.mxu0 0.0
    %1380 = vmatpush.msra.mxu0 %v1301
    %1381 = vmatmul.f32.gmra.mxu0 %v1363
    %v1382 = vpop.f32.mrf.mxu0
    %v1383 = vadd.f32 0.0, %v1382
    %1384 = vdwg.mxu0
    %v1385 = vadd.f32 %v1182, %v1383
    %v1386 = vmax.f32 %v1385, -1.0
    %v1387 = vmin.f32 %v1386, 1.0
    %1388 = vxpose.xlu0.b32.start [1/16] %v1301, 128
    %1389 = vxpose.xlu0.b32.cont [2/16] 0.0, 128
    %1390 = vxpose.xlu0.b32.cont [3/16] 0.0, 128
    %1391 = vxpose.xlu0.b32.cont [4/16] 0.0, 128
    %1392 = vxpose.xlu0.b32.cont [5/16] 0.0, 128
    %1393 = vxpose.xlu0.b32.cont [6/16] 0.0, 128
    %1394 = vxpose.xlu0.b32.cont [7/16] 0.0, 128
    %1395 = vxpose.xlu0.b32.cont [8/16] 0.0, 128
    %1396 = vxpose.xlu0.b32.cont [9/16] 0.0, 128
    %1397 = vxpose.xlu0.b32.cont [10/16] 0.0, 128
    %1398 = vxpose.xlu0.b32.cont [11/16] 0.0, 128
    %1399 = vxpose.xlu0.b32.cont [12/16] 0.0, 128
    %1400 = vxpose.xlu0.b32.cont [13/16] 0.0, 128
    %1401 = vxpose.xlu0.b32.cont [14/16] 0.0, 128
    %1402 = vxpose.xlu0.b32.cont [15/16] 0.0, 128
    %1403 = vxpose.xlu0.b32.end [16/16] 0.0, 128
    %v1404 = vpop.trf.xlu0
    %v1405 = vpop.trf.xlu0
    %v1406 = vpop.trf.xlu0
    %v1407 = vpop.trf.xlu0
    %v1408 = vpop.trf.xlu0
    %v1409 = vpop.trf.xlu0
    %v1410 = vpop.trf.xlu0
    %v1411 = vpop.trf.xlu0
    %v1412 = vpop.trf.xlu0
    %v1413 = vpop.trf.xlu0
    %v1414 = vpop.trf.xlu0
    %v1415 = vpop.trf.xlu0
    %v1416 = vpop.trf.xlu0
    %v1417 = vpop.trf.xlu0
    %v1418 = vpop.trf.xlu0
    %v1419 = vpop.trf.xlu0
    %v1421 = vsel %vm48, %v1404, 0
    %v1424 = vsel %vm48, %v1405, 0
    %v1427 = vsel %vm48, %v1406, 0
    %v1430 = vsel %vm48, %v1407, 0
    %1432 = vmatpush.msra.mxu0 0.0
    %1433 = vmatpush.msra.mxu0 0.0
    %1434 = vmatpush.msra.mxu0 0.0
    %1435 = vmatpush.msra.mxu0 0.0
    %1436 = vmatpush.msra.mxu0 0.0
    %1437 = vmatpush.msra.mxu0 0.0
    %1438 = vmatpush.msra.mxu0 0.0
    %1439 = vmatpush.msra.mxu0 0.0
    %1440 = vmatpush.msra.mxu0 0.0
    %1441 = vmatpush.msra.mxu0 0.0
    %1442 = vmatpush.msra.mxu0 0.0
    %1443 = vmatpush.msra.mxu0 0.0
    %1444 = vmatpush.msra.mxu0 0.0
    %1445 = vmatpush.msra.mxu0 0.0
    %1446 = vmatpush.msra.mxu0 0.0
    %1447 = vmatpush.msra.mxu0 %v1325
    %1448 = vmatmul.f32.gmra.mxu0 %v1421
    %v1449 = vpop.f32.mrf.mxu0
    %v1450 = vadd.f32 0.0, %v1449
    %1451 = vmatmul.f32.gmra.mxu0 %v1424
    %v1452 = vpop.f32.mrf.mxu0
    %v1453 = vadd.f32 0.0, %v1452
    %1454 = vmatmul.f32.gmra.mxu0 %v1427
    %v1455 = vpop.f32.mrf.mxu0
    %v1456 = vadd.f32 0.0, %v1455
    %1457 = vmatmul.f32.gmra.mxu0 %v1430
    %v1458 = vpop.f32.mrf.mxu0
    %v1459 = vadd.f32 0.0, %v1458
    %1460 = vdwg.mxu0
    %v1461 = vadd.f32 %v1264, %v1450
    %v1462 = vadd.f32 %v1265, %v1453
    %v1463 = vadd.f32 %v1266, %v1456
    %v1464 = vadd.f32 %v1267, %v1459
    %v1465 = vmax.f32 %v1461, -1.0
    %v1466 = vmax.f32 %v1462, -1.0
    %v1467 = vmax.f32 %v1463, -1.0
    %v1468 = vmax.f32 %v1464, -1.0
    %v1469 = vmin.f32 %v1465, 1.0
    %v1470 = vmin.f32 %v1466, 1.0
    %v1471 = vmin.f32 %v1467, 1.0
    %v1472 = vmin.f32 %v1468, 1.0
    %v1473 = vmul.f32 %v32, %v1387
    %v1474 = vadd.f32 %v1269, %v1473
    %v1475 = vmul.f32 %v33, %v1469
    %v1476 = vmul.f32 %v34, %v1470
    %v1477 = vmul.f32 %v35, %v1471
    %v1478 = vmul.f32 %v36, %v1472
    %v1479 = vadd.f32 %v1274, %v1475
    %v1480 = vadd.f32 %v1275, %v1476
    %v1481 = vadd.f32 %v1276, %v1477
    %v1482 = vadd.f32 %v1277, %v1478
    %s1483 = scalar_lea.vmem %s0, 56
    %v1484 = vld [vmem:[%s1483] sm:$0xff]
    %v1486 = vsel %vm48, %v1484, 0
    %1488 = vmatpush.msra.mxu0 0.0
    %1489 = vmatpush.msra.mxu0 0.0
    %1490 = vmatpush.msra.mxu0 0.0
    %1491 = vmatpush.msra.mxu0 0.0
    %1492 = vmatpush.msra.mxu0 0.0
    %1493 = vmatpush.msra.mxu0 0.0
    %1494 = vmatpush.msra.mxu0 0.0
    %1495 = vmatpush.msra.mxu0 0.0
    %1496 = vmatpush.msra.mxu0 0.0
    %1497 = vmatpush.msra.mxu0 0.0
    %1498 = vmatpush.msra.mxu0 0.0
    %1499 = vmatpush.msra.mxu0 0.0
    %1500 = vmatpush.msra.mxu0 0.0
    %1501 = vmatpush.msra.mxu0 0.0
    %1502 = vmatpush.msra.mxu0 0.0
    %1503 = vmatpush.msra.mxu0 %v1474
    %1504 = vmatmul.f32.gmra.mxu0 %v1486
    %v1505 = vpop.f32.mrf.mxu0
    %v1506 = vadd.f32 0.0, %v1505
    %1507 = vdwg.mxu0
    %v1508 = vmax.f32 %v1506, 0.0
    %v1510 = vsel %vm73, %v1508, 0
    %1512 = vmatpush.msra.mxu0 0.0
    %1513 = vmatpush.msra.mxu0 0.0
    %1514 = vmatpush.msra.mxu0 0.0
    %1515 = vmatpush.msra.mxu0 0.0
    %1516 = vmatpush.msra.mxu0 0.0
    %1517 = vmatpush.msra.mxu0 0.0
    %1518 = vmatpush.msra.mxu0 0.0
    %1519 = vmatpush.msra.mxu0 0.0
    %1520 = vmatpush.msra.mxu0 0.0
    %1521 = vmatpush.msra.mxu0 0.0
    %1522 = vmatpush.msra.mxu0 0.0
    %1523 = vmatpush.msra.mxu0 0.0
    %1524 = vmatpush.msra.mxu0 %v1482
    %1525 = vmatpush.msra.mxu0 %v1481
    %1526 = vmatpush.msra.mxu0 %v1480
    %1527 = vmatpush.msra.mxu0 %v1479
    %1528 = vmatmul.f32.gmra.mxu0 %v1510
    %v1529 = vpop.f32.mrf.mxu0
    %v1530 = vadd.f32 0.0, %v1529
    %1531 = vdwg.mxu0
    %v1532 = vtanh.pop %v1530
    %s1533 = scalar_lea.vmem %s7, 56
    %1534 = vst.msk [vmem:[%s1533] sm:$0xff] %vm98, %v1532
    %1535 = vxpose.xlu0.b32.start [1/16] %v1484, 128
    %1536 = vxpose.xlu0.b32.cont [2/16] 0.0, 128
    %1537 = vxpose.xlu0.b32.cont [3/16] 0.0, 128
    %1538 = vxpose.xlu0.b32.cont [4/16] 0.0, 128
    %1539 = vxpose.xlu0.b32.cont [5/16] 0.0, 128
    %1540 = vxpose.xlu0.b32.cont [6/16] 0.0, 128
    %1541 = vxpose.xlu0.b32.cont [7/16] 0.0, 128
    %1542 = vxpose.xlu0.b32.cont [8/16] 0.0, 128
    %1543 = vxpose.xlu0.b32.cont [9/16] 0.0, 128
    %1544 = vxpose.xlu0.b32.cont [10/16] 0.0, 128
    %1545 = vxpose.xlu0.b32.cont [11/16] 0.0, 128
    %1546 = vxpose.xlu0.b32.cont [12/16] 0.0, 128
    %1547 = vxpose.xlu0.b32.cont [13/16] 0.0, 128
    %1548 = vxpose.xlu0.b32.cont [14/16] 0.0, 128
    %1549 = vxpose.xlu0.b32.cont [15/16] 0.0, 128
    %1550 = vxpose.xlu0.b32.end [16/16] 0.0, 128
    %v1551 = vpop.trf.xlu0
    %v1552 = vpop.trf.xlu0
    %v1553 = vpop.trf.xlu0
    %v1554 = vpop.trf.xlu0
    %v1555 = vpop.trf.xlu0
    %v1556 = vpop.trf.xlu0
    %v1557 = vpop.trf.xlu0
    %v1558 = vpop.trf.xlu0
    %v1559 = vpop.trf.xlu0
    %v1560 = vpop.trf.xlu0
    %v1561 = vpop.trf.xlu0
    %v1562 = vpop.trf.xlu0
    %v1563 = vpop.trf.xlu0
    %v1564 = vpop.trf.xlu0
    %v1565 = vpop.trf.xlu0
    %v1566 = vpop.trf.xlu0
    %v1568 = vsel %vm48, %v1551, 0
    %1570 = vmatpush.msra.mxu0 0.0
    %1571 = vmatpush.msra.mxu0 0.0
    %1572 = vmatpush.msra.mxu0 0.0
    %1573 = vmatpush.msra.mxu0 0.0
    %1574 = vmatpush.msra.mxu0 0.0
    %1575 = vmatpush.msra.mxu0 0.0
    %1576 = vmatpush.msra.mxu0 0.0
    %1577 = vmatpush.msra.mxu0 0.0
    %1578 = vmatpush.msra.mxu0 0.0
    %1579 = vmatpush.msra.mxu0 0.0
    %1580 = vmatpush.msra.mxu0 0.0
    %1581 = vmatpush.msra.mxu0 0.0
    %1582 = vmatpush.msra.mxu0 0.0
    %1583 = vmatpush.msra.mxu0 0.0
    %1584 = vmatpush.msra.mxu0 0.0
    %1585 = vmatpush.msra.mxu0 %v1506
    %1586 = vmatmul.f32.gmra.mxu0 %v1568
    %v1587 = vpop.f32.mrf.mxu0
    %v1588 = vadd.f32 0.0, %v1587
    %1589 = vdwg.mxu0
    %v1590 = vadd.f32 %v1387, %v1588
    %v1591 = vmax.f32 %v1590, -1.0
    %v1592 = vmin.f32 %v1591, 1.0
    %1593 = vxpose.xlu0.b32.start [1/16] %v1506, 128
    %1594 = vxpose.xlu0.b32.cont [2/16] 0.0, 128
    %1595 = vxpose.xlu0.b32.cont [3/16] 0.0, 128
    %1596 = vxpose.xlu0.b32.cont [4/16] 0.0, 128
    %1597 = vxpose.xlu0.b32.cont [5/16] 0.0, 128
    %1598 = vxpose.xlu0.b32.cont [6/16] 0.0, 128
    %1599 = vxpose.xlu0.b32.cont [7/16] 0.0, 128
    %1600 = vxpose.xlu0.b32.cont [8/16] 0.0, 128
    %1601 = vxpose.xlu0.b32.cont [9/16] 0.0, 128
    %1602 = vxpose.xlu0.b32.cont [10/16] 0.0, 128
    %1603 = vxpose.xlu0.b32.cont [11/16] 0.0, 128
    %1604 = vxpose.xlu0.b32.cont [12/16] 0.0, 128
    %1605 = vxpose.xlu0.b32.cont [13/16] 0.0, 128
    %1606 = vxpose.xlu0.b32.cont [14/16] 0.0, 128
    %1607 = vxpose.xlu0.b32.cont [15/16] 0.0, 128
    %1608 = vxpose.xlu0.b32.end [16/16] 0.0, 128
    %v1609 = vpop.trf.xlu0
    %v1610 = vpop.trf.xlu0
    %v1611 = vpop.trf.xlu0
    %v1612 = vpop.trf.xlu0
    %v1613 = vpop.trf.xlu0
    %v1614 = vpop.trf.xlu0
    %v1615 = vpop.trf.xlu0
    %v1616 = vpop.trf.xlu0
    %v1617 = vpop.trf.xlu0
    %v1618 = vpop.trf.xlu0
    %v1619 = vpop.trf.xlu0
    %v1620 = vpop.trf.xlu0
    %v1621 = vpop.trf.xlu0
    %v1622 = vpop.trf.xlu0
    %v1623 = vpop.trf.xlu0
    %v1624 = vpop.trf.xlu0
    %v1626 = vsel %vm48, %v1609, 0
    %v1629 = vsel %vm48, %v1610, 0
    %v1632 = vsel %vm48, %v1611, 0
    %v1635 = vsel %vm48, %v1612, 0
    %1637 = vmatpush.msra.mxu0 0.0
    %1638 = vmatpush.msra.mxu0 0.0
    %1639 = vmatpush.msra.mxu0 0.0
    %1640 = vmatpush.msra.mxu0 0.0
    %1641 = vmatpush.msra.mxu0 0.0
    %1642 = vmatpush.msra.mxu0 0.0
    %1643 = vmatpush.msra.mxu0 0.0
    %1644 = vmatpush.msra.mxu0 0.0
    %1645 = vmatpush.msra.mxu0 0.0
    %1646 = vmatpush.msra.mxu0 0.0
    %1647 = vmatpush.msra.mxu0 0.0
    %1648 = vmatpush.msra.mxu0 0.0
    %1649 = vmatpush.msra.mxu0 0.0
    %1650 = vmatpush.msra.mxu0 0.0
    %1651 = vmatpush.msra.mxu0 0.0
    %1652 = vmatpush.msra.mxu0 %v1530
    %1653 = vmatmul.f32.gmra.mxu0 %v1626
    %v1654 = vpop.f32.mrf.mxu0
    %v1655 = vadd.f32 0.0, %v1654
    %1656 = vmatmul.f32.gmra.mxu0 %v1629
    %v1657 = vpop.f32.mrf.mxu0
    %v1658 = vadd.f32 0.0, %v1657
    %1659 = vmatmul.f32.gmra.mxu0 %v1632
    %v1660 = vpop.f32.mrf.mxu0
    %v1661 = vadd.f32 0.0, %v1660
    %1662 = vmatmul.f32.gmra.mxu0 %v1635
    %v1663 = vpop.f32.mrf.mxu0
    %v1664 = vadd.f32 0.0, %v1663
    %1665 = vdwg.mxu0
    %v1666 = vadd.f32 %v1469, %v1655
    %v1667 = vadd.f32 %v1470, %v1658
    %v1668 = vadd.f32 %v1471, %v1661
    %v1669 = vadd.f32 %v1472, %v1664
    %v1670 = vmax.f32 %v1666, -1.0
    %v1671 = vmax.f32 %v1667, -1.0
    %v1672 = vmax.f32 %v1668, -1.0
    %v1673 = vmax.f32 %v1669, -1.0
    %v1674 = vmin.f32 %v1670, 1.0
    %v1675 = vmin.f32 %v1671, 1.0
    %v1676 = vmin.f32 %v1672, 1.0
    %v1677 = vmin.f32 %v1673, 1.0
    %v1678 = vmul.f32 %v32, %v1592
    %v1679 = vadd.f32 %v1474, %v1678
    %v1680 = vmul.f32 %v33, %v1674
    %v1681 = vmul.f32 %v34, %v1675
    %v1682 = vmul.f32 %v35, %v1676
    %v1683 = vmul.f32 %v36, %v1677
    %v1684 = vadd.f32 %v1479, %v1680
    %v1685 = vadd.f32 %v1480, %v1681
    %v1686 = vadd.f32 %v1481, %v1682
    %v1687 = vadd.f32 %v1482, %v1683
    %s1688 = scalar_lea.vmem %s0, 64
    %v1689 = vld [vmem:[%s1688] sm:$0xff]
    %v1691 = vsel %vm48, %v1689, 0
    %1693 = vmatpush.msra.mxu0 0.0
    %1694 = vmatpush.msra.mxu0 0.0
    %1695 = vmatpush.msra.mxu0 0.0
    %1696 = vmatpush.msra.mxu0 0.0
    %1697 = vmatpush.msra.mxu0 0.0
    %1698 = vmatpush.msra.mxu0 0.0
    %1699 = vmatpush.msra.mxu0 0.0
    %1700 = vmatpush.msra.mxu0 0.0
    %1701 = vmatpush.msra.mxu0 0.0
    %1702 = vmatpush.msra.mxu0 0.0
    %1703 = vmatpush.msra.mxu0 0.0
    %1704 = vmatpush.msra.mxu0 0.0
    %1705 = vmatpush.msra.mxu0 0.0
    %1706 = vmatpush.msra.mxu0 0.0
    %1707 = vmatpush.msra.mxu0 0.0
    %1708 = vmatpush.msra.mxu0 %v1679
    %1709 = vmatmul.f32.gmra.mxu0 %v1691
    %v1710 = vpop.f32.mrf.mxu0
    %v1711 = vadd.f32 0.0, %v1710
    %1712 = vdwg.mxu0
    %v1713 = vmax.f32 %v1711, 0.0
    %v1715 = vsel %vm73, %v1713, 0
    %1717 = vmatpush.msra.mxu0 0.0
    %1718 = vmatpush.msra.mxu0 0.0
    %1719 = vmatpush.msra.mxu0 0.0
    %1720 = vmatpush.msra.mxu0 0.0
    %1721 = vmatpush.msra.mxu0 0.0
    %1722 = vmatpush.msra.mxu0 0.0
    %1723 = vmatpush.msra.mxu0 0.0
    %1724 = vmatpush.msra.mxu0 0.0
    %1725 = vmatpush.msra.mxu0 0.0
    %1726 = vmatpush.msra.mxu0 0.0
    %1727 = vmatpush.msra.mxu0 0.0
    %1728 = vmatpush.msra.mxu0 0.0
    %1729 = vmatpush.msra.mxu0 %v1687
    %1730 = vmatpush.msra.mxu0 %v1686
    %1731 = vmatpush.msra.mxu0 %v1685
    %1732 = vmatpush.msra.mxu0 %v1684
    %1733 = vmatmul.f32.gmra.mxu0 %v1715
    %v1734 = vpop.f32.mrf.mxu0
    %v1735 = vadd.f32 0.0, %v1734
    %1736 = vdwg.mxu0
    %v1737 = vtanh.pop %v1735
    %s1738 = scalar_lea.vmem %s7, 64
    %1739 = vst.msk [vmem:[%s1738] sm:$0xff] %vm98, %v1737
    %1740 = vxpose.xlu0.b32.start [1/16] %v1689, 128
    %1741 = vxpose.xlu0.b32.cont [2/16] 0.0, 128
    %1742 = vxpose.xlu0.b32.cont [3/16] 0.0, 128
    %1743 = vxpose.xlu0.b32.cont [4/16] 0.0, 128
    %1744 = vxpose.xlu0.b32.cont [5/16] 0.0, 128
    %1745 = vxpose.xlu0.b32.cont [6/16] 0.0, 128
    %1746 = vxpose.xlu0.b32.cont [7/16] 0.0, 128
    %1747 = vxpose.xlu0.b32.cont [8/16] 0.0, 128
    %1748 = vxpose.xlu0.b32.cont [9/16] 0.0, 128
    %1749 = vxpose.xlu0.b32.cont [10/16] 0.0, 128
    %1750 = vxpose.xlu0.b32.cont [11/16] 0.0, 128
    %1751 = vxpose.xlu0.b32.cont [12/16] 0.0, 128
    %1752 = vxpose.xlu0.b32.cont [13/16] 0.0, 128
    %1753 = vxpose.xlu0.b32.cont [14/16] 0.0, 128
    %1754 = vxpose.xlu0.b32.cont [15/16] 0.0, 128
    %1755 = vxpose.xlu0.b32.end [16/16] 0.0, 128
    %v1756 = vpop.trf.xlu0
    %v1757 = vpop.trf.xlu0
    %v1758 = vpop.trf.xlu0
    %v1759 = vpop.trf.xlu0
    %v1760 = vpop.trf.xlu0
    %v1761 = vpop.trf.xlu0
    %v1762 = vpop.trf.xlu0
    %v1763 = vpop.trf.xlu0
    %v1764 = vpop.trf.xlu0
    %v1765 = vpop.trf.xlu0
    %v1766 = vpop.trf.xlu0
    %v1767 = vpop.trf.xlu0
    %v1768 = vpop.trf.xlu0
    %v1769 = vpop.trf.xlu0
    %v1770 = vpop.trf.xlu0
    %v1771 = vpop.trf.xlu0
    %v1773 = vsel %vm48, %v1756, 0
    %1775 = vmatpush.msra.mxu0 0.0
    %1776 = vmatpush.msra.mxu0 0.0
    %1777 = vmatpush.msra.mxu0 0.0
    %1778 = vmatpush.msra.mxu0 0.0
    %1779 = vmatpush.msra.mxu0 0.0
    %1780 = vmatpush.msra.mxu0 0.0
    %1781 = vmatpush.msra.mxu0 0.0
    %1782 = vmatpush.msra.mxu0 0.0
    %1783 = vmatpush.msra.mxu0 0.0
    %1784 = vmatpush.msra.mxu0 0.0
    %1785 = vmatpush.msra.mxu0 0.0
    %1786 = vmatpush.msra.mxu0 0.0
    %1787 = vmatpush.msra.mxu0 0.0
    %1788 = vmatpush.msra.mxu0 0.0
    %1789 = vmatpush.msra.mxu0 0.0
    %1790 = vmatpush.msra.mxu0 %v1711
    %1791 = vmatmul.f32.gmra.mxu0 %v1773
    %v1792 = vpop.f32.mrf.mxu0
    %v1793 = vadd.f32 0.0, %v1792
    %1794 = vdwg.mxu0
    %v1795 = vadd.f32 %v1592, %v1793
    %v1796 = vmax.f32 %v1795, -1.0
    %v1797 = vmin.f32 %v1796, 1.0
    %1798 = vxpose.xlu0.b32.start [1/16] %v1711, 128
    %1799 = vxpose.xlu0.b32.cont [2/16] 0.0, 128
    %1800 = vxpose.xlu0.b32.cont [3/16] 0.0, 128
    %1801 = vxpose.xlu0.b32.cont [4/16] 0.0, 128
    %1802 = vxpose.xlu0.b32.cont [5/16] 0.0, 128
    %1803 = vxpose.xlu0.b32.cont [6/16] 0.0, 128
    %1804 = vxpose.xlu0.b32.cont [7/16] 0.0, 128
    %1805 = vxpose.xlu0.b32.cont [8/16] 0.0, 128
    %1806 = vxpose.xlu0.b32.cont [9/16] 0.0, 128
    %1807 = vxpose.xlu0.b32.cont [10/16] 0.0, 128
    %1808 = vxpose.xlu0.b32.cont [11/16] 0.0, 128
    %1809 = vxpose.xlu0.b32.cont [12/16] 0.0, 128
    %1810 = vxpose.xlu0.b32.cont [13/16] 0.0, 128
    %1811 = vxpose.xlu0.b32.cont [14/16] 0.0, 128
    %1812 = vxpose.xlu0.b32.cont [15/16] 0.0, 128
    %1813 = vxpose.xlu0.b32.end [16/16] 0.0, 128
    %v1814 = vpop.trf.xlu0
    %v1815 = vpop.trf.xlu0
    %v1816 = vpop.trf.xlu0
    %v1817 = vpop.trf.xlu0
    %v1818 = vpop.trf.xlu0
    %v1819 = vpop.trf.xlu0
    %v1820 = vpop.trf.xlu0
    %v1821 = vpop.trf.xlu0
    %v1822 = vpop.trf.xlu0
    %v1823 = vpop.trf.xlu0
    %v1824 = vpop.trf.xlu0
    %v1825 = vpop.trf.xlu0
    %v1826 = vpop.trf.xlu0
    %v1827 = vpop.trf.xlu0
    %v1828 = vpop.trf.xlu0
    %v1829 = vpop.trf.xlu0
    %v1831 = vsel %vm48, %v1814, 0
    %v1834 = vsel %vm48, %v1815, 0
    %v1837 = vsel %vm48, %v1816, 0
    %v1840 = vsel %vm48, %v1817, 0
    %1842 = vmatpush.msra.mxu0 0.0
    %1843 = vmatpush.msra.mxu0 0.0
    %1844 = vmatpush.msra.mxu0 0.0
    %1845 = vmatpush.msra.mxu0 0.0
    %1846 = vmatpush.msra.mxu0 0.0
    %1847 = vmatpush.msra.mxu0 0.0
    %1848 = vmatpush.msra.mxu0 0.0
    %1849 = vmatpush.msra.mxu0 0.0
    %1850 = vmatpush.msra.mxu0 0.0
    %1851 = vmatpush.msra.mxu0 0.0
    %1852 = vmatpush.msra.mxu0 0.0
    %1853 = vmatpush.msra.mxu0 0.0
    %1854 = vmatpush.msra.mxu0 0.0
    %1855 = vmatpush.msra.mxu0 0.0
    %1856 = vmatpush.msra.mxu0 0.0
    %1857 = vmatpush.msra.mxu0 %v1735
    %1858 = vmatmul.f32.gmra.mxu0 %v1831
    %v1859 = vpop.f32.mrf.mxu0
    %v1860 = vadd.f32 0.0, %v1859
    %1861 = vmatmul.f32.gmra.mxu0 %v1834
    %v1862 = vpop.f32.mrf.mxu0
    %v1863 = vadd.f32 0.0, %v1862
    %1864 = vmatmul.f32.gmra.mxu0 %v1837
    %v1865 = vpop.f32.mrf.mxu0
    %v1866 = vadd.f32 0.0, %v1865
    %1867 = vmatmul.f32.gmra.mxu0 %v1840
    %v1868 = vpop.f32.mrf.mxu0
    %v1869 = vadd.f32 0.0, %v1868
    %1870 = vdwg.mxu0
    %v1871 = vadd.f32 %v1674, %v1860
    %v1872 = vadd.f32 %v1675, %v1863
    %v1873 = vadd.f32 %v1676, %v1866
    %v1874 = vadd.f32 %v1677, %v1869
    %v1875 = vmax.f32 %v1871, -1.0
    %v1876 = vmax.f32 %v1872, -1.0
    %v1877 = vmax.f32 %v1873, -1.0
    %v1878 = vmax.f32 %v1874, -1.0
    %v1879 = vmin.f32 %v1875, 1.0
    %v1880 = vmin.f32 %v1876, 1.0
    %v1881 = vmin.f32 %v1877, 1.0
    %v1882 = vmin.f32 %v1878, 1.0
    %v1883 = vmul.f32 %v32, %v1797
    %v1884 = vadd.f32 %v1679, %v1883
    %v1885 = vmul.f32 %v33, %v1879
    %v1886 = vmul.f32 %v34, %v1880
    %v1887 = vmul.f32 %v35, %v1881
    %v1888 = vmul.f32 %v36, %v1882
    %v1889 = vadd.f32 %v1684, %v1885
    %v1890 = vadd.f32 %v1685, %v1886
    %v1891 = vadd.f32 %v1686, %v1887
    %v1892 = vadd.f32 %v1687, %v1888
    %s1893 = scalar_lea.vmem %s0, 72
    %v1894 = vld [vmem:[%s1893] sm:$0xff]
    %v1896 = vsel %vm48, %v1894, 0
    %1898 = vmatpush.msra.mxu0 0.0
    %1899 = vmatpush.msra.mxu0 0.0
    %1900 = vmatpush.msra.mxu0 0.0
    %1901 = vmatpush.msra.mxu0 0.0
    %1902 = vmatpush.msra.mxu0 0.0
    %1903 = vmatpush.msra.mxu0 0.0
    %1904 = vmatpush.msra.mxu0 0.0
    %1905 = vmatpush.msra.mxu0 0.0
    %1906 = vmatpush.msra.mxu0 0.0
    %1907 = vmatpush.msra.mxu0 0.0
    %1908 = vmatpush.msra.mxu0 0.0
    %1909 = vmatpush.msra.mxu0 0.0
    %1910 = vmatpush.msra.mxu0 0.0
    %1911 = vmatpush.msra.mxu0 0.0
    %1912 = vmatpush.msra.mxu0 0.0
    %1913 = vmatpush.msra.mxu0 %v1884
    %1914 = vmatmul.f32.gmra.mxu0 %v1896
    %v1915 = vpop.f32.mrf.mxu0
    %v1916 = vadd.f32 0.0, %v1915
    %1917 = vdwg.mxu0
    %v1918 = vmax.f32 %v1916, 0.0
    %v1920 = vsel %vm73, %v1918, 0
    %1922 = vmatpush.msra.mxu0 0.0
    %1923 = vmatpush.msra.mxu0 0.0
    %1924 = vmatpush.msra.mxu0 0.0
    %1925 = vmatpush.msra.mxu0 0.0
    %1926 = vmatpush.msra.mxu0 0.0
    %1927 = vmatpush.msra.mxu0 0.0
    %1928 = vmatpush.msra.mxu0 0.0
    %1929 = vmatpush.msra.mxu0 0.0
    %1930 = vmatpush.msra.mxu0 0.0
    %1931 = vmatpush.msra.mxu0 0.0
    %1932 = vmatpush.msra.mxu0 0.0
    %1933 = vmatpush.msra.mxu0 0.0
    %1934 = vmatpush.msra.mxu0 %v1892
    %1935 = vmatpush.msra.mxu0 %v1891
    %1936 = vmatpush.msra.mxu0 %v1890
    %1937 = vmatpush.msra.mxu0 %v1889
    %1938 = vmatmul.f32.gmra.mxu0 %v1920
    %v1939 = vpop.f32.mrf.mxu0
    %v1940 = vadd.f32 0.0, %v1939
    %1941 = vdwg.mxu0
    %v1942 = vtanh.pop %v1940
    %s1943 = scalar_lea.vmem %s7, 72
    %1944 = vst.msk [vmem:[%s1943] sm:$0xff] %vm98, %v1942
    %1945 = vxpose.xlu0.b32.start [1/16] %v1894, 128
    %1946 = vxpose.xlu0.b32.cont [2/16] 0.0, 128
    %1947 = vxpose.xlu0.b32.cont [3/16] 0.0, 128
    %1948 = vxpose.xlu0.b32.cont [4/16] 0.0, 128
    %1949 = vxpose.xlu0.b32.cont [5/16] 0.0, 128
    %1950 = vxpose.xlu0.b32.cont [6/16] 0.0, 128
    %1951 = vxpose.xlu0.b32.cont [7/16] 0.0, 128
    %1952 = vxpose.xlu0.b32.cont [8/16] 0.0, 128
    %1953 = vxpose.xlu0.b32.cont [9/16] 0.0, 128
    %1954 = vxpose.xlu0.b32.cont [10/16] 0.0, 128
    %1955 = vxpose.xlu0.b32.cont [11/16] 0.0, 128
    %1956 = vxpose.xlu0.b32.cont [12/16] 0.0, 128
    %1957 = vxpose.xlu0.b32.cont [13/16] 0.0, 128
    %1958 = vxpose.xlu0.b32.cont [14/16] 0.0, 128
    %1959 = vxpose.xlu0.b32.cont [15/16] 0.0, 128
    %1960 = vxpose.xlu0.b32.end [16/16] 0.0, 128
    %v1961 = vpop.trf.xlu0
    %v1962 = vpop.trf.xlu0
    %v1963 = vpop.trf.xlu0
    %v1964 = vpop.trf.xlu0
    %v1965 = vpop.trf.xlu0
    %v1966 = vpop.trf.xlu0
    %v1967 = vpop.trf.xlu0
    %v1968 = vpop.trf.xlu0
    %v1969 = vpop.trf.xlu0
    %v1970 = vpop.trf.xlu0
    %v1971 = vpop.trf.xlu0
    %v1972 = vpop.trf.xlu0
    %v1973 = vpop.trf.xlu0
    %v1974 = vpop.trf.xlu0
    %v1975 = vpop.trf.xlu0
    %v1976 = vpop.trf.xlu0
    %v1978 = vsel %vm48, %v1961, 0
    %1980 = vmatpush.msra.mxu0 0.0
    %1981 = vmatpush.msra.mxu0 0.0
    %1982 = vmatpush.msra.mxu0 0.0
    %1983 = vmatpush.msra.mxu0 0.0
    %1984 = vmatpush.msra.mxu0 0.0
    %1985 = vmatpush.msra.mxu0 0.0
    %1986 = vmatpush.msra.mxu0 0.0
    %1987 = vmatpush.msra.mxu0 0.0
    %1988 = vmatpush.msra.mxu0 0.0
    %1989 = vmatpush.msra.mxu0 0.0
    %1990 = vmatpush.msra.mxu0 0.0
    %1991 = vmatpush.msra.mxu0 0.0
    %1992 = vmatpush.msra.mxu0 0.0
    %1993 = vmatpush.msra.mxu0 0.0
    %1994 = vmatpush.msra.mxu0 0.0
    %1995 = vmatpush.msra.mxu0 %v1916
    %1996 = vmatmul.f32.gmra.mxu0 %v1978
    %v1997 = vpop.f32.mrf.mxu0
    %v1998 = vadd.f32 0.0, %v1997
    %1999 = vdwg.mxu0
    %v2000 = vadd.f32 %v1797, %v1998
    %v2001 = vmax.f32 %v2000, -1.0
    %v2002 = vmin.f32 %v2001, 1.0
    %2003 = vxpose.xlu0.b32.start [1/16] %v1916, 128
    %2004 = vxpose.xlu0.b32.cont [2/16] 0.0, 128
    %2005 = vxpose.xlu0.b32.cont [3/16] 0.0, 128
    %2006 = vxpose.xlu0.b32.cont [4/16] 0.0, 128
    %2007 = vxpose.xlu0.b32.cont [5/16] 0.0, 128
    %2008 = vxpose.xlu0.b32.cont [6/16] 0.0, 128
    %2009 = vxpose.xlu0.b32.cont [7/16] 0.0, 128
    %2010 = vxpose.xlu0.b32.cont [8/16] 0.0, 128
    %2011 = vxpose.xlu0.b32.cont [9/16] 0.0, 128
    %2012 = vxpose.xlu0.b32.cont [10/16] 0.0, 128
    %2013 = vxpose.xlu0.b32.cont [11/16] 0.0, 128
    %2014 = vxpose.xlu0.b32.cont [12/16] 0.0, 128
    %2015 = vxpose.xlu0.b32.cont [13/16] 0.0, 128
    %2016 = vxpose.xlu0.b32.cont [14/16] 0.0, 128
    %2017 = vxpose.xlu0.b32.cont [15/16] 0.0, 128
    %2018 = vxpose.xlu0.b32.end [16/16] 0.0, 128
    %v2019 = vpop.trf.xlu0
    %v2020 = vpop.trf.xlu0
    %v2021 = vpop.trf.xlu0
    %v2022 = vpop.trf.xlu0
    %v2023 = vpop.trf.xlu0
    %v2024 = vpop.trf.xlu0
    %v2025 = vpop.trf.xlu0
    %v2026 = vpop.trf.xlu0
    %v2027 = vpop.trf.xlu0
    %v2028 = vpop.trf.xlu0
    %v2029 = vpop.trf.xlu0
    %v2030 = vpop.trf.xlu0
    %v2031 = vpop.trf.xlu0
    %v2032 = vpop.trf.xlu0
    %v2033 = vpop.trf.xlu0
    %v2034 = vpop.trf.xlu0
    %v2036 = vsel %vm48, %v2019, 0
    %v2039 = vsel %vm48, %v2020, 0
    %v2042 = vsel %vm48, %v2021, 0
    %v2045 = vsel %vm48, %v2022, 0
    %2047 = vmatpush.msra.mxu0 0.0
    %2048 = vmatpush.msra.mxu0 0.0
    %2049 = vmatpush.msra.mxu0 0.0
    %2050 = vmatpush.msra.mxu0 0.0
    %2051 = vmatpush.msra.mxu0 0.0
    %2052 = vmatpush.msra.mxu0 0.0
    %2053 = vmatpush.msra.mxu0 0.0
    %2054 = vmatpush.msra.mxu0 0.0
    %2055 = vmatpush.msra.mxu0 0.0
    %2056 = vmatpush.msra.mxu0 0.0
    %2057 = vmatpush.msra.mxu0 0.0
    %2058 = vmatpush.msra.mxu0 0.0
    %2059 = vmatpush.msra.mxu0 0.0
    %2060 = vmatpush.msra.mxu0 0.0
    %2061 = vmatpush.msra.mxu0 0.0
    %2062 = vmatpush.msra.mxu0 %v1940
    %2063 = vmatmul.f32.gmra.mxu0 %v2036
    %v2064 = vpop.f32.mrf.mxu0
    %v2065 = vadd.f32 0.0, %v2064
    %2066 = vmatmul.f32.gmra.mxu0 %v2039
    %v2067 = vpop.f32.mrf.mxu0
    %v2068 = vadd.f32 0.0, %v2067
    %2069 = vmatmul.f32.gmra.mxu0 %v2042
    %v2070 = vpop.f32.mrf.mxu0
    %v2071 = vadd.f32 0.0, %v2070
    %2072 = vmatmul.f32.gmra.mxu0 %v2045
    %v2073 = vpop.f32.mrf.mxu0
    %v2074 = vadd.f32 0.0, %v2073
    %2075 = vdwg.mxu0
    %v2076 = vadd.f32 %v1879, %v2065
    %v2077 = vadd.f32 %v1880, %v2068
    %v2078 = vadd.f32 %v1881, %v2071
    %v2079 = vadd.f32 %v1882, %v2074
    %v2080 = vmax.f32 %v2076, -1.0
    %v2081 = vmax.f32 %v2077, -1.0
    %v2082 = vmax.f32 %v2078, -1.0
    %v2083 = vmax.f32 %v2079, -1.0
    %v2084 = vmin.f32 %v2080, 1.0
    %v2085 = vmin.f32 %v2081, 1.0
    %v2086 = vmin.f32 %v2082, 1.0
    %v2087 = vmin.f32 %v2083, 1.0
    %v2088 = vmul.f32 %v32, %v2002
    %v2089 = vadd.f32 %v1884, %v2088
    %v2090 = vmul.f32 %v33, %v2084
    %v2091 = vmul.f32 %v34, %v2085
    %v2092 = vmul.f32 %v35, %v2086
    %v2093 = vmul.f32 %v36, %v2087
    %v2094 = vadd.f32 %v1889, %v2090
    %v2095 = vadd.f32 %v1890, %v2091
    %v2096 = vadd.f32 %v1891, %v2092
    %v2097 = vadd.f32 %v1892, %v2093
    %s2098 = scalar_lea.vmem %s0, 80
    %v2099 = vld [vmem:[%s2098] sm:$0xff]
    %v2101 = vsel %vm48, %v2099, 0
    %2103 = vmatpush.msra.mxu0 0.0
    %2104 = vmatpush.msra.mxu0 0.0
    %2105 = vmatpush.msra.mxu0 0.0
    %2106 = vmatpush.msra.mxu0 0.0
    %2107 = vmatpush.msra.mxu0 0.0
    %2108 = vmatpush.msra.mxu0 0.0
    %2109 = vmatpush.msra.mxu0 0.0
    %2110 = vmatpush.msra.mxu0 0.0
    %2111 = vmatpush.msra.mxu0 0.0
    %2112 = vmatpush.msra.mxu0 0.0
    %2113 = vmatpush.msra.mxu0 0.0
    %2114 = vmatpush.msra.mxu0 0.0
    %2115 = vmatpush.msra.mxu0 0.0
    %2116 = vmatpush.msra.mxu0 0.0
    %2117 = vmatpush.msra.mxu0 0.0
    %2118 = vmatpush.msra.mxu0 %v2089
    %2119 = vmatmul.f32.gmra.mxu0 %v2101
    %v2120 = vpop.f32.mrf.mxu0
    %v2121 = vadd.f32 0.0, %v2120
    %2122 = vdwg.mxu0
    %v2123 = vmax.f32 %v2121, 0.0
    %v2125 = vsel %vm73, %v2123, 0
    %2127 = vmatpush.msra.mxu0 0.0
    %2128 = vmatpush.msra.mxu0 0.0
    %2129 = vmatpush.msra.mxu0 0.0
    %2130 = vmatpush.msra.mxu0 0.0
    %2131 = vmatpush.msra.mxu0 0.0
    %2132 = vmatpush.msra.mxu0 0.0
    %2133 = vmatpush.msra.mxu0 0.0
    %2134 = vmatpush.msra.mxu0 0.0
    %2135 = vmatpush.msra.mxu0 0.0
    %2136 = vmatpush.msra.mxu0 0.0
    %2137 = vmatpush.msra.mxu0 0.0
    %2138 = vmatpush.msra.mxu0 0.0
    %2139 = vmatpush.msra.mxu0 %v2097
    %2140 = vmatpush.msra.mxu0 %v2096
    %2141 = vmatpush.msra.mxu0 %v2095
    %2142 = vmatpush.msra.mxu0 %v2094
    %2143 = vmatmul.f32.gmra.mxu0 %v2125
    %v2144 = vpop.f32.mrf.mxu0
    %v2145 = vadd.f32 0.0, %v2144
    %2146 = vdwg.mxu0
    %v2147 = vtanh.pop %v2145
    %s2148 = scalar_lea.vmem %s7, 80
    %2149 = vst.msk [vmem:[%s2148] sm:$0xff] %vm98, %v2147
    %2150 = vxpose.xlu0.b32.start [1/16] %v2099, 128
    %2151 = vxpose.xlu0.b32.cont [2/16] 0.0, 128
    %2152 = vxpose.xlu0.b32.cont [3/16] 0.0, 128
    %2153 = vxpose.xlu0.b32.cont [4/16] 0.0, 128
    %2154 = vxpose.xlu0.b32.cont [5/16] 0.0, 128
    %2155 = vxpose.xlu0.b32.cont [6/16] 0.0, 128
    %2156 = vxpose.xlu0.b32.cont [7/16] 0.0, 128
    %2157 = vxpose.xlu0.b32.cont [8/16] 0.0, 128
    %2158 = vxpose.xlu0.b32.cont [9/16] 0.0, 128
    %2159 = vxpose.xlu0.b32.cont [10/16] 0.0, 128
    %2160 = vxpose.xlu0.b32.cont [11/16] 0.0, 128
    %2161 = vxpose.xlu0.b32.cont [12/16] 0.0, 128
    %2162 = vxpose.xlu0.b32.cont [13/16] 0.0, 128
    %2163 = vxpose.xlu0.b32.cont [14/16] 0.0, 128
    %2164 = vxpose.xlu0.b32.cont [15/16] 0.0, 128
    %2165 = vxpose.xlu0.b32.end [16/16] 0.0, 128
    %v2166 = vpop.trf.xlu0
    %v2167 = vpop.trf.xlu0
    %v2168 = vpop.trf.xlu0
    %v2169 = vpop.trf.xlu0
    %v2170 = vpop.trf.xlu0
    %v2171 = vpop.trf.xlu0
    %v2172 = vpop.trf.xlu0
    %v2173 = vpop.trf.xlu0
    %v2174 = vpop.trf.xlu0
    %v2175 = vpop.trf.xlu0
    %v2176 = vpop.trf.xlu0
    %v2177 = vpop.trf.xlu0
    %v2178 = vpop.trf.xlu0
    %v2179 = vpop.trf.xlu0
    %v2180 = vpop.trf.xlu0
    %v2181 = vpop.trf.xlu0
    %v2183 = vsel %vm48, %v2166, 0
    %2185 = vmatpush.msra.mxu0 0.0
    %2186 = vmatpush.msra.mxu0 0.0
    %2187 = vmatpush.msra.mxu0 0.0
    %2188 = vmatpush.msra.mxu0 0.0
    %2189 = vmatpush.msra.mxu0 0.0
    %2190 = vmatpush.msra.mxu0 0.0
    %2191 = vmatpush.msra.mxu0 0.0
    %2192 = vmatpush.msra.mxu0 0.0
    %2193 = vmatpush.msra.mxu0 0.0
    %2194 = vmatpush.msra.mxu0 0.0
    %2195 = vmatpush.msra.mxu0 0.0
    %2196 = vmatpush.msra.mxu0 0.0
    %2197 = vmatpush.msra.mxu0 0.0
    %2198 = vmatpush.msra.mxu0 0.0
    %2199 = vmatpush.msra.mxu0 0.0
    %2200 = vmatpush.msra.mxu0 %v2121
    %2201 = vmatmul.f32.gmra.mxu0 %v2183
    %v2202 = vpop.f32.mrf.mxu0
    %v2203 = vadd.f32 0.0, %v2202
    %2204 = vdwg.mxu0
    %v2205 = vadd.f32 %v2002, %v2203
    %v2206 = vmax.f32 %v2205, -1.0
    %v2207 = vmin.f32 %v2206, 1.0
    %2208 = vxpose.xlu0.b32.start [1/16] %v2121, 128
    %2209 = vxpose.xlu0.b32.cont [2/16] 0.0, 128
    %2210 = vxpose.xlu0.b32.cont [3/16] 0.0, 128
    %2211 = vxpose.xlu0.b32.cont [4/16] 0.0, 128
    %2212 = vxpose.xlu0.b32.cont [5/16] 0.0, 128
    %2213 = vxpose.xlu0.b32.cont [6/16] 0.0, 128
    %2214 = vxpose.xlu0.b32.cont [7/16] 0.0, 128
    %2215 = vxpose.xlu0.b32.cont [8/16] 0.0, 128
    %2216 = vxpose.xlu0.b32.cont [9/16] 0.0, 128
    %2217 = vxpose.xlu0.b32.cont [10/16] 0.0, 128
    %2218 = vxpose.xlu0.b32.cont [11/16] 0.0, 128
    %2219 = vxpose.xlu0.b32.cont [12/16] 0.0, 128
    %2220 = vxpose.xlu0.b32.cont [13/16] 0.0, 128
    %2221 = vxpose.xlu0.b32.cont [14/16] 0.0, 128
    %2222 = vxpose.xlu0.b32.cont [15/16] 0.0, 128
    %2223 = vxpose.xlu0.b32.end [16/16] 0.0, 128
    %v2224 = vpop.trf.xlu0
    %v2225 = vpop.trf.xlu0
    %v2226 = vpop.trf.xlu0
    %v2227 = vpop.trf.xlu0
    %v2228 = vpop.trf.xlu0
    %v2229 = vpop.trf.xlu0
    %v2230 = vpop.trf.xlu0
    %v2231 = vpop.trf.xlu0
    %v2232 = vpop.trf.xlu0
    %v2233 = vpop.trf.xlu0
    %v2234 = vpop.trf.xlu0
    %v2235 = vpop.trf.xlu0
    %v2236 = vpop.trf.xlu0
    %v2237 = vpop.trf.xlu0
    %v2238 = vpop.trf.xlu0
    %v2239 = vpop.trf.xlu0
    %v2241 = vsel %vm48, %v2224, 0
    %v2244 = vsel %vm48, %v2225, 0
    %v2247 = vsel %vm48, %v2226, 0
    %v2250 = vsel %vm48, %v2227, 0
    %2252 = vmatpush.msra.mxu0 0.0
    %2253 = vmatpush.msra.mxu0 0.0
    %2254 = vmatpush.msra.mxu0 0.0
    %2255 = vmatpush.msra.mxu0 0.0
    %2256 = vmatpush.msra.mxu0 0.0
    %2257 = vmatpush.msra.mxu0 0.0
    %2258 = vmatpush.msra.mxu0 0.0
    %2259 = vmatpush.msra.mxu0 0.0
    %2260 = vmatpush.msra.mxu0 0.0
    %2261 = vmatpush.msra.mxu0 0.0
    %2262 = vmatpush.msra.mxu0 0.0
    %2263 = vmatpush.msra.mxu0 0.0
    %2264 = vmatpush.msra.mxu0 0.0
    %2265 = vmatpush.msra.mxu0 0.0
    %2266 = vmatpush.msra.mxu0 0.0
    %2267 = vmatpush.msra.mxu0 %v2145
    %2268 = vmatmul.f32.gmra.mxu0 %v2241
    %v2269 = vpop.f32.mrf.mxu0
    %v2270 = vadd.f32 0.0, %v2269
    %2271 = vmatmul.f32.gmra.mxu0 %v2244
    %v2272 = vpop.f32.mrf.mxu0
    %v2273 = vadd.f32 0.0, %v2272
    %2274 = vmatmul.f32.gmra.mxu0 %v2247
    %v2275 = vpop.f32.mrf.mxu0
    %v2276 = vadd.f32 0.0, %v2275
    %2277 = vmatmul.f32.gmra.mxu0 %v2250
    %v2278 = vpop.f32.mrf.mxu0
    %v2279 = vadd.f32 0.0, %v2278
    %2280 = vdwg.mxu0
    %v2281 = vadd.f32 %v2084, %v2270
    %v2282 = vadd.f32 %v2085, %v2273
    %v2283 = vadd.f32 %v2086, %v2276
    %v2284 = vadd.f32 %v2087, %v2279
    %v2285 = vmax.f32 %v2281, -1.0
    %v2286 = vmax.f32 %v2282, -1.0
    %v2287 = vmax.f32 %v2283, -1.0
    %v2288 = vmax.f32 %v2284, -1.0
    %v2289 = vmin.f32 %v2285, 1.0
    %v2290 = vmin.f32 %v2286, 1.0
    %v2291 = vmin.f32 %v2287, 1.0
    %v2292 = vmin.f32 %v2288, 1.0
    %v2293 = vmul.f32 %v32, %v2207
    %v2294 = vadd.f32 %v2089, %v2293
    %v2295 = vmul.f32 %v33, %v2289
    %v2296 = vmul.f32 %v34, %v2290
    %v2297 = vmul.f32 %v35, %v2291
    %v2298 = vmul.f32 %v36, %v2292
    %v2299 = vadd.f32 %v2094, %v2295
    %v2300 = vadd.f32 %v2095, %v2296
    %v2301 = vadd.f32 %v2096, %v2297
    %v2302 = vadd.f32 %v2097, %v2298
    %s2303 = scalar_lea.vmem %s0, 88
    %v2304 = vld [vmem:[%s2303] sm:$0xff]
    %v2306 = vsel %vm48, %v2304, 0
    %2308 = vmatpush.msra.mxu0 0.0
    %2309 = vmatpush.msra.mxu0 0.0
    %2310 = vmatpush.msra.mxu0 0.0
    %2311 = vmatpush.msra.mxu0 0.0
    %2312 = vmatpush.msra.mxu0 0.0
    %2313 = vmatpush.msra.mxu0 0.0
    %2314 = vmatpush.msra.mxu0 0.0
    %2315 = vmatpush.msra.mxu0 0.0
    %2316 = vmatpush.msra.mxu0 0.0
    %2317 = vmatpush.msra.mxu0 0.0
    %2318 = vmatpush.msra.mxu0 0.0
    %2319 = vmatpush.msra.mxu0 0.0
    %2320 = vmatpush.msra.mxu0 0.0
    %2321 = vmatpush.msra.mxu0 0.0
    %2322 = vmatpush.msra.mxu0 0.0
    %2323 = vmatpush.msra.mxu0 %v2294
    %2324 = vmatmul.f32.gmra.mxu0 %v2306
    %v2325 = vpop.f32.mrf.mxu0
    %v2326 = vadd.f32 0.0, %v2325
    %2327 = vdwg.mxu0
    %v2328 = vmax.f32 %v2326, 0.0
    %v2330 = vsel %vm73, %v2328, 0
    %2332 = vmatpush.msra.mxu0 0.0
    %2333 = vmatpush.msra.mxu0 0.0
    %2334 = vmatpush.msra.mxu0 0.0
    %2335 = vmatpush.msra.mxu0 0.0
    %2336 = vmatpush.msra.mxu0 0.0
    %2337 = vmatpush.msra.mxu0 0.0
    %2338 = vmatpush.msra.mxu0 0.0
    %2339 = vmatpush.msra.mxu0 0.0
    %2340 = vmatpush.msra.mxu0 0.0
    %2341 = vmatpush.msra.mxu0 0.0
    %2342 = vmatpush.msra.mxu0 0.0
    %2343 = vmatpush.msra.mxu0 0.0
    %2344 = vmatpush.msra.mxu0 %v2302
    %2345 = vmatpush.msra.mxu0 %v2301
    %2346 = vmatpush.msra.mxu0 %v2300
    %2347 = vmatpush.msra.mxu0 %v2299
    %2348 = vmatmul.f32.gmra.mxu0 %v2330
    %v2349 = vpop.f32.mrf.mxu0
    %v2350 = vadd.f32 0.0, %v2349
    %2351 = vdwg.mxu0
    %v2352 = vtanh.pop %v2350
    %s2353 = scalar_lea.vmem %s7, 88
    %2354 = vst.msk [vmem:[%s2353] sm:$0xff] %vm98, %v2352
    %2355 = vxpose.xlu0.b32.start [1/16] %v2304, 128
    %2356 = vxpose.xlu0.b32.cont [2/16] 0.0, 128
    %2357 = vxpose.xlu0.b32.cont [3/16] 0.0, 128
    %2358 = vxpose.xlu0.b32.cont [4/16] 0.0, 128
    %2359 = vxpose.xlu0.b32.cont [5/16] 0.0, 128
    %2360 = vxpose.xlu0.b32.cont [6/16] 0.0, 128
    %2361 = vxpose.xlu0.b32.cont [7/16] 0.0, 128
    %2362 = vxpose.xlu0.b32.cont [8/16] 0.0, 128
    %2363 = vxpose.xlu0.b32.cont [9/16] 0.0, 128
    %2364 = vxpose.xlu0.b32.cont [10/16] 0.0, 128
    %2365 = vxpose.xlu0.b32.cont [11/16] 0.0, 128
    %2366 = vxpose.xlu0.b32.cont [12/16] 0.0, 128
    %2367 = vxpose.xlu0.b32.cont [13/16] 0.0, 128
    %2368 = vxpose.xlu0.b32.cont [14/16] 0.0, 128
    %2369 = vxpose.xlu0.b32.cont [15/16] 0.0, 128
    %2370 = vxpose.xlu0.b32.end [16/16] 0.0, 128
    %v2371 = vpop.trf.xlu0
    %v2372 = vpop.trf.xlu0
    %v2373 = vpop.trf.xlu0
    %v2374 = vpop.trf.xlu0
    %v2375 = vpop.trf.xlu0
    %v2376 = vpop.trf.xlu0
    %v2377 = vpop.trf.xlu0
    %v2378 = vpop.trf.xlu0
    %v2379 = vpop.trf.xlu0
    %v2380 = vpop.trf.xlu0
    %v2381 = vpop.trf.xlu0
    %v2382 = vpop.trf.xlu0
    %v2383 = vpop.trf.xlu0
    %v2384 = vpop.trf.xlu0
    %v2385 = vpop.trf.xlu0
    %v2386 = vpop.trf.xlu0
    %v2388 = vsel %vm48, %v2371, 0
    %2390 = vmatpush.msra.mxu0 0.0
    %2391 = vmatpush.msra.mxu0 0.0
    %2392 = vmatpush.msra.mxu0 0.0
    %2393 = vmatpush.msra.mxu0 0.0
    %2394 = vmatpush.msra.mxu0 0.0
    %2395 = vmatpush.msra.mxu0 0.0
    %2396 = vmatpush.msra.mxu0 0.0
    %2397 = vmatpush.msra.mxu0 0.0
    %2398 = vmatpush.msra.mxu0 0.0
    %2399 = vmatpush.msra.mxu0 0.0
    %2400 = vmatpush.msra.mxu0 0.0
    %2401 = vmatpush.msra.mxu0 0.0
    %2402 = vmatpush.msra.mxu0 0.0
    %2403 = vmatpush.msra.mxu0 0.0
    %2404 = vmatpush.msra.mxu0 0.0
    %2405 = vmatpush.msra.mxu0 %v2326
    %2406 = vmatmul.f32.gmra.mxu0 %v2388
    %v2407 = vpop.f32.mrf.mxu0
    %v2408 = vadd.f32 0.0, %v2407
    %2409 = vdwg.mxu0
    %v2410 = vadd.f32 %v2207, %v2408
    %v2411 = vmax.f32 %v2410, -1.0
    %v2412 = vmin.f32 %v2411, 1.0
    %2413 = vxpose.xlu0.b32.start [1/16] %v2326, 128
    %2414 = vxpose.xlu0.b32.cont [2/16] 0.0, 128
    %2415 = vxpose.xlu0.b32.cont [3/16] 0.0, 128
    %2416 = vxpose.xlu0.b32.cont [4/16] 0.0, 128
    %2417 = vxpose.xlu0.b32.cont [5/16] 0.0, 128
    %2418 = vxpose.xlu0.b32.cont [6/16] 0.0, 128
    %2419 = vxpose.xlu0.b32.cont [7/16] 0.0, 128
    %2420 = vxpose.xlu0.b32.cont [8/16] 0.0, 128
    %2421 = vxpose.xlu0.b32.cont [9/16] 0.0, 128
    %2422 = vxpose.xlu0.b32.cont [10/16] 0.0, 128
    %2423 = vxpose.xlu0.b32.cont [11/16] 0.0, 128
    %2424 = vxpose.xlu0.b32.cont [12/16] 0.0, 128
    %2425 = vxpose.xlu0.b32.cont [13/16] 0.0, 128
    %2426 = vxpose.xlu0.b32.cont [14/16] 0.0, 128
    %2427 = vxpose.xlu0.b32.cont [15/16] 0.0, 128
    %2428 = vxpose.xlu0.b32.end [16/16] 0.0, 128
    %v2429 = vpop.trf.xlu0
    %v2430 = vpop.trf.xlu0
    %v2431 = vpop.trf.xlu0
    %v2432 = vpop.trf.xlu0
    %v2433 = vpop.trf.xlu0
    %v2434 = vpop.trf.xlu0
    %v2435 = vpop.trf.xlu0
    %v2436 = vpop.trf.xlu0
    %v2437 = vpop.trf.xlu0
    %v2438 = vpop.trf.xlu0
    %v2439 = vpop.trf.xlu0
    %v2440 = vpop.trf.xlu0
    %v2441 = vpop.trf.xlu0
    %v2442 = vpop.trf.xlu0
    %v2443 = vpop.trf.xlu0
    %v2444 = vpop.trf.xlu0
    %v2446 = vsel %vm48, %v2429, 0
    %v2449 = vsel %vm48, %v2430, 0
    %v2452 = vsel %vm48, %v2431, 0
    %v2455 = vsel %vm48, %v2432, 0
    %2457 = vmatpush.msra.mxu0 0.0
    %2458 = vmatpush.msra.mxu0 0.0
    %2459 = vmatpush.msra.mxu0 0.0
    %2460 = vmatpush.msra.mxu0 0.0
    %2461 = vmatpush.msra.mxu0 0.0
    %2462 = vmatpush.msra.mxu0 0.0
    %2463 = vmatpush.msra.mxu0 0.0
    %2464 = vmatpush.msra.mxu0 0.0
    %2465 = vmatpush.msra.mxu0 0.0
    %2466 = vmatpush.msra.mxu0 0.0
    %2467 = vmatpush.msra.mxu0 0.0
    %2468 = vmatpush.msra.mxu0 0.0
    %2469 = vmatpush.msra.mxu0 0.0
    %2470 = vmatpush.msra.mxu0 0.0
    %2471 = vmatpush.msra.mxu0 0.0
    %2472 = vmatpush.msra.mxu0 %v2350
    %2473 = vmatmul.f32.gmra.mxu0 %v2446
    %v2474 = vpop.f32.mrf.mxu0
    %v2475 = vadd.f32 0.0, %v2474
    %2476 = vmatmul.f32.gmra.mxu0 %v2449
    %v2477 = vpop.f32.mrf.mxu0
    %v2478 = vadd.f32 0.0, %v2477
    %2479 = vmatmul.f32.gmra.mxu0 %v2452
    %v2480 = vpop.f32.mrf.mxu0
    %v2481 = vadd.f32 0.0, %v2480
    %2482 = vmatmul.f32.gmra.mxu0 %v2455
    %v2483 = vpop.f32.mrf.mxu0
    %v2484 = vadd.f32 0.0, %v2483
    %2485 = vdwg.mxu0
    %v2486 = vadd.f32 %v2289, %v2475
    %v2487 = vadd.f32 %v2290, %v2478
    %v2488 = vadd.f32 %v2291, %v2481
    %v2489 = vadd.f32 %v2292, %v2484
    %v2490 = vmax.f32 %v2486, -1.0
    %v2491 = vmax.f32 %v2487, -1.0
    %v2492 = vmax.f32 %v2488, -1.0
    %v2493 = vmax.f32 %v2489, -1.0
    %v2494 = vmin.f32 %v2490, 1.0
    %v2495 = vmin.f32 %v2491, 1.0
    %v2496 = vmin.f32 %v2492, 1.0
    %v2497 = vmin.f32 %v2493, 1.0
    %v2498 = vmul.f32 %v32, %v2412
    %v2499 = vadd.f32 %v2294, %v2498
    %v2500 = vmul.f32 %v33, %v2494
    %v2501 = vmul.f32 %v34, %v2495
    %v2502 = vmul.f32 %v35, %v2496
    %v2503 = vmul.f32 %v36, %v2497
    %v2504 = vadd.f32 %v2299, %v2500
    %v2505 = vadd.f32 %v2300, %v2501
    %v2506 = vadd.f32 %v2301, %v2502
    %v2507 = vadd.f32 %v2302, %v2503
    %s2508 = scalar_lea.vmem %s0, 96
    %v2509 = vld [vmem:[%s2508] sm:$0xff]
    %v2511 = vsel %vm48, %v2509, 0
    %2513 = vmatpush.msra.mxu0 0.0
    %2514 = vmatpush.msra.mxu0 0.0
    %2515 = vmatpush.msra.mxu0 0.0
    %2516 = vmatpush.msra.mxu0 0.0
    %2517 = vmatpush.msra.mxu0 0.0
    %2518 = vmatpush.msra.mxu0 0.0
    %2519 = vmatpush.msra.mxu0 0.0
    %2520 = vmatpush.msra.mxu0 0.0
    %2521 = vmatpush.msra.mxu0 0.0
    %2522 = vmatpush.msra.mxu0 0.0
    %2523 = vmatpush.msra.mxu0 0.0
    %2524 = vmatpush.msra.mxu0 0.0
    %2525 = vmatpush.msra.mxu0 0.0
    %2526 = vmatpush.msra.mxu0 0.0
    %2527 = vmatpush.msra.mxu0 0.0
    %2528 = vmatpush.msra.mxu0 %v2499
    %2529 = vmatmul.f32.gmra.mxu0 %v2511
    %v2530 = vpop.f32.mrf.mxu0
    %v2531 = vadd.f32 0.0, %v2530
    %2532 = vdwg.mxu0
    %v2533 = vmax.f32 %v2531, 0.0
    %v2535 = vsel %vm73, %v2533, 0
    %2537 = vmatpush.msra.mxu0 0.0
    %2538 = vmatpush.msra.mxu0 0.0
    %2539 = vmatpush.msra.mxu0 0.0
    %2540 = vmatpush.msra.mxu0 0.0
    %2541 = vmatpush.msra.mxu0 0.0
    %2542 = vmatpush.msra.mxu0 0.0
    %2543 = vmatpush.msra.mxu0 0.0
    %2544 = vmatpush.msra.mxu0 0.0
    %2545 = vmatpush.msra.mxu0 0.0
    %2546 = vmatpush.msra.mxu0 0.0
    %2547 = vmatpush.msra.mxu0 0.0
    %2548 = vmatpush.msra.mxu0 0.0
    %2549 = vmatpush.msra.mxu0 %v2507
    %2550 = vmatpush.msra.mxu0 %v2506
    %2551 = vmatpush.msra.mxu0 %v2505
    %2552 = vmatpush.msra.mxu0 %v2504
    %2553 = vmatmul.f32.gmra.mxu0 %v2535
    %v2554 = vpop.f32.mrf.mxu0
    %v2555 = vadd.f32 0.0, %v2554
    %2556 = vdwg.mxu0
    %v2557 = vtanh.pop %v2555
    %s2558 = scalar_lea.vmem %s7, 96
    %2559 = vst.msk [vmem:[%s2558] sm:$0xff] %vm98, %v2557
    %2560 = vxpose.xlu0.b32.start [1/16] %v2509, 128
    %2561 = vxpose.xlu0.b32.cont [2/16] 0.0, 128
    %2562 = vxpose.xlu0.b32.cont [3/16] 0.0, 128
    %2563 = vxpose.xlu0.b32.cont [4/16] 0.0, 128
    %2564 = vxpose.xlu0.b32.cont [5/16] 0.0, 128
    %2565 = vxpose.xlu0.b32.cont [6/16] 0.0, 128
    %2566 = vxpose.xlu0.b32.cont [7/16] 0.0, 128
    %2567 = vxpose.xlu0.b32.cont [8/16] 0.0, 128
    %2568 = vxpose.xlu0.b32.cont [9/16] 0.0, 128
    %2569 = vxpose.xlu0.b32.cont [10/16] 0.0, 128
    %2570 = vxpose.xlu0.b32.cont [11/16] 0.0, 128
    %2571 = vxpose.xlu0.b32.cont [12/16] 0.0, 128
    %2572 = vxpose.xlu0.b32.cont [13/16] 0.0, 128
    %2573 = vxpose.xlu0.b32.cont [14/16] 0.0, 128
    %2574 = vxpose.xlu0.b32.cont [15/16] 0.0, 128
    %2575 = vxpose.xlu0.b32.end [16/16] 0.0, 128
    %v2576 = vpop.trf.xlu0
    %v2577 = vpop.trf.xlu0
    %v2578 = vpop.trf.xlu0
    %v2579 = vpop.trf.xlu0
    %v2580 = vpop.trf.xlu0
    %v2581 = vpop.trf.xlu0
    %v2582 = vpop.trf.xlu0
    %v2583 = vpop.trf.xlu0
    %v2584 = vpop.trf.xlu0
    %v2585 = vpop.trf.xlu0
    %v2586 = vpop.trf.xlu0
    %v2587 = vpop.trf.xlu0
    %v2588 = vpop.trf.xlu0
    %v2589 = vpop.trf.xlu0
    %v2590 = vpop.trf.xlu0
    %v2591 = vpop.trf.xlu0
    %v2593 = vsel %vm48, %v2576, 0
    %2595 = vmatpush.msra.mxu0 0.0
    %2596 = vmatpush.msra.mxu0 0.0
    %2597 = vmatpush.msra.mxu0 0.0
    %2598 = vmatpush.msra.mxu0 0.0
    %2599 = vmatpush.msra.mxu0 0.0
    %2600 = vmatpush.msra.mxu0 0.0
    %2601 = vmatpush.msra.mxu0 0.0
    %2602 = vmatpush.msra.mxu0 0.0
    %2603 = vmatpush.msra.mxu0 0.0
    %2604 = vmatpush.msra.mxu0 0.0
    %2605 = vmatpush.msra.mxu0 0.0
    %2606 = vmatpush.msra.mxu0 0.0
    %2607 = vmatpush.msra.mxu0 0.0
    %2608 = vmatpush.msra.mxu0 0.0
    %2609 = vmatpush.msra.mxu0 0.0
    %2610 = vmatpush.msra.mxu0 %v2531
    %2611 = vmatmul.f32.gmra.mxu0 %v2593
    %v2612 = vpop.f32.mrf.mxu0
    %v2613 = vadd.f32 0.0, %v2612
    %2614 = vdwg.mxu0
    %v2615 = vadd.f32 %v2412, %v2613
    %v2616 = vmax.f32 %v2615, -1.0
    %v2617 = vmin.f32 %v2616, 1.0
    %2618 = vxpose.xlu0.b32.start [1/16] %v2531, 128
    %2619 = vxpose.xlu0.b32.cont [2/16] 0.0, 128
    %2620 = vxpose.xlu0.b32.cont [3/16] 0.0, 128
    %2621 = vxpose.xlu0.b32.cont [4/16] 0.0, 128
    %2622 = vxpose.xlu0.b32.cont [5/16] 0.0, 128
    %2623 = vxpose.xlu0.b32.cont [6/16] 0.0, 128
    %2624 = vxpose.xlu0.b32.cont [7/16] 0.0, 128
    %2625 = vxpose.xlu0.b32.cont [8/16] 0.0, 128
    %2626 = vxpose.xlu0.b32.cont [9/16] 0.0, 128
    %2627 = vxpose.xlu0.b32.cont [10/16] 0.0, 128
    %2628 = vxpose.xlu0.b32.cont [11/16] 0.0, 128
    %2629 = vxpose.xlu0.b32.cont [12/16] 0.0, 128
    %2630 = vxpose.xlu0.b32.cont [13/16] 0.0, 128
    %2631 = vxpose.xlu0.b32.cont [14/16] 0.0, 128
    %2632 = vxpose.xlu0.b32.cont [15/16] 0.0, 128
    %2633 = vxpose.xlu0.b32.end [16/16] 0.0, 128
    %v2634 = vpop.trf.xlu0
    %v2635 = vpop.trf.xlu0
    %v2636 = vpop.trf.xlu0
    %v2637 = vpop.trf.xlu0
    %v2638 = vpop.trf.xlu0
    %v2639 = vpop.trf.xlu0
    %v2640 = vpop.trf.xlu0
    %v2641 = vpop.trf.xlu0
    %v2642 = vpop.trf.xlu0
    %v2643 = vpop.trf.xlu0
    %v2644 = vpop.trf.xlu0
    %v2645 = vpop.trf.xlu0
    %v2646 = vpop.trf.xlu0
    %v2647 = vpop.trf.xlu0
    %v2648 = vpop.trf.xlu0
    %v2649 = vpop.trf.xlu0
    %v2651 = vsel %vm48, %v2634, 0
    %v2654 = vsel %vm48, %v2635, 0
    %v2657 = vsel %vm48, %v2636, 0
    %v2660 = vsel %vm48, %v2637, 0
    %2662 = vmatpush.msra.mxu0 0.0
    %2663 = vmatpush.msra.mxu0 0.0
    %2664 = vmatpush.msra.mxu0 0.0
    %2665 = vmatpush.msra.mxu0 0.0
    %2666 = vmatpush.msra.mxu0 0.0
    %2667 = vmatpush.msra.mxu0 0.0
    %2668 = vmatpush.msra.mxu0 0.0
    %2669 = vmatpush.msra.mxu0 0.0
    %2670 = vmatpush.msra.mxu0 0.0
    %2671 = vmatpush.msra.mxu0 0.0
    %2672 = vmatpush.msra.mxu0 0.0
    %2673 = vmatpush.msra.mxu0 0.0
    %2674 = vmatpush.msra.mxu0 0.0
    %2675 = vmatpush.msra.mxu0 0.0
    %2676 = vmatpush.msra.mxu0 0.0
    %2677 = vmatpush.msra.mxu0 %v2555
    %2678 = vmatmul.f32.gmra.mxu0 %v2651
    %v2679 = vpop.f32.mrf.mxu0
    %v2680 = vadd.f32 0.0, %v2679
    %2681 = vmatmul.f32.gmra.mxu0 %v2654
    %v2682 = vpop.f32.mrf.mxu0
    %v2683 = vadd.f32 0.0, %v2682
    %2684 = vmatmul.f32.gmra.mxu0 %v2657
    %v2685 = vpop.f32.mrf.mxu0
    %v2686 = vadd.f32 0.0, %v2685
    %2687 = vmatmul.f32.gmra.mxu0 %v2660
    %v2688 = vpop.f32.mrf.mxu0
    %v2689 = vadd.f32 0.0, %v2688
    %2690 = vdwg.mxu0
    %v2691 = vadd.f32 %v2494, %v2680
    %v2692 = vadd.f32 %v2495, %v2683
    %v2693 = vadd.f32 %v2496, %v2686
    %v2694 = vadd.f32 %v2497, %v2689
    %v2695 = vmax.f32 %v2691, -1.0
    %v2696 = vmax.f32 %v2692, -1.0
    %v2697 = vmax.f32 %v2693, -1.0
    %v2698 = vmax.f32 %v2694, -1.0
    %v2699 = vmin.f32 %v2695, 1.0
    %v2700 = vmin.f32 %v2696, 1.0
    %v2701 = vmin.f32 %v2697, 1.0
    %v2702 = vmin.f32 %v2698, 1.0
    %v2703 = vmul.f32 %v32, %v2617
    %v2704 = vadd.f32 %v2499, %v2703
    %v2705 = vmul.f32 %v33, %v2699
    %v2706 = vmul.f32 %v34, %v2700
    %v2707 = vmul.f32 %v35, %v2701
    %v2708 = vmul.f32 %v36, %v2702
    %v2709 = vadd.f32 %v2504, %v2705
    %v2710 = vadd.f32 %v2505, %v2706
    %v2711 = vadd.f32 %v2506, %v2707
    %v2712 = vadd.f32 %v2507, %v2708
    %s2713 = scalar_lea.vmem %s0, 104
    %v2714 = vld [vmem:[%s2713] sm:$0xff]
    %v2716 = vsel %vm48, %v2714, 0
    %2718 = vmatpush.msra.mxu0 0.0
    %2719 = vmatpush.msra.mxu0 0.0
    %2720 = vmatpush.msra.mxu0 0.0
    %2721 = vmatpush.msra.mxu0 0.0
    %2722 = vmatpush.msra.mxu0 0.0
    %2723 = vmatpush.msra.mxu0 0.0
    %2724 = vmatpush.msra.mxu0 0.0
    %2725 = vmatpush.msra.mxu0 0.0
    %2726 = vmatpush.msra.mxu0 0.0
    %2727 = vmatpush.msra.mxu0 0.0
    %2728 = vmatpush.msra.mxu0 0.0
    %2729 = vmatpush.msra.mxu0 0.0
    %2730 = vmatpush.msra.mxu0 0.0
    %2731 = vmatpush.msra.mxu0 0.0
    %2732 = vmatpush.msra.mxu0 0.0
    %2733 = vmatpush.msra.mxu0 %v2704
    %2734 = vmatmul.f32.gmra.mxu0 %v2716
    %v2735 = vpop.f32.mrf.mxu0
    %v2736 = vadd.f32 0.0, %v2735
    %2737 = vdwg.mxu0
    %v2738 = vmax.f32 %v2736, 0.0
    %v2740 = vsel %vm73, %v2738, 0
    %2742 = vmatpush.msra.mxu0 0.0
    %2743 = vmatpush.msra.mxu0 0.0
    %2744 = vmatpush.msra.mxu0 0.0
    %2745 = vmatpush.msra.mxu0 0.0
    %2746 = vmatpush.msra.mxu0 0.0
    %2747 = vmatpush.msra.mxu0 0.0
    %2748 = vmatpush.msra.mxu0 0.0
    %2749 = vmatpush.msra.mxu0 0.0
    %2750 = vmatpush.msra.mxu0 0.0
    %2751 = vmatpush.msra.mxu0 0.0
    %2752 = vmatpush.msra.mxu0 0.0
    %2753 = vmatpush.msra.mxu0 0.0
    %2754 = vmatpush.msra.mxu0 %v2712
    %2755 = vmatpush.msra.mxu0 %v2711
    %2756 = vmatpush.msra.mxu0 %v2710
    %2757 = vmatpush.msra.mxu0 %v2709
    %2758 = vmatmul.f32.gmra.mxu0 %v2740
    %v2759 = vpop.f32.mrf.mxu0
    %v2760 = vadd.f32 0.0, %v2759
    %2761 = vdwg.mxu0
    %v2762 = vtanh.pop %v2760
    %s2763 = scalar_lea.vmem %s7, 104
    %2764 = vst.msk [vmem:[%s2763] sm:$0xff] %vm98, %v2762
    %2765 = vxpose.xlu0.b32.start [1/16] %v2714, 128
    %2766 = vxpose.xlu0.b32.cont [2/16] 0.0, 128
    %2767 = vxpose.xlu0.b32.cont [3/16] 0.0, 128
    %2768 = vxpose.xlu0.b32.cont [4/16] 0.0, 128
    %2769 = vxpose.xlu0.b32.cont [5/16] 0.0, 128
    %2770 = vxpose.xlu0.b32.cont [6/16] 0.0, 128
    %2771 = vxpose.xlu0.b32.cont [7/16] 0.0, 128
    %2772 = vxpose.xlu0.b32.cont [8/16] 0.0, 128
    %2773 = vxpose.xlu0.b32.cont [9/16] 0.0, 128
    %2774 = vxpose.xlu0.b32.cont [10/16] 0.0, 128
    %2775 = vxpose.xlu0.b32.cont [11/16] 0.0, 128
    %2776 = vxpose.xlu0.b32.cont [12/16] 0.0, 128
    %2777 = vxpose.xlu0.b32.cont [13/16] 0.0, 128
    %2778 = vxpose.xlu0.b32.cont [14/16] 0.0, 128
    %2779 = vxpose.xlu0.b32.cont [15/16] 0.0, 128
    %2780 = vxpose.xlu0.b32.end [16/16] 0.0, 128
    %v2781 = vpop.trf.xlu0
    %v2782 = vpop.trf.xlu0
    %v2783 = vpop.trf.xlu0
    %v2784 = vpop.trf.xlu0
    %v2785 = vpop.trf.xlu0
    %v2786 = vpop.trf.xlu0
    %v2787 = vpop.trf.xlu0
    %v2788 = vpop.trf.xlu0
    %v2789 = vpop.trf.xlu0
    %v2790 = vpop.trf.xlu0
    %v2791 = vpop.trf.xlu0
    %v2792 = vpop.trf.xlu0
    %v2793 = vpop.trf.xlu0
    %v2794 = vpop.trf.xlu0
    %v2795 = vpop.trf.xlu0
    %v2796 = vpop.trf.xlu0
    %v2798 = vsel %vm48, %v2781, 0
    %2800 = vmatpush.msra.mxu0 0.0
    %2801 = vmatpush.msra.mxu0 0.0
    %2802 = vmatpush.msra.mxu0 0.0
    %2803 = vmatpush.msra.mxu0 0.0
    %2804 = vmatpush.msra.mxu0 0.0
    %2805 = vmatpush.msra.mxu0 0.0
    %2806 = vmatpush.msra.mxu0 0.0
    %2807 = vmatpush.msra.mxu0 0.0
    %2808 = vmatpush.msra.mxu0 0.0
    %2809 = vmatpush.msra.mxu0 0.0
    %2810 = vmatpush.msra.mxu0 0.0
    %2811 = vmatpush.msra.mxu0 0.0
    %2812 = vmatpush.msra.mxu0 0.0
    %2813 = vmatpush.msra.mxu0 0.0
    %2814 = vmatpush.msra.mxu0 0.0
    %2815 = vmatpush.msra.mxu0 %v2736
    %2816 = vmatmul.f32.gmra.mxu0 %v2798
    %v2817 = vpop.f32.mrf.mxu0
    %v2818 = vadd.f32 0.0, %v2817
    %2819 = vdwg.mxu0
    %v2820 = vadd.f32 %v2617, %v2818
    %v2821 = vmax.f32 %v2820, -1.0
    %v2822 = vmin.f32 %v2821, 1.0
    %2823 = vxpose.xlu0.b32.start [1/16] %v2736, 128
    %2824 = vxpose.xlu0.b32.cont [2/16] 0.0, 128
    %2825 = vxpose.xlu0.b32.cont [3/16] 0.0, 128
    %2826 = vxpose.xlu0.b32.cont [4/16] 0.0, 128
    %2827 = vxpose.xlu0.b32.cont [5/16] 0.0, 128
    %2828 = vxpose.xlu0.b32.cont [6/16] 0.0, 128
    %2829 = vxpose.xlu0.b32.cont [7/16] 0.0, 128
    %2830 = vxpose.xlu0.b32.cont [8/16] 0.0, 128
    %2831 = vxpose.xlu0.b32.cont [9/16] 0.0, 128
    %2832 = vxpose.xlu0.b32.cont [10/16] 0.0, 128
    %2833 = vxpose.xlu0.b32.cont [11/16] 0.0, 128
    %2834 = vxpose.xlu0.b32.cont [12/16] 0.0, 128
    %2835 = vxpose.xlu0.b32.cont [13/16] 0.0, 128
    %2836 = vxpose.xlu0.b32.cont [14/16] 0.0, 128
    %2837 = vxpose.xlu0.b32.cont [15/16] 0.0, 128
    %2838 = vxpose.xlu0.b32.end [16/16] 0.0, 128
    %v2839 = vpop.trf.xlu0
    %v2840 = vpop.trf.xlu0
    %v2841 = vpop.trf.xlu0
    %v2842 = vpop.trf.xlu0
    %v2843 = vpop.trf.xlu0
    %v2844 = vpop.trf.xlu0
    %v2845 = vpop.trf.xlu0
    %v2846 = vpop.trf.xlu0
    %v2847 = vpop.trf.xlu0
    %v2848 = vpop.trf.xlu0
    %v2849 = vpop.trf.xlu0
    %v2850 = vpop.trf.xlu0
    %v2851 = vpop.trf.xlu0
    %v2852 = vpop.trf.xlu0
    %v2853 = vpop.trf.xlu0
    %v2854 = vpop.trf.xlu0
    %v2856 = vsel %vm48, %v2839, 0
    %v2859 = vsel %vm48, %v2840, 0
    %v2862 = vsel %vm48, %v2841, 0
    %v2865 = vsel %vm48, %v2842, 0
    %2867 = vmatpush.msra.mxu0 0.0
    %2868 = vmatpush.msra.mxu0 0.0
    %2869 = vmatpush.msra.mxu0 0.0
    %2870 = vmatpush.msra.mxu0 0.0
    %2871 = vmatpush.msra.mxu0 0.0
    %2872 = vmatpush.msra.mxu0 0.0
    %2873 = vmatpush.msra.mxu0 0.0
    %2874 = vmatpush.msra.mxu0 0.0
    %2875 = vmatpush.msra.mxu0 0.0
    %2876 = vmatpush.msra.mxu0 0.0
    %2877 = vmatpush.msra.mxu0 0.0
    %2878 = vmatpush.msra.mxu0 0.0
    %2879 = vmatpush.msra.mxu0 0.0
    %2880 = vmatpush.msra.mxu0 0.0
    %2881 = vmatpush.msra.mxu0 0.0
    %2882 = vmatpush.msra.mxu0 %v2760
    %2883 = vmatmul.f32.gmra.mxu0 %v2856
    %v2884 = vpop.f32.mrf.mxu0
    %v2885 = vadd.f32 0.0, %v2884
    %2886 = vmatmul.f32.gmra.mxu0 %v2859
    %v2887 = vpop.f32.mrf.mxu0
    %v2888 = vadd.f32 0.0, %v2887
    %2889 = vmatmul.f32.gmra.mxu0 %v2862
    %v2890 = vpop.f32.mrf.mxu0
    %v2891 = vadd.f32 0.0, %v2890
    %2892 = vmatmul.f32.gmra.mxu0 %v2865
    %v2893 = vpop.f32.mrf.mxu0
    %v2894 = vadd.f32 0.0, %v2893
    %2895 = vdwg.mxu0
    %v2896 = vadd.f32 %v2699, %v2885
    %v2897 = vadd.f32 %v2700, %v2888
    %v2898 = vadd.f32 %v2701, %v2891
    %v2899 = vadd.f32 %v2702, %v2894
    %v2900 = vmax.f32 %v2896, -1.0
    %v2901 = vmax.f32 %v2897, -1.0
    %v2902 = vmax.f32 %v2898, -1.0
    %v2903 = vmax.f32 %v2899, -1.0
    %v2904 = vmin.f32 %v2900, 1.0
    %v2905 = vmin.f32 %v2901, 1.0
    %v2906 = vmin.f32 %v2902, 1.0
    %v2907 = vmin.f32 %v2903, 1.0
    %v2908 = vmul.f32 %v32, %v2822
    %v2909 = vadd.f32 %v2704, %v2908
    %v2910 = vmul.f32 %v33, %v2904
    %v2911 = vmul.f32 %v34, %v2905
    %v2912 = vmul.f32 %v35, %v2906
    %v2913 = vmul.f32 %v36, %v2907
    %v2914 = vadd.f32 %v2709, %v2910
    %v2915 = vadd.f32 %v2710, %v2911
    %v2916 = vadd.f32 %v2711, %v2912
    %v2917 = vadd.f32 %v2712, %v2913
    %s2918 = scalar_lea.vmem %s0, 112
    %v2919 = vld [vmem:[%s2918] sm:$0xff]
    %v2921 = vsel %vm48, %v2919, 0
    %2923 = vmatpush.msra.mxu0 0.0
    %2924 = vmatpush.msra.mxu0 0.0
    %2925 = vmatpush.msra.mxu0 0.0
    %2926 = vmatpush.msra.mxu0 0.0
    %2927 = vmatpush.msra.mxu0 0.0
    %2928 = vmatpush.msra.mxu0 0.0
    %2929 = vmatpush.msra.mxu0 0.0
    %2930 = vmatpush.msra.mxu0 0.0
    %2931 = vmatpush.msra.mxu0 0.0
    %2932 = vmatpush.msra.mxu0 0.0
    %2933 = vmatpush.msra.mxu0 0.0
    %2934 = vmatpush.msra.mxu0 0.0
    %2935 = vmatpush.msra.mxu0 0.0
    %2936 = vmatpush.msra.mxu0 0.0
    %2937 = vmatpush.msra.mxu0 0.0
    %2938 = vmatpush.msra.mxu0 %v2909
    %2939 = vmatmul.f32.gmra.mxu0 %v2921
    %v2940 = vpop.f32.mrf.mxu0
    %v2941 = vadd.f32 0.0, %v2940
    %2942 = vdwg.mxu0
    %v2943 = vmax.f32 %v2941, 0.0
    %v2945 = vsel %vm73, %v2943, 0
    %2947 = vmatpush.msra.mxu0 0.0
    %2948 = vmatpush.msra.mxu0 0.0
    %2949 = vmatpush.msra.mxu0 0.0
    %2950 = vmatpush.msra.mxu0 0.0
    %2951 = vmatpush.msra.mxu0 0.0
    %2952 = vmatpush.msra.mxu0 0.0
    %2953 = vmatpush.msra.mxu0 0.0
    %2954 = vmatpush.msra.mxu0 0.0
    %2955 = vmatpush.msra.mxu0 0.0
    %2956 = vmatpush.msra.mxu0 0.0
    %2957 = vmatpush.msra.mxu0 0.0
    %2958 = vmatpush.msra.mxu0 0.0
    %2959 = vmatpush.msra.mxu0 %v2917
    %2960 = vmatpush.msra.mxu0 %v2916
    %2961 = vmatpush.msra.mxu0 %v2915
    %2962 = vmatpush.msra.mxu0 %v2914
    %2963 = vmatmul.f32.gmra.mxu0 %v2945
    %v2964 = vpop.f32.mrf.mxu0
    %v2965 = vadd.f32 0.0, %v2964
    %2966 = vdwg.mxu0
    %v2967 = vtanh.pop %v2965
    %s2968 = scalar_lea.vmem %s7, 112
    %2969 = vst.msk [vmem:[%s2968] sm:$0xff] %vm98, %v2967
    %2970 = vxpose.xlu0.b32.start [1/16] %v2919, 128
    %2971 = vxpose.xlu0.b32.cont [2/16] 0.0, 128
    %2972 = vxpose.xlu0.b32.cont [3/16] 0.0, 128
    %2973 = vxpose.xlu0.b32.cont [4/16] 0.0, 128
    %2974 = vxpose.xlu0.b32.cont [5/16] 0.0, 128
    %2975 = vxpose.xlu0.b32.cont [6/16] 0.0, 128
    %2976 = vxpose.xlu0.b32.cont [7/16] 0.0, 128
    %2977 = vxpose.xlu0.b32.cont [8/16] 0.0, 128
    %2978 = vxpose.xlu0.b32.cont [9/16] 0.0, 128
    %2979 = vxpose.xlu0.b32.cont [10/16] 0.0, 128
    %2980 = vxpose.xlu0.b32.cont [11/16] 0.0, 128
    %2981 = vxpose.xlu0.b32.cont [12/16] 0.0, 128
    %2982 = vxpose.xlu0.b32.cont [13/16] 0.0, 128
    %2983 = vxpose.xlu0.b32.cont [14/16] 0.0, 128
    %2984 = vxpose.xlu0.b32.cont [15/16] 0.0, 128
    %2985 = vxpose.xlu0.b32.end [16/16] 0.0, 128
    %v2986 = vpop.trf.xlu0
    %v2987 = vpop.trf.xlu0
    %v2988 = vpop.trf.xlu0
    %v2989 = vpop.trf.xlu0
    %v2990 = vpop.trf.xlu0
    %v2991 = vpop.trf.xlu0
    %v2992 = vpop.trf.xlu0
    %v2993 = vpop.trf.xlu0
    %v2994 = vpop.trf.xlu0
    %v2995 = vpop.trf.xlu0
    %v2996 = vpop.trf.xlu0
    %v2997 = vpop.trf.xlu0
    %v2998 = vpop.trf.xlu0
    %v2999 = vpop.trf.xlu0
    %v3000 = vpop.trf.xlu0
    %v3001 = vpop.trf.xlu0
    %v3003 = vsel %vm48, %v2986, 0
    %3005 = vmatpush.msra.mxu0 0.0
    %3006 = vmatpush.msra.mxu0 0.0
    %3007 = vmatpush.msra.mxu0 0.0
    %3008 = vmatpush.msra.mxu0 0.0
    %3009 = vmatpush.msra.mxu0 0.0
    %3010 = vmatpush.msra.mxu0 0.0
    %3011 = vmatpush.msra.mxu0 0.0
    %3012 = vmatpush.msra.mxu0 0.0
    %3013 = vmatpush.msra.mxu0 0.0
    %3014 = vmatpush.msra.mxu0 0.0
    %3015 = vmatpush.msra.mxu0 0.0
    %3016 = vmatpush.msra.mxu0 0.0
    %3017 = vmatpush.msra.mxu0 0.0
    %3018 = vmatpush.msra.mxu0 0.0
    %3019 = vmatpush.msra.mxu0 0.0
    %3020 = vmatpush.msra.mxu0 %v2941
    %3021 = vmatmul.f32.gmra.mxu0 %v3003
    %v3022 = vpop.f32.mrf.mxu0
    %v3023 = vadd.f32 0.0, %v3022
    %3024 = vdwg.mxu0
    %v3025 = vadd.f32 %v2822, %v3023
    %v3026 = vmax.f32 %v3025, -1.0
    %v3027 = vmin.f32 %v3026, 1.0
    %3028 = vxpose.xlu0.b32.start [1/16] %v2941, 128
    %3029 = vxpose.xlu0.b32.cont [2/16] 0.0, 128
    %3030 = vxpose.xlu0.b32.cont [3/16] 0.0, 128
    %3031 = vxpose.xlu0.b32.cont [4/16] 0.0, 128
    %3032 = vxpose.xlu0.b32.cont [5/16] 0.0, 128
    %3033 = vxpose.xlu0.b32.cont [6/16] 0.0, 128
    %3034 = vxpose.xlu0.b32.cont [7/16] 0.0, 128
    %3035 = vxpose.xlu0.b32.cont [8/16] 0.0, 128
    %3036 = vxpose.xlu0.b32.cont [9/16] 0.0, 128
    %3037 = vxpose.xlu0.b32.cont [10/16] 0.0, 128
    %3038 = vxpose.xlu0.b32.cont [11/16] 0.0, 128
    %3039 = vxpose.xlu0.b32.cont [12/16] 0.0, 128
    %3040 = vxpose.xlu0.b32.cont [13/16] 0.0, 128
    %3041 = vxpose.xlu0.b32.cont [14/16] 0.0, 128
    %3042 = vxpose.xlu0.b32.cont [15/16] 0.0, 128
    %3043 = vxpose.xlu0.b32.end [16/16] 0.0, 128
    %v3044 = vpop.trf.xlu0
    %v3045 = vpop.trf.xlu0
    %v3046 = vpop.trf.xlu0
    %v3047 = vpop.trf.xlu0
    %v3048 = vpop.trf.xlu0
    %v3049 = vpop.trf.xlu0
    %v3050 = vpop.trf.xlu0
    %v3051 = vpop.trf.xlu0
    %v3052 = vpop.trf.xlu0
    %v3053 = vpop.trf.xlu0
    %v3054 = vpop.trf.xlu0
    %v3055 = vpop.trf.xlu0
    %v3056 = vpop.trf.xlu0
    %v3057 = vpop.trf.xlu0
    %v3058 = vpop.trf.xlu0
    %v3059 = vpop.trf.xlu0
    %v3061 = vsel %vm48, %v3044, 0
    %v3064 = vsel %vm48, %v3045, 0
    %v3067 = vsel %vm48, %v3046, 0
    %v3070 = vsel %vm48, %v3047, 0
    %3072 = vmatpush.msra.mxu0 0.0
    %3073 = vmatpush.msra.mxu0 0.0
    %3074 = vmatpush.msra.mxu0 0.0
    %3075 = vmatpush.msra.mxu0 0.0
    %3076 = vmatpush.msra.mxu0 0.0
    %3077 = vmatpush.msra.mxu0 0.0
    %3078 = vmatpush.msra.mxu0 0.0
    %3079 = vmatpush.msra.mxu0 0.0
    %3080 = vmatpush.msra.mxu0 0.0
    %3081 = vmatpush.msra.mxu0 0.0
    %3082 = vmatpush.msra.mxu0 0.0
    %3083 = vmatpush.msra.mxu0 0.0
    %3084 = vmatpush.msra.mxu0 0.0
    %3085 = vmatpush.msra.mxu0 0.0
    %3086 = vmatpush.msra.mxu0 0.0
    %3087 = vmatpush.msra.mxu0 %v2965
    %3088 = vmatmul.f32.gmra.mxu0 %v3061
    %v3089 = vpop.f32.mrf.mxu0
    %v3090 = vadd.f32 0.0, %v3089
    %3091 = vmatmul.f32.gmra.mxu0 %v3064
    %v3092 = vpop.f32.mrf.mxu0
    %v3093 = vadd.f32 0.0, %v3092
    %3094 = vmatmul.f32.gmra.mxu0 %v3067
    %v3095 = vpop.f32.mrf.mxu0
    %v3096 = vadd.f32 0.0, %v3095
    %3097 = vmatmul.f32.gmra.mxu0 %v3070
    %v3098 = vpop.f32.mrf.mxu0
    %v3099 = vadd.f32 0.0, %v3098
    %3100 = vdwg.mxu0
    %v3101 = vadd.f32 %v2904, %v3090
    %v3102 = vadd.f32 %v2905, %v3093
    %v3103 = vadd.f32 %v2906, %v3096
    %v3104 = vadd.f32 %v2907, %v3099
    %v3105 = vmax.f32 %v3101, -1.0
    %v3106 = vmax.f32 %v3102, -1.0
    %v3107 = vmax.f32 %v3103, -1.0
    %v3108 = vmax.f32 %v3104, -1.0
    %v3109 = vmin.f32 %v3105, 1.0
    %v3110 = vmin.f32 %v3106, 1.0
    %v3111 = vmin.f32 %v3107, 1.0
    %v3112 = vmin.f32 %v3108, 1.0
    %v3113 = vmul.f32 %v32, %v3027
    %v3114 = vadd.f32 %v2909, %v3113
    %v3115 = vmul.f32 %v33, %v3109
    %v3116 = vmul.f32 %v34, %v3110
    %v3117 = vmul.f32 %v35, %v3111
    %v3118 = vmul.f32 %v36, %v3112
    %v3119 = vadd.f32 %v2914, %v3115
    %v3120 = vadd.f32 %v2915, %v3116
    %v3121 = vadd.f32 %v2916, %v3117
    %v3122 = vadd.f32 %v2917, %v3118
    %s3123 = scalar_lea.vmem %s0, 120
    %v3124 = vld [vmem:[%s3123] sm:$0xff]
    %v3126 = vsel %vm48, %v3124, 0
    %3128 = vmatpush.msra.mxu0 0.0
    %3129 = vmatpush.msra.mxu0 0.0
    %3130 = vmatpush.msra.mxu0 0.0
    %3131 = vmatpush.msra.mxu0 0.0
    %3132 = vmatpush.msra.mxu0 0.0
    %3133 = vmatpush.msra.mxu0 0.0
    %3134 = vmatpush.msra.mxu0 0.0
    %3135 = vmatpush.msra.mxu0 0.0
    %3136 = vmatpush.msra.mxu0 0.0
    %3137 = vmatpush.msra.mxu0 0.0
    %3138 = vmatpush.msra.mxu0 0.0
    %3139 = vmatpush.msra.mxu0 0.0
    %3140 = vmatpush.msra.mxu0 0.0
    %3141 = vmatpush.msra.mxu0 0.0
    %3142 = vmatpush.msra.mxu0 0.0
    %3143 = vmatpush.msra.mxu0 %v3114
    %3144 = vmatmul.f32.gmra.mxu0 %v3126
    %v3145 = vpop.f32.mrf.mxu0
    %v3146 = vadd.f32 0.0, %v3145
    %3147 = vdwg.mxu0
    %v3148 = vmax.f32 %v3146, 0.0
    %v3150 = vsel %vm73, %v3148, 0
    %3152 = vmatpush.msra.mxu0 0.0
    %3153 = vmatpush.msra.mxu0 0.0
    %3154 = vmatpush.msra.mxu0 0.0
    %3155 = vmatpush.msra.mxu0 0.0
    %3156 = vmatpush.msra.mxu0 0.0
    %3157 = vmatpush.msra.mxu0 0.0
    %3158 = vmatpush.msra.mxu0 0.0
    %3159 = vmatpush.msra.mxu0 0.0
    %3160 = vmatpush.msra.mxu0 0.0
    %3161 = vmatpush.msra.mxu0 0.0
    %3162 = vmatpush.msra.mxu0 0.0
    %3163 = vmatpush.msra.mxu0 0.0
    %3164 = vmatpush.msra.mxu0 %v3122
    %3165 = vmatpush.msra.mxu0 %v3121
    %3166 = vmatpush.msra.mxu0 %v3120
    %3167 = vmatpush.msra.mxu0 %v3119
    %3168 = vmatmul.f32.gmra.mxu0 %v3150
    %v3169 = vpop.f32.mrf.mxu0
    %v3170 = vadd.f32 0.0, %v3169
    %3171 = vdwg.mxu0
    %v3172 = vtanh.pop %v3170
    %s3173 = scalar_lea.vmem %s7, 120
    %3174 = vst.msk [vmem:[%s3173] sm:$0xff] %vm98, %v3172
    %3175 = vxpose.xlu0.b32.start [1/16] %v3124, 128
    %3176 = vxpose.xlu0.b32.cont [2/16] 0.0, 128
    %3177 = vxpose.xlu0.b32.cont [3/16] 0.0, 128
    %3178 = vxpose.xlu0.b32.cont [4/16] 0.0, 128
    %3179 = vxpose.xlu0.b32.cont [5/16] 0.0, 128
    %3180 = vxpose.xlu0.b32.cont [6/16] 0.0, 128
    %3181 = vxpose.xlu0.b32.cont [7/16] 0.0, 128
    %3182 = vxpose.xlu0.b32.cont [8/16] 0.0, 128
    %3183 = vxpose.xlu0.b32.cont [9/16] 0.0, 128
    %3184 = vxpose.xlu0.b32.cont [10/16] 0.0, 128
    %3185 = vxpose.xlu0.b32.cont [11/16] 0.0, 128
    %3186 = vxpose.xlu0.b32.cont [12/16] 0.0, 128
    %3187 = vxpose.xlu0.b32.cont [13/16] 0.0, 128
    %3188 = vxpose.xlu0.b32.cont [14/16] 0.0, 128
    %3189 = vxpose.xlu0.b32.cont [15/16] 0.0, 128
    %3190 = vxpose.xlu0.b32.end [16/16] 0.0, 128
    %v3191 = vpop.trf.xlu0
    %v3192 = vpop.trf.xlu0
    %v3193 = vpop.trf.xlu0
    %v3194 = vpop.trf.xlu0
    %v3195 = vpop.trf.xlu0
    %v3196 = vpop.trf.xlu0
    %v3197 = vpop.trf.xlu0
    %v3198 = vpop.trf.xlu0
    %v3199 = vpop.trf.xlu0
    %v3200 = vpop.trf.xlu0
    %v3201 = vpop.trf.xlu0
    %v3202 = vpop.trf.xlu0
    %v3203 = vpop.trf.xlu0
    %v3204 = vpop.trf.xlu0
    %v3205 = vpop.trf.xlu0
    %v3206 = vpop.trf.xlu0
    %v3208 = vsel %vm48, %v3191, 0
    %3210 = vmatpush.msra.mxu0 0.0
    %3211 = vmatpush.msra.mxu0 0.0
    %3212 = vmatpush.msra.mxu0 0.0
    %3213 = vmatpush.msra.mxu0 0.0
    %3214 = vmatpush.msra.mxu0 0.0
    %3215 = vmatpush.msra.mxu0 0.0
    %3216 = vmatpush.msra.mxu0 0.0
    %3217 = vmatpush.msra.mxu0 0.0
    %3218 = vmatpush.msra.mxu0 0.0
    %3219 = vmatpush.msra.mxu0 0.0
    %3220 = vmatpush.msra.mxu0 0.0
    %3221 = vmatpush.msra.mxu0 0.0
    %3222 = vmatpush.msra.mxu0 0.0
    %3223 = vmatpush.msra.mxu0 0.0
    %3224 = vmatpush.msra.mxu0 0.0
    %3225 = vmatpush.msra.mxu0 %v3146
    %3226 = vmatmul.f32.gmra.mxu0 %v3208
    %v3227 = vpop.f32.mrf.mxu0
    %v3228 = vadd.f32 0.0, %v3227
    %3229 = vdwg.mxu0
    %v3230 = vadd.f32 %v3027, %v3228
    %v3231 = vmax.f32 %v3230, -1.0
    %v3232 = vmin.f32 %v3231, 1.0
    %3233 = vxpose.xlu0.b32.start [1/16] %v3146, 128
    %3234 = vxpose.xlu0.b32.cont [2/16] 0.0, 128
    %3235 = vxpose.xlu0.b32.cont [3/16] 0.0, 128
    %3236 = vxpose.xlu0.b32.cont [4/16] 0.0, 128
    %3237 = vxpose.xlu0.b32.cont [5/16] 0.0, 128
    %3238 = vxpose.xlu0.b32.cont [6/16] 0.0, 128
    %3239 = vxpose.xlu0.b32.cont [7/16] 0.0, 128
    %3240 = vxpose.xlu0.b32.cont [8/16] 0.0, 128
    %3241 = vxpose.xlu0.b32.cont [9/16] 0.0, 128
    %3242 = vxpose.xlu0.b32.cont [10/16] 0.0, 128
    %3243 = vxpose.xlu0.b32.cont [11/16] 0.0, 128
    %3244 = vxpose.xlu0.b32.cont [12/16] 0.0, 128
    %3245 = vxpose.xlu0.b32.cont [13/16] 0.0, 128
    %3246 = vxpose.xlu0.b32.cont [14/16] 0.0, 128
    %3247 = vxpose.xlu0.b32.cont [15/16] 0.0, 128
    %3248 = vxpose.xlu0.b32.end [16/16] 0.0, 128
    %v3249 = vpop.trf.xlu0
    %v3250 = vpop.trf.xlu0
    %v3251 = vpop.trf.xlu0
    %v3252 = vpop.trf.xlu0
    %v3253 = vpop.trf.xlu0
    %v3254 = vpop.trf.xlu0
    %v3255 = vpop.trf.xlu0
    %v3256 = vpop.trf.xlu0
    %v3257 = vpop.trf.xlu0
    %v3258 = vpop.trf.xlu0
    %v3259 = vpop.trf.xlu0
    %v3260 = vpop.trf.xlu0
    %v3261 = vpop.trf.xlu0
    %v3262 = vpop.trf.xlu0
    %v3263 = vpop.trf.xlu0
    %v3264 = vpop.trf.xlu0
    %v3266 = vsel %vm48, %v3249, 0
    %v3269 = vsel %vm48, %v3250, 0
    %v3272 = vsel %vm48, %v3251, 0
    %v3275 = vsel %vm48, %v3252, 0
    %3277 = vmatpush.msra.mxu0 0.0
    %3278 = vmatpush.msra.mxu0 0.0
    %3279 = vmatpush.msra.mxu0 0.0
    %3280 = vmatpush.msra.mxu0 0.0
    %3281 = vmatpush.msra.mxu0 0.0
    %3282 = vmatpush.msra.mxu0 0.0
    %3283 = vmatpush.msra.mxu0 0.0
    %3284 = vmatpush.msra.mxu0 0.0
    %3285 = vmatpush.msra.mxu0 0.0
    %3286 = vmatpush.msra.mxu0 0.0
    %3287 = vmatpush.msra.mxu0 0.0
    %3288 = vmatpush.msra.mxu0 0.0
    %3289 = vmatpush.msra.mxu0 0.0
    %3290 = vmatpush.msra.mxu0 0.0
    %3291 = vmatpush.msra.mxu0 0.0
    %3292 = vmatpush.msra.mxu0 %v3170
    %3293 = vmatmul.f32.gmra.mxu0 %v3266
    %v3294 = vpop.f32.mrf.mxu0
    %v3295 = vadd.f32 0.0, %v3294
    %3296 = vmatmul.f32.gmra.mxu0 %v3269
    %v3297 = vpop.f32.mrf.mxu0
    %v3298 = vadd.f32 0.0, %v3297
    %3299 = vmatmul.f32.gmra.mxu0 %v3272
    %v3300 = vpop.f32.mrf.mxu0
    %v3301 = vadd.f32 0.0, %v3300
    %3302 = vmatmul.f32.gmra.mxu0 %v3275
    %v3303 = vpop.f32.mrf.mxu0
    %v3304 = vadd.f32 0.0, %v3303
    %3305 = vdwg.mxu0
    %v3306 = vadd.f32 %v3109, %v3295
    %v3307 = vadd.f32 %v3110, %v3298
    %v3308 = vadd.f32 %v3111, %v3301
    %v3309 = vadd.f32 %v3112, %v3304
    %v3310 = vmax.f32 %v3306, -1.0
    %v3311 = vmax.f32 %v3307, -1.0
    %v3312 = vmax.f32 %v3308, -1.0
    %v3313 = vmax.f32 %v3309, -1.0
    %v3314 = vmin.f32 %v3310, 1.0
    %v3315 = vmin.f32 %v3311, 1.0
    %v3316 = vmin.f32 %v3312, 1.0
    %v3317 = vmin.f32 %v3313, 1.0
    %v3318 = vmul.f32 %v32, %v3232
    %v3319 = vadd.f32 %v3114, %v3318
    %v3320 = vmul.f32 %v33, %v3314
    %v3321 = vmul.f32 %v34, %v3315
    %v3322 = vmul.f32 %v35, %v3316
    %v3323 = vmul.f32 %v36, %v3317
    %v3324 = vadd.f32 %v3119, %v3320
    %v3325 = vadd.f32 %v3120, %v3321
    %v3326 = vadd.f32 %v3121, %v3322
    %v3327 = vadd.f32 %v3122, %v3323
    %3328 = vst.msk [vmem:[%s8] sm:$0xff] %vm73, %v3319
    %3329 = vst.msk [vmem:[%s9] sm:$0xff] %vm98, %v3324
    %3330 = vst.msk [vmem:[%s9 + $0x8] sm:$0xff] %vm98, %v3325
    %3331 = vst.msk [vmem:[%s9 + $0x10] sm:$0xff] %vm98, %v3326
    %3332 = vst.msk [vmem:[%s9 + $0x18] sm:$0xff] %vm98, %v3327
    %3333 = vst.msk [vmem:[#allocation2] sm:$0xff] %vm73, %v3232
    %3334 = vst.msk [vmem:[%s11] sm:$0xff] %vm98, %v3314
    %3335 = vst.msk [vmem:[%s11 + $0x8] sm:$0xff] %vm98, %v3315
    %3336 = vst.msk [vmem:[%s11 + $0x10] sm:$0xff] %vm98, %v3316
    %3337 = vst.msk [vmem:[%s11 + $0x18] sm:$0xff] %vm98, %v3317
    // Predicated region
    $region30: #{hebbian_mlp_rollout.1} parent=1 // pred_check
      _
    $region31: #{hebbian_mlp_rollout.1} parent=1 // pred_check_branch
      %3339 = sbr.rel (0) target = $region33
    $region32: #{hebbian_mlp_rollout.1} parent=1 // pred_region
      _
    $region33: #{hebbian_mlp_rollout.1} parent=1 // pred_fallthru
      _
    // Predicated region
    $region34: #{hebbian_mlp_rollout.1} parent=1 // pred_check
      _
    $region35: #{hebbian_mlp_rollout.1} parent=1 // pred_check_branch
      %3341 = sbr.rel (0) target = $region37
    $region36: #{hebbian_mlp_rollout.1} parent=1 // pred_region
      _
    $region37: #{hebbian_mlp_rollout.1} parent=1 // pred_fallthru
      _
    // Predicated region
    $region38: #{hebbian_mlp_rollout.1} parent=1 // pred_check
      _
    $region39: #{hebbian_mlp_rollout.1} parent=1 // pred_check_branch
      %3343 = sbr.rel (0) target = $region41
    $region40: #{hebbian_mlp_rollout.1} parent=1 // pred_region
      _
    $region41: #{hebbian_mlp_rollout.1} parent=1 // pred_fallthru
      _
    // Predicated region
    $region42: #{hebbian_mlp_rollout.1} parent=1 // pred_check
      _
    $region43: #{hebbian_mlp_rollout.1} parent=1 // pred_check_branch
      %3345 = sbr.rel (0) target = $region45
    $region44: #{hebbian_mlp_rollout.1} parent=1 // pred_region
      %3347 = vsyncadd [#allocation3], 0
      %s3349 = sshll.u32 [#allocation2], 4
      %s3350 = int_to_ptr.vmem [resolvable:$true] %s3349
      %s3351 = sshll.u32 %s10, 4
      %s3352 = int_to_ptr.hbm [resolvable:$true] %s3351
      %3354 = dma.vmem_to_hbm [thread:$0]  %s3350, 128, %s3352, [#allocation3]
    $region45: #{hebbian_mlp_rollout.1} parent=1 // pred_fallthru
      _
    // Predicated region
    $region46: #{hebbian_mlp_rollout.1} parent=1 // pred_check
      _
    $region47: #{hebbian_mlp_rollout.1} parent=1 // pred_check_branch
      %3356 = sbr.rel (0) target = $region49
    $region48: #{hebbian_mlp_rollout.1} parent=1 // pred_region
      _
    $region49: #{hebbian_mlp_rollout.1} parent=1 // pred_fallthru
      _
    // Predicated region
    $region50: #{hebbian_mlp_rollout.1} parent=1 // pred_check
      _
    $region51: #{hebbian_mlp_rollout.1} parent=1 // pred_check_branch
      %3358 = sbr.rel (0) target = $region53
    $region52: #{hebbian_mlp_rollout.1} parent=1 // pred_region
      _
    $region53: #{hebbian_mlp_rollout.1} parent=1 // pred_fallthru
      _
    // Predicated region
    $region54: #{hebbian_mlp_rollout.1} parent=1 // pred_check
      _
    $region55: #{hebbian_mlp_rollout.1} parent=1 // pred_check_branch
      %3360 = sbr.rel (0) target = $region57
    $region56: #{hebbian_mlp_rollout.1} parent=1 // pred_region
      _
    $region57: #{hebbian_mlp_rollout.1} parent=1 // pred_fallthru
      _
    // Predicated region
    $region58: #{hebbian_mlp_rollout.1} parent=1 // pred_check
      _
    $region59: #{hebbian_mlp_rollout.1} parent=1 // pred_check_branch
      %3362 = sbr.rel (0) target = $region61
    $region60: #{hebbian_mlp_rollout.1} parent=1 // pred_region
      _
    $region61: #{hebbian_mlp_rollout.1} parent=1 // pred_fallthru
      _
    // Predicated region
    $region62: #{hebbian_mlp_rollout.1} parent=1 // pred_check
      _
    $region63: #{hebbian_mlp_rollout.1} parent=1 // pred_check_branch
      %3364 = sbr.rel (0) target = $region65
    $region64: #{hebbian_mlp_rollout.1} parent=1 // pred_region
      %3366 = dma.done [#allocation3], 128
    $region65: #{hebbian_mlp_rollout.1} parent=1 // pred_fallthru
      _
    // Predicated region
    $region66: #{hebbian_mlp_rollout.1} parent=1 // pred_check
      _
    $region67: #{hebbian_mlp_rollout.1} parent=1 // pred_check_branch
      %3368 = sbr.rel (0) target = $region69
    $region68: #{hebbian_mlp_rollout.1} parent=1 // pred_region
      _
    $region69: #{hebbian_mlp_rollout.1} parent=1 // pred_fallthru
      _
    %3369 = vsyncpa [#allocation3], 1

</llo_original>
